<compile_context>
chip_gen: v7x
topology: tpu7x:2x2x1
jax: 0.10.0
libtpu: 0.0.40
codegen_flags: <defaults>
</compile_context>

<pallas_src>
import jax
import jax.numpy as jnp
from jax.experimental import pallas as pl
from jax.experimental.pallas import tpu as pltpu

EPS = 1e-5

# 3x3 tap offsets; tap index t = (dh + 1) * 3 + (dw + 1) matches the weight
# flattening (kh, kw, ci) -> row (kh*3 + kw)*C + ci.
_TAPS = tuple((dh, dw) for dh in (-1, 0, 1) for dw in (-1, 0, 1))


def basic_block_kernel(x_ref, w1_ref, g1_ref, b1_ref, w2_ref, g2_ref, b2_ref,
                       out_ref):
    # x_ref : (N, H, W, C)   f32 NHWC input; also the residual branch
    # w*_ref: (9*C, C)       bf16 im2col conv weights, row = (kh*3+kw)*C + ci
    # g*/b* : (1, C)         f32 BN gamma / beta
    # out   : (N*H*W, C)     f32
    N, H, W, C = x_ref.shape
    M = N * H * W

    def im2col(src_bf16):
        # Build the (M, 9*C) im2col matrix in registers.  For tap
        # t = (dh+1)*3 + (dw+1), lane band [t*C, (t+1)*C) holds src shifted by
        # (dh, dw) with zeros at the image border:
        #   P_t[n, h, w, :] = src[n, h+dh, w+dw, :]   (0 if out of bounds)
        zrow = jnp.zeros((N, 1, W, C), jnp.bfloat16)
        zcol = jnp.zeros((N, H, 1, C), jnp.bfloat16)
        taps = []
        for dh, dw in _TAPS:
            t = src_bf16
            if dh < 0:                                     # P[h] = src[h-1]
                t = jnp.concatenate([zrow, t[:, :H - 1]], axis=1)
            elif dh > 0:                                   # P[h] = src[h+1]
                t = jnp.concatenate([t[:, 1:], zrow], axis=1)
            if dw < 0:
                t = jnp.concatenate([zcol, t[:, :, :W - 1]], axis=2)
            elif dw > 0:
                t = jnp.concatenate([t[:, :, 1:], zcol], axis=2)
            taps.append(t)
        return jnp.concatenate(taps, axis=-1).reshape(M, 9 * C)

    def batchnorm(y, gamma, beta):
        # Train-mode BatchNorm2d: biased batch stats over (N, H, W), eps=1e-5.
        # y is (M, C) f32; the centered tensor is reused for variance and
        # the normalize step.  All f32 on the VPU (rsqrt on the EUP).
        mean = jnp.mean(y, axis=0, keepdims=True)
        yc = y - mean
        var = jnp.mean(yc * yc, axis=0, keepdims=True)
        scale = jax.lax.rsqrt(var + EPS) * gamma           # (1, C)
        return yc * scale + beta

    # conv1: single bf16 im2col MXU matmul (K = 9*C), f32 accumulate.
    p1 = im2col(x_ref[...].astype(jnp.bfloat16))           # one cast, 9 slices
    y1 = jnp.dot(p1, w1_ref[...], preferred_element_type=jnp.float32)
    y1 = jnp.maximum(batchnorm(y1, g1_ref[...], b1_ref[...]), 0.0)

    # conv2 -> bn2 (single bf16 cast, back to NHWC only for the shifts).
    p2 = im2col(y1.astype(jnp.bfloat16).reshape(N, H, W, C))
    y2 = jnp.dot(p2, w2_ref[...], preferred_element_type=jnp.float32)
    y2 = batchnorm(y2, g2_ref[...], b2_ref[...])

    # Residual add + relu; x is re-read here (short live range), f32 on VPU.
    out_ref[...] = jnp.maximum(
        y2 + x_ref[...].reshape(M, C), 0.0).astype(out_ref.dtype)


def basic_block(x_nchw, w1, g1, b1, w2, g2, b2):
    """BasicBlock forward. x_nchw: (N, C, H, W) f32 -> (N, C, H, W) f32."""
    x = jnp.transpose(x_nchw, (0, 2, 3, 1)).astype(jnp.float32)   # NHWC
    N, H, W, Cin = x.shape
    Cout = w1.shape[-1]
    if Cin != Cout or w1.shape[0] != 9 * Cin:
        raise ValueError('stride=1 / downsample=None BasicBlock requires '
                         'inplanes == planes for the residual add')

    M = N * H * W
    flops = 2 * (2 * M * 9 * Cin * Cout)                  # two 3x3 convs
    bytes_accessed = ((x.size + M * Cout) * 4             # f32 in/out
                      + (w1.size + w2.size) * 2           # bf16 weights
                      + (g1.size + b1.size + g2.size + b2.size) * 4)

    out2d = pl.pallas_call(
        basic_block_kernel,
        out_shape=jax.ShapeDtypeStruct((M, Cout), jnp.float32),
        in_specs=[pl.BlockSpec(memory_space=pltpu.MemorySpace.VMEM)] * 7,
        out_specs=pl.BlockSpec(memory_space=pltpu.MemorySpace.VMEM),
        compiler_params=pltpu.CompilerParams(
            vmem_limit_bytes=32 * 1024 * 1024),
        cost_estimate=pl.CostEstimate(flops=int(flops),
                                      transcendentals=int(2 * Cout),
                                      bytes_accessed=int(bytes_accessed)),
    )(x, w1, g1, b1, w2, g2, b2)

    out_nhwc = out2d.reshape(N, H, W, Cout)
    return jnp.transpose(out_nhwc, (0, 3, 1, 2))           # back to NCHW


def _to_im2col_weight(w_oihw):
    """PyTorch (Cout, Cin, 3, 3) -> (9*Cin, Cout) bf16, row = (kh*3+kw)*Cin+ci."""
    co, ci, kh, kw = w_oihw.shape
    w = jnp.transpose(w_oihw, (2, 3, 1, 0)).reshape(kh * kw * ci, co)
    return w.astype(jnp.bfloat16)


def make_params(key, inplanes, planes):
    """Deterministic synthetic parameters (shapes from BasicBlock.__init__)."""
    k1, k2, k3, k4, k5, k6 = jax.random.split(key, 6)
    w1 = _to_im2col_weight(
        0.1 * jax.random.normal(k1, (planes, inplanes, 3, 3), jnp.float32))
    w2 = _to_im2col_weight(
        0.1 * jax.random.normal(k2, (planes, planes, 3, 3), jnp.float32))
    g1 = 1.0 + 0.1 * jax.random.normal(k3, (1, planes), jnp.float32)
    b1 = 0.1 * jax.random.normal(k4, (1, planes), jnp.float32)
    g2 = 1.0 + 0.1 * jax.random.normal(k5, (1, planes), jnp.float32)
    b2 = 0.1 * jax.random.normal(k6, (1, planes), jnp.float32)
    return w1, g1, b1, w2, g2, b2


if __name__ == "__main__":
    key = jax.random.PRNGKey(0)
    kx, kp = jax.random.split(key)

    N, C, H, W = 2, 4, 16, 16          # inplanes == planes (downsample=None)
    x = jax.random.normal(kx, (N, C, H, W), jnp.float32)
    params = make_params(kp, inplanes=C, planes=C)

    out = jax.block_until_ready(basic_block(x, *params))
    assert out.shape == (N, C, H, W)
    assert bool(jnp.all(jnp.isfinite(out)))
    print("KERNEL_OK")
</pallas_src>

<mosaic_0001>
module attributes {stable_mosaic.version = 11 : i64} {
  func.func @basic_block_kernel(%arg0: memref<2x16x16x4xf32, #tpu.memory_space<vmem>>, %arg1: memref<36x4xbf16, #tpu.memory_space<vmem>>, %arg2: memref<1x4xf32, #tpu.memory_space<vmem>>, %arg3: memref<1x4xf32, #tpu.memory_space<vmem>>, %arg4: memref<36x4xbf16, #tpu.memory_space<vmem>>, %arg5: memref<1x4xf32, #tpu.memory_space<vmem>>, %arg6: memref<1x4xf32, #tpu.memory_space<vmem>>, %arg7: memref<512x4xf32, #tpu.memory_space<vmem>>) attributes {dimension_semantics = [], scalar_prefetch = 0 : i64, scratch_operands = 0 : i64, tpu.core_type = #tpu.core_type<tc>} {
    %c0 = arith.constant 0 : index
    %c0_0 = arith.constant 0 : index
    %c0_1 = arith.constant 0 : index
    %c0_2 = arith.constant 0 : index
    %0 = vector.load %arg0[%c0, %c0_0, %c0_1, %c0_2] : memref<2x16x16x4xf32, #tpu.memory_space<vmem>>, vector<2x16x16x4xf32>
    %1 = arith.truncf %0 : vector<2x16x16x4xf32> to vector<2x16x16x4xbf16>
    %cst = arith.constant 0.000000e+00 : bf16
    %2 = vector.broadcast %cst : bf16 to vector<2x1x16x4xbf16>
    %cst_3 = arith.constant 0.000000e+00 : bf16
    %3 = vector.broadcast %cst_3 : bf16 to vector<2x16x1x4xbf16>
    %4 = vector.extract_strided_slice %1 {offsets = [0, 0, 0, 0], sizes = [2, 15, 16, 4], strides = [1, 1, 1, 1]} : vector<2x16x16x4xbf16> to vector<2x15x16x4xbf16>
    %5 = tpu.concatenate %2, %4 in 1 : vector<2x1x16x4xbf16>, vector<2x15x16x4xbf16> -> vector<2x16x16x4xbf16>
    %6 = vector.extract_strided_slice %5 {offsets = [0, 0, 0, 0], sizes = [2, 16, 15, 4], strides = [1, 1, 1, 1]} : vector<2x16x16x4xbf16> to vector<2x16x15x4xbf16>
    %7 = tpu.concatenate %3, %6 in 2 : vector<2x16x1x4xbf16>, vector<2x16x15x4xbf16> -> vector<2x16x16x4xbf16>
    %8 = vector.extract_strided_slice %1 {offsets = [0, 0, 0, 0], sizes = [2, 15, 16, 4], strides = [1, 1, 1, 1]} : vector<2x16x16x4xbf16> to vector<2x15x16x4xbf16>
    %9 = tpu.concatenate %2, %8 in 1 : vector<2x1x16x4xbf16>, vector<2x15x16x4xbf16> -> vector<2x16x16x4xbf16>
    %10 = vector.extract_strided_slice %1 {offsets = [0, 0, 0, 0], sizes = [2, 15, 16, 4], strides = [1, 1, 1, 1]} : vector<2x16x16x4xbf16> to vector<2x15x16x4xbf16>
    %11 = tpu.concatenate %2, %10 in 1 : vector<2x1x16x4xbf16>, vector<2x15x16x4xbf16> -> vector<2x16x16x4xbf16>
    %12 = vector.extract_strided_slice %11 {offsets = [0, 0, 1, 0], sizes = [2, 16, 15, 4], strides = [1, 1, 1, 1]} : vector<2x16x16x4xbf16> to vector<2x16x15x4xbf16>
    %13 = tpu.concatenate %12, %3 in 2 : vector<2x16x15x4xbf16>, vector<2x16x1x4xbf16> -> vector<2x16x16x4xbf16>
    %14 = vector.extract_strided_slice %1 {offsets = [0, 0, 0, 0], sizes = [2, 16, 15, 4], strides = [1, 1, 1, 1]} : vector<2x16x16x4xbf16> to vector<2x16x15x4xbf16>
    %15 = tpu.concatenate %3, %14 in 2 : vector<2x16x1x4xbf16>, vector<2x16x15x4xbf16> -> vector<2x16x16x4xbf16>
    %16 = vector.extract_strided_slice %1 {offsets = [0, 0, 1, 0], sizes = [2, 16, 15, 4], strides = [1, 1, 1, 1]} : vector<2x16x16x4xbf16> to vector<2x16x15x4xbf16>
    %17 = tpu.concatenate %16, %3 in 2 : vector<2x16x15x4xbf16>, vector<2x16x1x4xbf16> -> vector<2x16x16x4xbf16>
    %18 = vector.extract_strided_slice %1 {offsets = [0, 1, 0, 0], sizes = [2, 15, 16, 4], strides = [1, 1, 1, 1]} : vector<2x16x16x4xbf16> to vector<2x15x16x4xbf16>
    %19 = tpu.concatenate %18, %2 in 1 : vector<2x15x16x4xbf16>, vector<2x1x16x4xbf16> -> vector<2x16x16x4xbf16>
    %20 = vector.extract_strided_slice %19 {offsets = [0, 0, 0, 0], sizes = [2, 16, 15, 4], strides = [1, 1, 1, 1]} : vector<2x16x16x4xbf16> to vector<2x16x15x4xbf16>
    %21 = tpu.concatenate %3, %20 in 2 : vector<2x16x1x4xbf16>, vector<2x16x15x4xbf16> -> vector<2x16x16x4xbf16>
    %22 = vector.extract_strided_slice %1 {offsets = [0, 1, 0, 0], sizes = [2, 15, 16, 4], strides = [1, 1, 1, 1]} : vector<2x16x16x4xbf16> to vector<2x15x16x4xbf16>
    %23 = tpu.concatenate %22, %2 in 1 : vector<2x15x16x4xbf16>, vector<2x1x16x4xbf16> -> vector<2x16x16x4xbf16>
    %24 = vector.extract_strided_slice %1 {offsets = [0, 1, 0, 0], sizes = [2, 15, 16, 4], strides = [1, 1, 1, 1]} : vector<2x16x16x4xbf16> to vector<2x15x16x4xbf16>
    %25 = tpu.concatenate %24, %2 in 1 : vector<2x15x16x4xbf16>, vector<2x1x16x4xbf16> -> vector<2x16x16x4xbf16>
    %26 = vector.extract_strided_slice %25 {offsets = [0, 0, 1, 0], sizes = [2, 16, 15, 4], strides = [1, 1, 1, 1]} : vector<2x16x16x4xbf16> to vector<2x16x15x4xbf16>
    %27 = tpu.concatenate %26, %3 in 2 : vector<2x16x15x4xbf16>, vector<2x16x1x4xbf16> -> vector<2x16x16x4xbf16>
    %28 = tpu.concatenate %7, %9, %13, %15, %1, %17, %21, %23, %27 in 3 : vector<2x16x16x4xbf16>, vector<2x16x16x4xbf16>, vector<2x16x16x4xbf16>, vector<2x16x16x4xbf16>, vector<2x16x16x4xbf16>, vector<2x16x16x4xbf16>, vector<2x16x16x4xbf16>, vector<2x16x16x4xbf16>, vector<2x16x16x4xbf16> -> vector<2x16x16x36xbf16>
    %29 = vector.shape_cast %28 : vector<2x16x16x36xbf16> to vector<512x36xbf16>
    %c0_4 = arith.constant 0 : index
    %c0_5 = arith.constant 0 : index
    %30 = vector.load %arg1[%c0_4, %c0_5] : memref<36x4xbf16, #tpu.memory_space<vmem>>, vector<36x4xbf16>
    %cst_6 = arith.constant dense<0.000000e+00> : vector<512x4xf32>
    %31 = tpu.matmul %29, %30, %cst_6 {dimension_numbers = #tpu.dot_dimension_numbers<[1], [0], [0], [1], [0, 0, 1, 1], [], []>} : vector<512x36xbf16>, vector<36x4xbf16>, vector<512x4xf32> -> vector<512x4xf32>
    %c0_7 = arith.constant 0 : index
    %c0_8 = arith.constant 0 : index
    %32 = vector.load %arg2[%c0_7, %c0_8] : memref<1x4xf32, #tpu.memory_space<vmem>>, vector<1x4xf32>
    %c0_9 = arith.constant 0 : index
    %c0_10 = arith.constant 0 : index
    %33 = vector.load %arg3[%c0_9, %c0_10] : memref<1x4xf32, #tpu.memory_space<vmem>>, vector<1x4xf32>
    %cst_11 = arith.constant dense<0.000000e+00> : vector<4xf32>
    %34 = vector.multi_reduction <add>, %31, %cst_11 [0] : vector<512x4xf32> to vector<4xf32>
    %35 = vector.shape_cast %34 : vector<4xf32> to vector<1x4xf32>
    %cst_12 = arith.constant 5.120000e+02 : f32
    %36 = vector.broadcast %cst_12 : f32 to vector<1x4xf32>
    %37 = arith.divf %35, %36 : vector<1x4xf32>
    %38 = vector.broadcast %37 : vector<1x4xf32> to vector<512x4xf32>
    %39 = arith.subf %31, %38 : vector<512x4xf32>
    %40 = arith.mulf %39, %39 : vector<512x4xf32>
    %cst_13 = arith.constant dense<0.000000e+00> : vector<4xf32>
    %41 = vector.multi_reduction <add>, %40, %cst_13 [0] : vector<512x4xf32> to vector<4xf32>
    %42 = vector.shape_cast %41 : vector<4xf32> to vector<1x4xf32>
    %cst_14 = arith.constant 5.120000e+02 : f32
    %43 = vector.broadcast %cst_14 : f32 to vector<1x4xf32>
    %44 = arith.divf %42, %43 : vector<1x4xf32>
    %cst_15 = arith.constant 9.99999974E-6 : f32
    %45 = vector.broadcast %cst_15 : f32 to vector<1x4xf32>
    %46 = arith.addf %44, %45 : vector<1x4xf32>
    %47 = math.rsqrt %46 : vector<1x4xf32>
    %48 = arith.mulf %47, %32 : vector<1x4xf32>
    %49 = vector.broadcast %48 : vector<1x4xf32> to vector<512x4xf32>
    %50 = arith.mulf %39, %49 : vector<512x4xf32>
    %51 = vector.broadcast %33 : vector<1x4xf32> to vector<512x4xf32>
    %52 = arith.addf %50, %51 : vector<512x4xf32>
    %cst_16 = arith.constant 0.000000e+00 : f32
    %53 = vector.broadcast %cst_16 : f32 to vector<512x4xf32>
    %54 = arith.maximumf %52, %53 : vector<512x4xf32>
    %55 = arith.truncf %54 : vector<512x4xf32> to vector<512x4xbf16>
    %56 = vector.shape_cast %55 : vector<512x4xbf16> to vector<2x16x16x4xbf16>
    %cst_17 = arith.constant 0.000000e+00 : bf16
    %57 = vector.broadcast %cst_17 : bf16 to vector<2x1x16x4xbf16>
    %cst_18 = arith.constant 0.000000e+00 : bf16
    %58 = vector.broadcast %cst_18 : bf16 to vector<2x16x1x4xbf16>
    %59 = vector.extract_strided_slice %56 {offsets = [0, 0, 0, 0], sizes = [2, 15, 16, 4], strides = [1, 1, 1, 1]} : vector<2x16x16x4xbf16> to vector<2x15x16x4xbf16>
    %60 = tpu.concatenate %57, %59 in 1 : vector<2x1x16x4xbf16>, vector<2x15x16x4xbf16> -> vector<2x16x16x4xbf16>
    %61 = vector.extract_strided_slice %60 {offsets = [0, 0, 0, 0], sizes = [2, 16, 15, 4], strides = [1, 1, 1, 1]} : vector<2x16x16x4xbf16> to vector<2x16x15x4xbf16>
    %62 = tpu.concatenate %58, %61 in 2 : vector<2x16x1x4xbf16>, vector<2x16x15x4xbf16> -> vector<2x16x16x4xbf16>
    %63 = vector.extract_strided_slice %56 {offsets = [0, 0, 0, 0], sizes = [2, 15, 16, 4], strides = [1, 1, 1, 1]} : vector<2x16x16x4xbf16> to vector<2x15x16x4xbf16>
    %64 = tpu.concatenate %57, %63 in 1 : vector<2x1x16x4xbf16>, vector<2x15x16x4xbf16> -> vector<2x16x16x4xbf16>
    %65 = vector.extract_strided_slice %56 {offsets = [0, 0, 0, 0], sizes = [2, 15, 16, 4], strides = [1, 1, 1, 1]} : vector<2x16x16x4xbf16> to vector<2x15x16x4xbf16>
    %66 = tpu.concatenate %57, %65 in 1 : vector<2x1x16x4xbf16>, vector<2x15x16x4xbf16> -> vector<2x16x16x4xbf16>
    %67 = vector.extract_strided_slice %66 {offsets = [0, 0, 1, 0], sizes = [2, 16, 15, 4], strides = [1, 1, 1, 1]} : vector<2x16x16x4xbf16> to vector<2x16x15x4xbf16>
    %68 = tpu.concatenate %67, %58 in 2 : vector<2x16x15x4xbf16>, vector<2x16x1x4xbf16> -> vector<2x16x16x4xbf16>
    %69 = vector.extract_strided_slice %56 {offsets = [0, 0, 0, 0], sizes = [2, 16, 15, 4], strides = [1, 1, 1, 1]} : vector<2x16x16x4xbf16> to vector<2x16x15x4xbf16>
    %70 = tpu.concatenate %58, %69 in 2 : vector<2x16x1x4xbf16>, vector<2x16x15x4xbf16> -> vector<2x16x16x4xbf16>
    %71 = vector.extract_strided_slice %56 {offsets = [0, 0, 1, 0], sizes = [2, 16, 15, 4], strides = [1, 1, 1, 1]} : vector<2x16x16x4xbf16> to vector<2x16x15x4xbf16>
    %72 = tpu.concatenate %71, %58 in 2 : vector<2x16x15x4xbf16>, vector<2x16x1x4xbf16> -> vector<2x16x16x4xbf16>
    %73 = vector.extract_strided_slice %56 {offsets = [0, 1, 0, 0], sizes = [2, 15, 16, 4], strides = [1, 1, 1, 1]} : vector<2x16x16x4xbf16> to vector<2x15x16x4xbf16>
    %74 = tpu.concatenate %73, %57 in 1 : vector<2x15x16x4xbf16>, vector<2x1x16x4xbf16> -> vector<2x16x16x4xbf16>
    %75 = vector.extract_strided_slice %74 {offsets = [0, 0, 0, 0], sizes = [2, 16, 15, 4], strides = [1, 1, 1, 1]} : vector<2x16x16x4xbf16> to vector<2x16x15x4xbf16>
    %76 = tpu.concatenate %58, %75 in 2 : vector<2x16x1x4xbf16>, vector<2x16x15x4xbf16> -> vector<2x16x16x4xbf16>
    %77 = vector.extract_strided_slice %56 {offsets = [0, 1, 0, 0], sizes = [2, 15, 16, 4], strides = [1, 1, 1, 1]} : vector<2x16x16x4xbf16> to vector<2x15x16x4xbf16>
    %78 = tpu.concatenate %77, %57 in 1 : vector<2x15x16x4xbf16>, vector<2x1x16x4xbf16> -> vector<2x16x16x4xbf16>
    %79 = vector.extract_strided_slice %56 {offsets = [0, 1, 0, 0], sizes = [2, 15, 16, 4], strides = [1, 1, 1, 1]} : vector<2x16x16x4xbf16> to vector<2x15x16x4xbf16>
    %80 = tpu.concatenate %79, %57 in 1 : vector<2x15x16x4xbf16>, vector<2x1x16x4xbf16> -> vector<2x16x16x4xbf16>
    %81 = vector.extract_strided_slice %80 {offsets = [0, 0, 1, 0], sizes = [2, 16, 15, 4], strides = [1, 1, 1, 1]} : vector<2x16x16x4xbf16> to vector<2x16x15x4xbf16>
    %82 = tpu.concatenate %81, %58 in 2 : vector<2x16x15x4xbf16>, vector<2x16x1x4xbf16> -> vector<2x16x16x4xbf16>
    %83 = tpu.concatenate %62, %64, %68, %70, %56, %72, %76, %78, %82 in 3 : vector<2x16x16x4xbf16>, vector<2x16x16x4xbf16>, vector<2x16x16x4xbf16>, vector<2x16x16x4xbf16>, vector<2x16x16x4xbf16>, vector<2x16x16x4xbf16>, vector<2x16x16x4xbf16>, vector<2x16x16x4xbf16>, vector<2x16x16x4xbf16> -> vector<2x16x16x36xbf16>
    %84 = vector.shape_cast %83 : vector<2x16x16x36xbf16> to vector<512x36xbf16>
    %c0_19 = arith.constant 0 : index
    %c0_20 = arith.constant 0 : index
    %85 = vector.load %arg4[%c0_19, %c0_20] : memref<36x4xbf16, #tpu.memory_space<vmem>>, vector<36x4xbf16>
    %cst_21 = arith.constant dense<0.000000e+00> : vector<512x4xf32>
    %86 = tpu.matmul %84, %85, %cst_21 {dimension_numbers = #tpu.dot_dimension_numbers<[1], [0], [0], [1], [0, 0, 1, 1], [], []>} : vector<512x36xbf16>, vector<36x4xbf16>, vector<512x4xf32> -> vector<512x4xf32>
    %c0_22 = arith.constant 0 : index
    %c0_23 = arith.constant 0 : index
    %87 = vector.load %arg5[%c0_22, %c0_23] : memref<1x4xf32, #tpu.memory_space<vmem>>, vector<1x4xf32>
    %c0_24 = arith.constant 0 : index
    %c0_25 = arith.constant 0 : index
    %88 = vector.load %arg6[%c0_24, %c0_25] : memref<1x4xf32, #tpu.memory_space<vmem>>, vector<1x4xf32>
    %cst_26 = arith.constant dense<0.000000e+00> : vector<4xf32>
    %89 = vector.multi_reduction <add>, %86, %cst_26 [0] : vector<512x4xf32> to vector<4xf32>
    %90 = vector.shape_cast %89 : vector<4xf32> to vector<1x4xf32>
    %cst_27 = arith.constant 5.120000e+02 : f32
    %91 = vector.broadcast %cst_27 : f32 to vector<1x4xf32>
    %92 = arith.divf %90, %91 : vector<1x4xf32>
    %93 = vector.broadcast %92 : vector<1x4xf32> to vector<512x4xf32>
    %94 = arith.subf %86, %93 : vector<512x4xf32>
    %95 = arith.mulf %94, %94 : vector<512x4xf32>
    %cst_28 = arith.constant dense<0.000000e+00> : vector<4xf32>
    %96 = vector.multi_reduction <add>, %95, %cst_28 [0] : vector<512x4xf32> to vector<4xf32>
    %97 = vector.shape_cast %96 : vector<4xf32> to vector<1x4xf32>
    %cst_29 = arith.constant 5.120000e+02 : f32
    %98 = vector.broadcast %cst_29 : f32 to vector<1x4xf32>
    %99 = arith.divf %97, %98 : vector<1x4xf32>
    %cst_30 = arith.constant 9.99999974E-6 : f32
    %100 = vector.broadcast %cst_30 : f32 to vector<1x4xf32>
    %101 = arith.addf %99, %100 : vector<1x4xf32>
    %102 = math.rsqrt %101 : vector<1x4xf32>
    %103 = arith.mulf %102, %87 : vector<1x4xf32>
    %104 = vector.broadcast %103 : vector<1x4xf32> to vector<512x4xf32>
    %105 = arith.mulf %94, %104 : vector<512x4xf32>
    %106 = vector.broadcast %88 : vector<1x4xf32> to vector<512x4xf32>
    %107 = arith.addf %105, %106 : vector<512x4xf32>
    %c0_31 = arith.constant 0 : index
    %c0_32 = arith.constant 0 : index
    %c0_33 = arith.constant 0 : index
    %c0_34 = arith.constant 0 : index
    %108 = vector.load %arg0[%c0_31, %c0_32, %c0_33, %c0_34] : memref<2x16x16x4xf32, #tpu.memory_space<vmem>>, vector<2x16x16x4xf32>
    %109 = vector.shape_cast %108 : vector<2x16x16x4xf32> to vector<512x4xf32>
    %110 = arith.addf %107, %109 : vector<512x4xf32>
    %cst_35 = arith.constant 0.000000e+00 : f32
    %111 = vector.broadcast %cst_35 : f32 to vector<512x4xf32>
    %112 = arith.maximumf %110, %111 : vector<512x4xf32>
    %c0_36 = arith.constant 0 : index
    %c0_37 = arith.constant 0 : index
    %113 = vector.load %arg7[%c0_36, %c0_37] : memref<512x4xf32, #tpu.memory_space<vmem>>, vector<512x4xf32>
    tpu.vector_store %arg7[%c0_36, %c0_37], %112 {strides = array<i32>} : memref<512x4xf32, #tpu.memory_space<vmem>>, vector<512x4xf32>,
    return
  }
}

</mosaic_0001>

<llo_original>
// kernel: tpu_custom_call.1
$region0: #{tpu_custom_call.1}
  #allocation0 [shape = 'u32[]', space=smem, size = 0x4, offset = 0x4, fixed_abs, tag = 'smem constant byte address 0x4 - core index']
  #allocation1 [shape = 'u32[144,128]{1,0:T(1,128)}', space=vmem, size = 0x12000, scoped, tag = 'internal scratch']
  %s0 = inlined_call_operand.vmem [shape: f32[2,16,16,4], index: 0, kind: input, shape index: {}]
  %s1 = inlined_call_operand.vmem [shape: bf16[36,4], index: 1, kind: input, shape index: {}]
  %s2 = inlined_call_operand.vmem [shape: f32[1,4], index: 2, kind: input, shape index: {}]
  %s3 = inlined_call_operand.vmem [shape: f32[1,4], index: 3, kind: input, shape index: {}]
  %s4 = inlined_call_operand.vmem [shape: bf16[36,4], index: 4, kind: input, shape index: {}]
  %s5 = inlined_call_operand.vmem [shape: f32[1,4], index: 5, kind: input, shape index: {}]
  %s6 = inlined_call_operand.vmem [shape: f32[1,4], index: 6, kind: input, shape index: {}]
  %s7 = inlined_call_operand.vmem [shape: f32[512,4], index: 7, kind: output, shape index: {}]
  %s8 = sld [smem:[#allocation0]]
  $region38: #{tpu_custom_call.1} parent=0
    _
  %s10 = ssub.s32 1, %s8
  %s11 = scalar_select 0, %s10, %s8
  // Predicated region
  $region2: #{tpu_custom_call.1} parent=0 // pred_check
    _
  $region3: #{tpu_custom_call.1} parent=0 // pred_check_branch
    %13 = sbr.rel (0) target = $region5
  $region4: #{tpu_custom_call.1} parent=0 // pred_region
    _
  $region5: #{tpu_custom_call.1} parent=0 // pred_fallthru
    _
  // Predicated region
  $region6: #{tpu_custom_call.1} parent=0 // pred_check
    _
  $region7: #{tpu_custom_call.1} parent=0 // pred_check_branch
    %15 = sbr.rel (0) target = $region9
  $region8: #{tpu_custom_call.1} parent=0 // pred_region
    _
  $region9: #{tpu_custom_call.1} parent=0 // pred_fallthru
    _
  // Predicated region
  $region10: #{tpu_custom_call.1} parent=0 // pred_check
    _
  $region11: #{tpu_custom_call.1} parent=0 // pred_check_branch
    %17 = sbr.rel (0) target = $region13
  $region12: #{tpu_custom_call.1} parent=0 // pred_region
    _
  $region13: #{tpu_custom_call.1} parent=0 // pred_fallthru
    _
  // Predicated region
  $region14: #{tpu_custom_call.1} parent=0 // pred_check
    _
  $region15: #{tpu_custom_call.1} parent=0 // pred_check_branch
    %19 = sbr.rel (0) target = $region17
  $region16: #{tpu_custom_call.1} parent=0 // pred_region
    _
  $region17: #{tpu_custom_call.1} parent=0 // pred_fallthru
    _
  // Predicated region
  $region18: #{tpu_custom_call.1} parent=0 // pred_check
    _
  $region19: #{tpu_custom_call.1} parent=0 // pred_check_branch
    %21 = sbr.rel (0) target = $region21
  $region20: #{tpu_custom_call.1} parent=0 // pred_region
    _
  $region21: #{tpu_custom_call.1} parent=0 // pred_fallthru
    _
  // Predicated region
  $region22: #{tpu_custom_call.1} parent=0 // pred_check
    _
  $region23: #{tpu_custom_call.1} parent=0 // pred_check_branch
    %23 = sbr.rel (0) target = $region25
  $region24: #{tpu_custom_call.1} parent=0 // pred_region
    _
  $region25: #{tpu_custom_call.1} parent=0 // pred_fallthru
    _
  // Predicated region
  $region26: #{tpu_custom_call.1} parent=0 // pred_check
    _
  $region27: #{tpu_custom_call.1} parent=0 // pred_check_branch
    %25 = sbr.rel (0) target = $region29
  $region28: #{tpu_custom_call.1} parent=0 // pred_region
    _
  $region29: #{tpu_custom_call.1} parent=0 // pred_fallthru
    _
  %v27 = vld [vmem:[%s0] sm:$0xff]
  %v28 = vld [vmem:[%s0 + $0x8] sm:$0xff]
  %v29 = vld [vmem:[%s0 + $0x10] sm:$0xff]
  %v30 = vld [vmem:[%s0 + $0x18] sm:$0xff]
  %v31 = vld [vmem:[%s0 + $0x20] sm:$0xff]
  %v32 = vld [vmem:[%s0 + $0x28] sm:$0xff]
  %v33 = vld [vmem:[%s0 + $0x30] sm:$0xff]
  %v34 = vld [vmem:[%s0 + $0x38] sm:$0xff]
  %v35 = vld [vmem:[%s0 + $0x40] sm:$0xff]
  %v36 = vld [vmem:[%s0 + $0x48] sm:$0xff]
  %v37 = vld [vmem:[%s0 + $0x50] sm:$0xff]
  %v38 = vld [vmem:[%s0 + $0x58] sm:$0xff]
  %v39 = vld [vmem:[%s0 + $0x60] sm:$0xff]
  %v40 = vld [vmem:[%s0 + $0x68] sm:$0xff]
  %v41 = vld [vmem:[%s0 + $0x70] sm:$0xff]
  %v42 = vld [vmem:[%s0 + $0x78] sm:$0xff]
  %v43 = vld [vmem:[%s0 + $0x80] sm:$0xff]
  %v44 = vld [vmem:[%s0 + $0x88] sm:$0xff]
  %v45 = vld [vmem:[%s0 + $0x90] sm:$0xff]
  %v46 = vld [vmem:[%s0 + $0x98] sm:$0xff]
  %v47 = vld [vmem:[%s0 + $0xa0] sm:$0xff]
  %v48 = vld [vmem:[%s0 + $0xa8] sm:$0xff]
  %v49 = vld [vmem:[%s0 + $0xb0] sm:$0xff]
  %v50 = vld [vmem:[%s0 + $0xb8] sm:$0xff]
  %v51 = vld [vmem:[%s0 + $0xc0] sm:$0xff]
  %v52 = vld [vmem:[%s0 + $0xc8] sm:$0xff]
  %v53 = vld [vmem:[%s0 + $0xd0] sm:$0xff]
  %v54 = vld [vmem:[%s0 + $0xd8] sm:$0xff]
  %v55 = vld [vmem:[%s0 + $0xe0] sm:$0xff]
  %v56 = vld [vmem:[%s0 + $0xe8] sm:$0xff]
  %v57 = vld [vmem:[%s0 + $0xf0] sm:$0xff]
  %v58 = vld [vmem:[%s0 + $0xf8] sm:$0xff]
  %v59 = vld [vmem:[%s0 + $0x100] sm:$0xff]
  %v60 = vld [vmem:[%s0 + $0x108] sm:$0xff]
  %v61 = vld [vmem:[%s0 + $0x110] sm:$0xff]
  %v62 = vld [vmem:[%s0 + $0x118] sm:$0xff]
  %v63 = vld [vmem:[%s0 + $0x120] sm:$0xff]
  %v64 = vld [vmem:[%s0 + $0x128] sm:$0xff]
  %v65 = vld [vmem:[%s0 + $0x130] sm:$0xff]
  %v66 = vld [vmem:[%s0 + $0x138] sm:$0xff]
  %v67 = vld [vmem:[%s0 + $0x140] sm:$0xff]
  %v68 = vld [vmem:[%s0 + $0x148] sm:$0xff]
  %v69 = vld [vmem:[%s0 + $0x150] sm:$0xff]
  %v70 = vld [vmem:[%s0 + $0x158] sm:$0xff]
  %v71 = vld [vmem:[%s0 + $0x160] sm:$0xff]
  %v72 = vld [vmem:[%s0 + $0x168] sm:$0xff]
  %v73 = vld [vmem:[%s0 + $0x170] sm:$0xff]
  %v74 = vld [vmem:[%s0 + $0x178] sm:$0xff]
  %v75 = vld [vmem:[%s0 + $0x180] sm:$0xff]
  %v76 = vld [vmem:[%s0 + $0x188] sm:$0xff]
  %v77 = vld [vmem:[%s0 + $0x190] sm:$0xff]
  %v78 = vld [vmem:[%s0 + $0x198] sm:$0xff]
  %v79 = vld [vmem:[%s0 + $0x1a0] sm:$0xff]
  %v80 = vld [vmem:[%s0 + $0x1a8] sm:$0xff]
  %v81 = vld [vmem:[%s0 + $0x1b0] sm:$0xff]
  %v82 = vld [vmem:[%s0 + $0x1b8] sm:$0xff]
  %v83 = vld [vmem:[%s0 + $0x1c0] sm:$0xff]
  %v84 = vld [vmem:[%s0 + $0x1c8] sm:$0xff]
  %v85 = vld [vmem:[%s0 + $0x1d0] sm:$0xff]
  %v86 = vld [vmem:[%s0 + $0x1d8] sm:$0xff]
  %v87 = vld [vmem:[%s0 + $0x1e0] sm:$0xff]
  %v88 = vld [vmem:[%s0 + $0x1e8] sm:$0xff]
  %v89 = vld [vmem:[%s0 + $0x1f0] sm:$0xff]
  %v90 = vld [vmem:[%s0 + $0x1f8] sm:$0xff]
  %v91 = vpack.c.bf16 %v28, %v27
  %v92 = vpack.c.bf16 %v30, %v29
  %v93 = vpack.c.bf16 %v32, %v31
  %v94 = vpack.c.bf16 %v34, %v33
  %v95 = vpack.c.bf16 %v36, %v35
  %v96 = vpack.c.bf16 %v38, %v37
  %v97 = vpack.c.bf16 %v40, %v39
  %v98 = vpack.c.bf16 %v42, %v41
  %v99 = vpack.c.bf16 %v44, %v43
  %v100 = vpack.c.bf16 %v46, %v45
  %v101 = vpack.c.bf16 %v48, %v47
  %v102 = vpack.c.bf16 %v50, %v49
  %v103 = vpack.c.bf16 %v52, %v51
  %v104 = vpack.c.bf16 %v54, %v53
  %v105 = vpack.c.bf16 %v56, %v55
  %v106 = vpack.c.bf16 %v58, %v57
  %v107 = vpack.c.bf16 %v60, %v59
  %v108 = vpack.c.bf16 %v62, %v61
  %v109 = vpack.c.bf16 %v64, %v63
  %v110 = vpack.c.bf16 %v66, %v65
  %v111 = vpack.c.bf16 %v68, %v67
  %v112 = vpack.c.bf16 %v70, %v69
  %v113 = vpack.c.bf16 %v72, %v71
  %v114 = vpack.c.bf16 %v74, %v73
  %v115 = vpack.c.bf16 %v76, %v75
  %v116 = vpack.c.bf16 %v78, %v77
  %v117 = vpack.c.bf16 %v80, %v79
  %v118 = vpack.c.bf16 %v82, %v81
  %v119 = vpack.c.bf16 %v84, %v83
  %v120 = vpack.c.bf16 %v86, %v85
  %v121 = vpack.c.bf16 %v88, %v87
  %v122 = vpack.c.bf16 %v90, %v89
  %v124 = vshrl.u32 0, 16
  %v126 = vrot.slane %v124, 7
  %v127 = vshll.u32 0, 16
  %v129 = vor.u32 %v126, %v127
  %v131 = vshrl.u32 %v91, 16
  %v133 = vrot.slane %v131, 7
  %v134 = vshll.u32 %v91, 16
  %v136 = vor.u32 %v133, %v134
  %v138 = vshrl.u32 %v92, 16
  %v140 = vrot.slane %v138, 7
  %v141 = vshll.u32 %v92, 16
  %v143 = vor.u32 %v140, %v141
  %v145 = vshrl.u32 %v93, 16
  %v147 = vrot.slane %v145, 7
  %v148 = vshll.u32 %v93, 16
  %v150 = vor.u32 %v147, %v148
  %v152 = vshrl.u32 %v94, 16
  %v154 = vrot.slane %v152, 7
  %v155 = vshll.u32 %v94, 16
  %v157 = vor.u32 %v154, %v155
  %v159 = vshrl.u32 %v95, 16
  %v161 = vrot.slane %v159, 7
  %v162 = vshll.u32 %v95, 16
  %v164 = vor.u32 %v161, %v162
  %v166 = vshrl.u32 %v96, 16
  %v168 = vrot.slane %v166, 7
  %v169 = vshll.u32 %v96, 16
  %v171 = vor.u32 %v168, %v169
  %v173 = vshrl.u32 %v97, 16
  %v175 = vrot.slane %v173, 7
  %v176 = vshll.u32 %v97, 16
  %v178 = vor.u32 %v175, %v176
  %v180 = vshrl.u32 %v98, 16
  %v182 = vrot.slane %v180, 7
  %v183 = vshll.u32 %v98, 16
  %v185 = vor.u32 %v182, %v183
  %v187 = vshrl.u32 %v99, 16
  %v189 = vrot.slane %v187, 7
  %v190 = vshll.u32 %v99, 16
  %v192 = vor.u32 %v189, %v190
  %v194 = vshrl.u32 %v100, 16
  %v196 = vrot.slane %v194, 7
  %v197 = vshll.u32 %v100, 16
  %v199 = vor.u32 %v196, %v197
  %v201 = vshrl.u32 %v101, 16
  %v203 = vrot.slane %v201, 7
  %v204 = vshll.u32 %v101, 16
  %v206 = vor.u32 %v203, %v204
  %v208 = vshrl.u32 %v102, 16
  %v210 = vrot.slane %v208, 7
  %v211 = vshll.u32 %v102, 16
  %v213 = vor.u32 %v210, %v211
  %v215 = vshrl.u32 %v103, 16
  %v217 = vrot.slane %v215, 7
  %v218 = vshll.u32 %v103, 16
  %v220 = vor.u32 %v217, %v218
  %v222 = vshrl.u32 %v104, 16
  %v224 = vrot.slane %v222, 7
  %v225 = vshll.u32 %v104, 16
  %v227 = vor.u32 %v224, %v225
  %v229 = vshrl.u32 %v105, 16
  %v231 = vrot.slane %v229, 7
  %v232 = vshll.u32 %v105, 16
  %v234 = vor.u32 %v231, %v232
  %v236 = vshrl.u32 %v107, 16
  %v238 = vrot.slane %v236, 7
  %v239 = vshll.u32 %v107, 16
  %v241 = vor.u32 %v238, %v239
  %v243 = vshrl.u32 %v108, 16
  %v245 = vrot.slane %v243, 7
  %v246 = vshll.u32 %v108, 16
  %v248 = vor.u32 %v245, %v246
  %v250 = vshrl.u32 %v109, 16
  %v252 = vrot.slane %v250, 7
  %v253 = vshll.u32 %v109, 16
  %v255 = vor.u32 %v252, %v253
  %v257 = vshrl.u32 %v110, 16
  %v259 = vrot.slane %v257, 7
  %v260 = vshll.u32 %v110, 16
  %v262 = vor.u32 %v259, %v260
  %v264 = vshrl.u32 %v111, 16
  %v266 = vrot.slane %v264, 7
  %v267 = vshll.u32 %v111, 16
  %v269 = vor.u32 %v266, %v267
  %v271 = vshrl.u32 %v112, 16
  %v273 = vrot.slane %v271, 7
  %v274 = vshll.u32 %v112, 16
  %v276 = vor.u32 %v273, %v274
  %v278 = vshrl.u32 %v113, 16
  %v280 = vrot.slane %v278, 7
  %v281 = vshll.u32 %v113, 16
  %v283 = vor.u32 %v280, %v281
  %v285 = vshrl.u32 %v114, 16
  %v287 = vrot.slane %v285, 7
  %v288 = vshll.u32 %v114, 16
  %v290 = vor.u32 %v287, %v288
  %v292 = vshrl.u32 %v115, 16
  %v294 = vrot.slane %v292, 7
  %v295 = vshll.u32 %v115, 16
  %v297 = vor.u32 %v294, %v295
  %v299 = vshrl.u32 %v116, 16
  %v301 = vrot.slane %v299, 7
  %v302 = vshll.u32 %v116, 16
  %v304 = vor.u32 %v301, %v302
  %v306 = vshrl.u32 %v117, 16
  %v308 = vrot.slane %v306, 7
  %v309 = vshll.u32 %v117, 16
  %v311 = vor.u32 %v308, %v309
  %v313 = vshrl.u32 %v118, 16
  %v315 = vrot.slane %v313, 7
  %v316 = vshll.u32 %v118, 16
  %v318 = vor.u32 %v315, %v316
  %v320 = vshrl.u32 %v119, 16
  %v322 = vrot.slane %v320, 7
  %v323 = vshll.u32 %v119, 16
  %v325 = vor.u32 %v322, %v323
  %v327 = vshrl.u32 %v120, 16
  %v329 = vrot.slane %v327, 7
  %v330 = vshll.u32 %v120, 16
  %v332 = vor.u32 %v329, %v330
  %v334 = vshrl.u32 %v121, 16
  %v336 = vrot.slane %v334, 7
  %v337 = vshll.u32 %v121, 16
  %v339 = vor.u32 %v336, %v337
  %vm371 = vcmask 1040384
  %vm372 = vsmask.f32 256
  %vm373 = vmand %vm371, %vm372
  %v374 = vsel %vm373, 0, %v129
  %v375 = vsel %vm373, 0, %v136
  %v376 = vsel %vm373, 0, %v143
  %v377 = vsel %vm373, 0, %v150
  %v378 = vsel %vm373, 0, %v157
  %v379 = vsel %vm373, 0, %v164
  %v380 = vsel %vm373, 0, %v171
  %v381 = vsel %vm373, 0, %v178
  %v382 = vsel %vm373, 0, %v185
  %v383 = vsel %vm373, 0, %v192
  %v384 = vsel %vm373, 0, %v199
  %v385 = vsel %vm373, 0, %v206
  %v386 = vsel %vm373, 0, %v213
  %v387 = vsel %vm373, 0, %v220
  %v388 = vsel %vm373, 0, %v227
  %v389 = vsel %vm373, 0, %v234
  %v390 = vsel %vm373, 0, %v241
  %v391 = vsel %vm373, 0, %v248
  %v392 = vsel %vm373, 0, %v255
  %v393 = vsel %vm373, 0, %v262
  %v394 = vsel %vm373, 0, %v269
  %v395 = vsel %vm373, 0, %v276
  %v396 = vsel %vm373, 0, %v283
  %v397 = vsel %vm373, 0, %v290
  %v398 = vsel %vm373, 0, %v297
  %v399 = vsel %vm373, 0, %v304
  %v400 = vsel %vm373, 0, %v311
  %v401 = vsel %vm373, 0, %v318
  %v402 = vsel %vm373, 0, %v325
  %v403 = vsel %vm373, 0, %v332
  %v404 = vsel %vm373, 0, %v339
  %v405 = vrot.slane %v127, 1
  %v406 = vor.u32 %v124, %v405
  %v407 = vrot.slane %v134, 1
  %v408 = vor.u32 %v131, %v407
  %v409 = vrot.slane %v141, 1
  %v410 = vor.u32 %v138, %v409
  %v411 = vrot.slane %v148, 1
  %v412 = vor.u32 %v145, %v411
  %v413 = vrot.slane %v155, 1
  %v414 = vor.u32 %v152, %v413
  %v415 = vrot.slane %v162, 1
  %v416 = vor.u32 %v159, %v415
  %v417 = vrot.slane %v169, 1
  %v418 = vor.u32 %v166, %v417
  %v419 = vrot.slane %v176, 1
  %v420 = vor.u32 %v173, %v419
  %v421 = vrot.slane %v183, 1
  %v422 = vor.u32 %v180, %v421
  %v423 = vrot.slane %v190, 1
  %v424 = vor.u32 %v187, %v423
  %v425 = vrot.slane %v197, 1
  %v426 = vor.u32 %v194, %v425
  %v427 = vrot.slane %v204, 1
  %v428 = vor.u32 %v201, %v427
  %v429 = vrot.slane %v211, 1
  %v430 = vor.u32 %v208, %v429
  %v431 = vrot.slane %v218, 1
  %v432 = vor.u32 %v215, %v431
  %v433 = vrot.slane %v225, 1
  %v434 = vor.u32 %v222, %v433
  %v435 = vrot.slane %v232, 1
  %v436 = vor.u32 %v229, %v435
  %v437 = vrot.slane %v239, 1
  %v438 = vor.u32 %v236, %v437
  %v439 = vrot.slane %v246, 1
  %v440 = vor.u32 %v243, %v439
  %v441 = vrot.slane %v253, 1
  %v442 = vor.u32 %v250, %v441
  %v443 = vrot.slane %v260, 1
  %v444 = vor.u32 %v257, %v443
  %v445 = vrot.slane %v267, 1
  %v446 = vor.u32 %v264, %v445
  %v447 = vrot.slane %v274, 1
  %v448 = vor.u32 %v271, %v447
  %v449 = vrot.slane %v281, 1
  %v450 = vor.u32 %v278, %v449
  %v451 = vrot.slane %v288, 1
  %v452 = vor.u32 %v285, %v451
  %v453 = vrot.slane %v295, 1
  %v454 = vor.u32 %v292, %v453
  %v455 = vrot.slane %v302, 1
  %v456 = vor.u32 %v299, %v455
  %v457 = vrot.slane %v309, 1
  %v458 = vor.u32 %v306, %v457
  %v459 = vrot.slane %v316, 1
  %v460 = vor.u32 %v313, %v459
  %v461 = vrot.slane %v323, 1
  %v462 = vor.u32 %v320, %v461
  %v463 = vrot.slane %v330, 1
  %v464 = vor.u32 %v327, %v463
  %v465 = vrot.slane %v337, 1
  %v466 = vor.u32 %v334, %v465
  %vm498 = vcmask 1047552
  %vm499 = vsmask.f32 7424
  %vm500 = vmand %vm498, %vm499
  %v501 = vsel %vm500, %v406, 0
  %v502 = vsel %vm500, %v408, 0
  %v503 = vsel %vm500, %v410, 0
  %v504 = vsel %vm500, %v412, 0
  %v505 = vsel %vm500, %v414, 0
  %v506 = vsel %vm500, %v416, 0
  %v507 = vsel %vm500, %v418, 0
  %v508 = vsel %vm500, %v420, 0
  %v509 = vsel %vm500, %v422, 0
  %v510 = vsel %vm500, %v424, 0
  %v511 = vsel %vm500, %v426, 0
  %v512 = vsel %vm500, %v428, 0
  %v513 = vsel %vm500, %v430, 0
  %v514 = vsel %vm500, %v432, 0
  %v515 = vsel %vm500, %v434, 0
  %v516 = vsel %vm500, %v436, 0
  %v517 = vsel %vm500, %v438, 0
  %v518 = vsel %vm500, %v440, 0
  %v519 = vsel %vm500, %v442, 0
  %v520 = vsel %vm500, %v444, 0
  %v521 = vsel %vm500, %v446, 0
  %v522 = vsel %vm500, %v448, 0
  %v523 = vsel %vm500, %v450, 0
  %v524 = vsel %vm500, %v452, 0
  %v525 = vsel %vm500, %v454, 0
  %v526 = vsel %vm500, %v456, 0
  %v527 = vsel %vm500, %v458, 0
  %v528 = vsel %vm500, %v460, 0
  %v529 = vsel %vm500, %v462, 0
  %v530 = vsel %vm500, %v464, 0
  %v531 = vsel %vm500, %v466, 0
  %v533 = vshrl.u32 %v106, 16
  %v535 = vrot.slane %v533, 7
  %v536 = vshll.u32 %v106, 16
  %v538 = vor.u32 %v535, %v536
  %v540 = vshrl.u32 %v122, 16
  %v542 = vrot.slane %v540, 7
  %v543 = vshll.u32 %v122, 16
  %v545 = vor.u32 %v542, %v543
  %v548 = vsel %vm373, 0, %v538
  %v549 = vsel %vm373, 0, %v545
  %v550 = vrot.slane %v536, 1
  %v551 = vor.u32 %v533, %v550
  %v552 = vrot.slane %v543, 1
  %v553 = vor.u32 %v540, %v552
  %v556 = vsel %vm500, %v551, 0
  %v557 = vsel %vm500, %v553, 0
  %589 = vrot.lane.b32.xlu0 0, 4
  %v590 = vpop.permute.xlu0 %589
  %591 = vrot.lane.b32.xlu0 %v91, 4
  %v592 = vpop.permute.xlu0 %591
  %593 = vrot.lane.b32.xlu0 %v92, 4
  %v594 = vpop.permute.xlu0 %593
  %595 = vrot.lane.b32.xlu0 %v93, 4
  %v596 = vpop.permute.xlu0 %595
  %597 = vrot.lane.b32.xlu0 %v94, 4
  %v598 = vpop.permute.xlu0 %597
  %599 = vrot.lane.b32.xlu0 %v95, 4
  %v600 = vpop.permute.xlu0 %599
  %601 = vrot.lane.b32.xlu0 %v96, 4
  %v602 = vpop.permute.xlu0 %601
  %603 = vrot.lane.b32.xlu0 %v97, 4
  %v604 = vpop.permute.xlu0 %603
  %605 = vrot.lane.b32.xlu0 %v98, 4
  %v606 = vpop.permute.xlu0 %605
  %607 = vrot.lane.b32.xlu0 %v99, 4
  %v608 = vpop.permute.xlu0 %607
  %609 = vrot.lane.b32.xlu0 %v100, 4
  %v610 = vpop.permute.xlu0 %609
  %611 = vrot.lane.b32.xlu0 %v101, 4
  %v612 = vpop.permute.xlu0 %611
  %613 = vrot.lane.b32.xlu0 %v102, 4
  %v614 = vpop.permute.xlu0 %613
  %615 = vrot.lane.b32.xlu0 %v103, 4
  %v616 = vpop.permute.xlu0 %615
  %617 = vrot.lane.b32.xlu0 %v104, 4
  %v618 = vpop.permute.xlu0 %617
  %619 = vrot.lane.b32.xlu0 %v105, 4
  %v620 = vpop.permute.xlu0 %619
  %621 = vrot.lane.b32.xlu0 %v107, 4
  %v622 = vpop.permute.xlu0 %621
  %623 = vrot.lane.b32.xlu0 %v108, 4
  %v624 = vpop.permute.xlu0 %623
  %625 = vrot.lane.b32.xlu0 %v109, 4
  %v626 = vpop.permute.xlu0 %625
  %627 = vrot.lane.b32.xlu0 %v110, 4
  %v628 = vpop.permute.xlu0 %627
  %629 = vrot.lane.b32.xlu0 %v111, 4
  %v630 = vpop.permute.xlu0 %629
  %631 = vrot.lane.b32.xlu0 %v112, 4
  %v632 = vpop.permute.xlu0 %631
  %633 = vrot.lane.b32.xlu0 %v113, 4
  %v634 = vpop.permute.xlu0 %633
  %635 = vrot.lane.b32.xlu0 %v114, 4
  %v636 = vpop.permute.xlu0 %635
  %637 = vrot.lane.b32.xlu0 %v115, 4
  %v638 = vpop.permute.xlu0 %637
  %639 = vrot.lane.b32.xlu0 %v116, 4
  %v640 = vpop.permute.xlu0 %639
  %641 = vrot.lane.b32.xlu0 %v117, 4
  %v642 = vpop.permute.xlu0 %641
  %643 = vrot.lane.b32.xlu0 %v118, 4
  %v644 = vpop.permute.xlu0 %643
  %645 = vrot.lane.b32.xlu0 %v119, 4
  %v646 = vpop.permute.xlu0 %645
  %647 = vrot.lane.b32.xlu0 %v120, 4
  %v648 = vpop.permute.xlu0 %647
  %649 = vrot.lane.b32.xlu0 %v121, 4
  %v650 = vpop.permute.xlu0 %649
  %682 = vrot.lane.b32.xlu0 %v501, 8
  %v683 = vpop.permute.xlu0 %682
  %684 = vrot.lane.b32.xlu0 %v502, 8
  %v685 = vpop.permute.xlu0 %684
  %686 = vrot.lane.b32.xlu0 %v503, 8
  %v687 = vpop.permute.xlu0 %686
  %688 = vrot.lane.b32.xlu0 %v504, 8
  %v689 = vpop.permute.xlu0 %688
  %690 = vrot.lane.b32.xlu0 %v505, 8
  %v691 = vpop.permute.xlu0 %690
  %692 = vrot.lane.b32.xlu0 %v506, 8
  %v693 = vpop.permute.xlu0 %692
  %694 = vrot.lane.b32.xlu0 %v507, 8
  %v695 = vpop.permute.xlu0 %694
  %696 = vrot.lane.b32.xlu0 %v508, 8
  %v697 = vpop.permute.xlu0 %696
  %698 = vrot.lane.b32.xlu0 %v509, 8
  %v699 = vpop.permute.xlu0 %698
  %700 = vrot.lane.b32.xlu0 %v510, 8
  %v701 = vpop.permute.xlu0 %700
  %702 = vrot.lane.b32.xlu0 %v511, 8
  %v703 = vpop.permute.xlu0 %702
  %704 = vrot.lane.b32.xlu0 %v512, 8
  %v705 = vpop.permute.xlu0 %704
  %706 = vrot.lane.b32.xlu0 %v513, 8
  %v707 = vpop.permute.xlu0 %706
  %708 = vrot.lane.b32.xlu0 %v514, 8
  %v709 = vpop.permute.xlu0 %708
  %710 = vrot.lane.b32.xlu0 %v515, 8
  %v711 = vpop.permute.xlu0 %710
  %712 = vrot.lane.b32.xlu0 %v516, 8
  %v713 = vpop.permute.xlu0 %712
  %714 = vrot.lane.b32.xlu0 %v517, 8
  %v715 = vpop.permute.xlu0 %714
  %716 = vrot.lane.b32.xlu0 %v518, 8
  %v717 = vpop.permute.xlu0 %716
  %718 = vrot.lane.b32.xlu0 %v519, 8
  %v719 = vpop.permute.xlu0 %718
  %720 = vrot.lane.b32.xlu0 %v520, 8
  %v721 = vpop.permute.xlu0 %720
  %722 = vrot.lane.b32.xlu0 %v521, 8
  %v723 = vpop.permute.xlu0 %722
  %724 = vrot.lane.b32.xlu0 %v522, 8
  %v725 = vpop.permute.xlu0 %724
  %726 = vrot.lane.b32.xlu0 %v523, 8
  %v727 = vpop.permute.xlu0 %726
  %728 = vrot.lane.b32.xlu0 %v524, 8
  %v729 = vpop.permute.xlu0 %728
  %730 = vrot.lane.b32.xlu0 %v525, 8
  %v731 = vpop.permute.xlu0 %730
  %732 = vrot.lane.b32.xlu0 %v526, 8
  %v733 = vpop.permute.xlu0 %732
  %734 = vrot.lane.b32.xlu0 %v527, 8
  %v735 = vpop.permute.xlu0 %734
  %736 = vrot.lane.b32.xlu0 %v528, 8
  %v737 = vpop.permute.xlu0 %736
  %738 = vrot.lane.b32.xlu0 %v529, 8
  %v739 = vpop.permute.xlu0 %738
  %740 = vrot.lane.b32.xlu0 %v530, 8
  %v741 = vpop.permute.xlu0 %740
  %742 = vrot.lane.b32.xlu0 %v531, 8
  %v743 = vpop.permute.xlu0 %742
  %776 = vrot.lane.b32.xlu0 %v375, 12
  %v777 = vpop.permute.xlu0 %776
  %778 = vrot.lane.b32.xlu0 %v376, 12
  %v779 = vpop.permute.xlu0 %778
  %780 = vrot.lane.b32.xlu0 %v377, 12
  %v781 = vpop.permute.xlu0 %780
  %782 = vrot.lane.b32.xlu0 %v378, 12
  %v783 = vpop.permute.xlu0 %782
  %784 = vrot.lane.b32.xlu0 %v379, 12
  %v785 = vpop.permute.xlu0 %784
  %786 = vrot.lane.b32.xlu0 %v380, 12
  %v787 = vpop.permute.xlu0 %786
  %788 = vrot.lane.b32.xlu0 %v381, 12
  %v789 = vpop.permute.xlu0 %788
  %790 = vrot.lane.b32.xlu0 %v382, 12
  %v791 = vpop.permute.xlu0 %790
  %792 = vrot.lane.b32.xlu0 %v383, 12
  %v793 = vpop.permute.xlu0 %792
  %794 = vrot.lane.b32.xlu0 %v384, 12
  %v795 = vpop.permute.xlu0 %794
  %796 = vrot.lane.b32.xlu0 %v385, 12
  %v797 = vpop.permute.xlu0 %796
  %798 = vrot.lane.b32.xlu0 %v386, 12
  %v799 = vpop.permute.xlu0 %798
  %800 = vrot.lane.b32.xlu0 %v387, 12
  %v801 = vpop.permute.xlu0 %800
  %802 = vrot.lane.b32.xlu0 %v388, 12
  %v803 = vpop.permute.xlu0 %802
  %804 = vrot.lane.b32.xlu0 %v389, 12
  %v805 = vpop.permute.xlu0 %804
  %806 = vrot.lane.b32.xlu0 %v548, 12
  %v807 = vpop.permute.xlu0 %806
  %808 = vrot.lane.b32.xlu0 %v390, 12
  %v809 = vpop.permute.xlu0 %808
  %810 = vrot.lane.b32.xlu0 %v391, 12
  %v811 = vpop.permute.xlu0 %810
  %812 = vrot.lane.b32.xlu0 %v392, 12
  %v813 = vpop.permute.xlu0 %812
  %814 = vrot.lane.b32.xlu0 %v393, 12
  %v815 = vpop.permute.xlu0 %814
  %816 = vrot.lane.b32.xlu0 %v394, 12
  %v817 = vpop.permute.xlu0 %816
  %818 = vrot.lane.b32.xlu0 %v395, 12
  %v819 = vpop.permute.xlu0 %818
  %820 = vrot.lane.b32.xlu0 %v396, 12
  %v821 = vpop.permute.xlu0 %820
  %822 = vrot.lane.b32.xlu0 %v397, 12
  %v823 = vpop.permute.xlu0 %822
  %824 = vrot.lane.b32.xlu0 %v398, 12
  %v825 = vpop.permute.xlu0 %824
  %826 = vrot.lane.b32.xlu0 %v399, 12
  %v827 = vpop.permute.xlu0 %826
  %828 = vrot.lane.b32.xlu0 %v400, 12
  %v829 = vpop.permute.xlu0 %828
  %830 = vrot.lane.b32.xlu0 %v401, 12
  %v831 = vpop.permute.xlu0 %830
  %832 = vrot.lane.b32.xlu0 %v402, 12
  %v833 = vpop.permute.xlu0 %832
  %834 = vrot.lane.b32.xlu0 %v403, 12
  %v835 = vpop.permute.xlu0 %834
  %836 = vrot.lane.b32.xlu0 %v404, 12
  %v837 = vpop.permute.xlu0 %836
  %838 = vrot.lane.b32.xlu0 %v549, 12
  %v839 = vpop.permute.xlu0 %838
  %842 = vrot.lane.b32.xlu0 %v91, 16
  %v843 = vpop.permute.xlu0 %842
  %844 = vrot.lane.b32.xlu0 %v92, 16
  %v845 = vpop.permute.xlu0 %844
  %846 = vrot.lane.b32.xlu0 %v93, 16
  %v847 = vpop.permute.xlu0 %846
  %848 = vrot.lane.b32.xlu0 %v94, 16
  %v849 = vpop.permute.xlu0 %848
  %850 = vrot.lane.b32.xlu0 %v95, 16
  %v851 = vpop.permute.xlu0 %850
  %852 = vrot.lane.b32.xlu0 %v96, 16
  %v853 = vpop.permute.xlu0 %852
  %854 = vrot.lane.b32.xlu0 %v97, 16
  %v855 = vpop.permute.xlu0 %854
  %856 = vrot.lane.b32.xlu0 %v98, 16
  %v857 = vpop.permute.xlu0 %856
  %858 = vrot.lane.b32.xlu0 %v99, 16
  %v859 = vpop.permute.xlu0 %858
  %860 = vrot.lane.b32.xlu0 %v100, 16
  %v861 = vpop.permute.xlu0 %860
  %862 = vrot.lane.b32.xlu0 %v101, 16
  %v863 = vpop.permute.xlu0 %862
  %864 = vrot.lane.b32.xlu0 %v102, 16
  %v865 = vpop.permute.xlu0 %864
  %866 = vrot.lane.b32.xlu0 %v103, 16
  %v867 = vpop.permute.xlu0 %866
  %868 = vrot.lane.b32.xlu0 %v104, 16
  %v869 = vpop.permute.xlu0 %868
  %870 = vrot.lane.b32.xlu0 %v105, 16
  %v871 = vpop.permute.xlu0 %870
  %872 = vrot.lane.b32.xlu0 %v106, 16
  %v873 = vpop.permute.xlu0 %872
  %874 = vrot.lane.b32.xlu0 %v107, 16
  %v875 = vpop.permute.xlu0 %874
  %876 = vrot.lane.b32.xlu0 %v108, 16
  %v877 = vpop.permute.xlu0 %876
  %878 = vrot.lane.b32.xlu0 %v109, 16
  %v879 = vpop.permute.xlu0 %878
  %880 = vrot.lane.b32.xlu0 %v110, 16
  %v881 = vpop.permute.xlu0 %880
  %882 = vrot.lane.b32.xlu0 %v111, 16
  %v883 = vpop.permute.xlu0 %882
  %884 = vrot.lane.b32.xlu0 %v112, 16
  %v885 = vpop.permute.xlu0 %884
  %886 = vrot.lane.b32.xlu0 %v113, 16
  %v887 = vpop.permute.xlu0 %886
  %888 = vrot.lane.b32.xlu0 %v114, 16
  %v889 = vpop.permute.xlu0 %888
  %890 = vrot.lane.b32.xlu0 %v115, 16
  %v891 = vpop.permute.xlu0 %890
  %892 = vrot.lane.b32.xlu0 %v116, 16
  %v893 = vpop.permute.xlu0 %892
  %894 = vrot.lane.b32.xlu0 %v117, 16
  %v895 = vpop.permute.xlu0 %894
  %896 = vrot.lane.b32.xlu0 %v118, 16
  %v897 = vpop.permute.xlu0 %896
  %898 = vrot.lane.b32.xlu0 %v119, 16
  %v899 = vpop.permute.xlu0 %898
  %900 = vrot.lane.b32.xlu0 %v120, 16
  %v901 = vpop.permute.xlu0 %900
  %902 = vrot.lane.b32.xlu0 %v121, 16
  %v903 = vpop.permute.xlu0 %902
  %904 = vrot.lane.b32.xlu0 %v122, 16
  %v905 = vpop.permute.xlu0 %904
  %908 = vrot.lane.b32.xlu0 %v502, 20
  %v909 = vpop.permute.xlu0 %908
  %910 = vrot.lane.b32.xlu0 %v503, 20
  %v911 = vpop.permute.xlu0 %910
  %912 = vrot.lane.b32.xlu0 %v504, 20
  %v913 = vpop.permute.xlu0 %912
  %914 = vrot.lane.b32.xlu0 %v505, 20
  %v915 = vpop.permute.xlu0 %914
  %916 = vrot.lane.b32.xlu0 %v506, 20
  %v917 = vpop.permute.xlu0 %916
  %918 = vrot.lane.b32.xlu0 %v507, 20
  %v919 = vpop.permute.xlu0 %918
  %920 = vrot.lane.b32.xlu0 %v508, 20
  %v921 = vpop.permute.xlu0 %920
  %922 = vrot.lane.b32.xlu0 %v509, 20
  %v923 = vpop.permute.xlu0 %922
  %924 = vrot.lane.b32.xlu0 %v510, 20
  %v925 = vpop.permute.xlu0 %924
  %926 = vrot.lane.b32.xlu0 %v511, 20
  %v927 = vpop.permute.xlu0 %926
  %928 = vrot.lane.b32.xlu0 %v512, 20
  %v929 = vpop.permute.xlu0 %928
  %930 = vrot.lane.b32.xlu0 %v513, 20
  %v931 = vpop.permute.xlu0 %930
  %932 = vrot.lane.b32.xlu0 %v514, 20
  %v933 = vpop.permute.xlu0 %932
  %934 = vrot.lane.b32.xlu0 %v515, 20
  %v935 = vpop.permute.xlu0 %934
  %936 = vrot.lane.b32.xlu0 %v516, 20
  %v937 = vpop.permute.xlu0 %936
  %938 = vrot.lane.b32.xlu0 %v556, 20
  %v939 = vpop.permute.xlu0 %938
  %940 = vrot.lane.b32.xlu0 %v517, 20
  %v941 = vpop.permute.xlu0 %940
  %942 = vrot.lane.b32.xlu0 %v518, 20
  %v943 = vpop.permute.xlu0 %942
  %944 = vrot.lane.b32.xlu0 %v519, 20
  %v945 = vpop.permute.xlu0 %944
  %946 = vrot.lane.b32.xlu0 %v520, 20
  %v947 = vpop.permute.xlu0 %946
  %948 = vrot.lane.b32.xlu0 %v521, 20
  %v949 = vpop.permute.xlu0 %948
  %950 = vrot.lane.b32.xlu0 %v522, 20
  %v951 = vpop.permute.xlu0 %950
  %952 = vrot.lane.b32.xlu0 %v523, 20
  %v953 = vpop.permute.xlu0 %952
  %954 = vrot.lane.b32.xlu0 %v524, 20
  %v955 = vpop.permute.xlu0 %954
  %956 = vrot.lane.b32.xlu0 %v525, 20
  %v957 = vpop.permute.xlu0 %956
  %958 = vrot.lane.b32.xlu0 %v526, 20
  %v959 = vpop.permute.xlu0 %958
  %960 = vrot.lane.b32.xlu0 %v527, 20
  %v961 = vpop.permute.xlu0 %960
  %962 = vrot.lane.b32.xlu0 %v528, 20
  %v963 = vpop.permute.xlu0 %962
  %964 = vrot.lane.b32.xlu0 %v529, 20
  %v965 = vpop.permute.xlu0 %964
  %966 = vrot.lane.b32.xlu0 %v530, 20
  %v967 = vpop.permute.xlu0 %966
  %968 = vrot.lane.b32.xlu0 %v531, 20
  %v969 = vpop.permute.xlu0 %968
  %970 = vrot.lane.b32.xlu0 %v557, 20
  %v971 = vpop.permute.xlu0 %970
  %973 = vrot.lane.b32.xlu0 %v376, 24
  %v974 = vpop.permute.xlu0 %973
  %975 = vrot.lane.b32.xlu0 %v377, 24
  %v976 = vpop.permute.xlu0 %975
  %977 = vrot.lane.b32.xlu0 %v378, 24
  %v978 = vpop.permute.xlu0 %977
  %979 = vrot.lane.b32.xlu0 %v379, 24
  %v980 = vpop.permute.xlu0 %979
  %981 = vrot.lane.b32.xlu0 %v380, 24
  %v982 = vpop.permute.xlu0 %981
  %983 = vrot.lane.b32.xlu0 %v381, 24
  %v984 = vpop.permute.xlu0 %983
  %985 = vrot.lane.b32.xlu0 %v382, 24
  %v986 = vpop.permute.xlu0 %985
  %987 = vrot.lane.b32.xlu0 %v383, 24
  %v988 = vpop.permute.xlu0 %987
  %989 = vrot.lane.b32.xlu0 %v384, 24
  %v990 = vpop.permute.xlu0 %989
  %991 = vrot.lane.b32.xlu0 %v385, 24
  %v992 = vpop.permute.xlu0 %991
  %993 = vrot.lane.b32.xlu0 %v386, 24
  %v994 = vpop.permute.xlu0 %993
  %995 = vrot.lane.b32.xlu0 %v387, 24
  %v996 = vpop.permute.xlu0 %995
  %997 = vrot.lane.b32.xlu0 %v388, 24
  %v998 = vpop.permute.xlu0 %997
  %999 = vrot.lane.b32.xlu0 %v389, 24
  %v1000 = vpop.permute.xlu0 %999
  %1001 = vrot.lane.b32.xlu0 %v548, 24
  %v1002 = vpop.permute.xlu0 %1001
  %1003 = vrot.lane.b32.xlu0 %v374, 24
  %v1004 = vpop.permute.xlu0 %1003
  %1005 = vrot.lane.b32.xlu0 %v391, 24
  %v1006 = vpop.permute.xlu0 %1005
  %1007 = vrot.lane.b32.xlu0 %v392, 24
  %v1008 = vpop.permute.xlu0 %1007
  %1009 = vrot.lane.b32.xlu0 %v393, 24
  %v1010 = vpop.permute.xlu0 %1009
  %1011 = vrot.lane.b32.xlu0 %v394, 24
  %v1012 = vpop.permute.xlu0 %1011
  %1013 = vrot.lane.b32.xlu0 %v395, 24
  %v1014 = vpop.permute.xlu0 %1013
  %1015 = vrot.lane.b32.xlu0 %v396, 24
  %v1016 = vpop.permute.xlu0 %1015
  %1017 = vrot.lane.b32.xlu0 %v397, 24
  %v1018 = vpop.permute.xlu0 %1017
  %1019 = vrot.lane.b32.xlu0 %v398, 24
  %v1020 = vpop.permute.xlu0 %1019
  %1021 = vrot.lane.b32.xlu0 %v399, 24
  %v1022 = vpop.permute.xlu0 %1021
  %1023 = vrot.lane.b32.xlu0 %v400, 24
  %v1024 = vpop.permute.xlu0 %1023
  %1025 = vrot.lane.b32.xlu0 %v401, 24
  %v1026 = vpop.permute.xlu0 %1025
  %1027 = vrot.lane.b32.xlu0 %v402, 24
  %v1028 = vpop.permute.xlu0 %1027
  %1029 = vrot.lane.b32.xlu0 %v403, 24
  %v1030 = vpop.permute.xlu0 %1029
  %1031 = vrot.lane.b32.xlu0 %v404, 24
  %v1032 = vpop.permute.xlu0 %1031
  %1033 = vrot.lane.b32.xlu0 %v549, 24
  %v1034 = vpop.permute.xlu0 %1033
  %1035 = vrot.lane.b32.xlu0 %v92, 28
  %v1036 = vpop.permute.xlu0 %1035
  %1037 = vrot.lane.b32.xlu0 %v93, 28
  %v1038 = vpop.permute.xlu0 %1037
  %1039 = vrot.lane.b32.xlu0 %v94, 28
  %v1040 = vpop.permute.xlu0 %1039
  %1041 = vrot.lane.b32.xlu0 %v95, 28
  %v1042 = vpop.permute.xlu0 %1041
  %1043 = vrot.lane.b32.xlu0 %v96, 28
  %v1044 = vpop.permute.xlu0 %1043
  %1045 = vrot.lane.b32.xlu0 %v97, 28
  %v1046 = vpop.permute.xlu0 %1045
  %1047 = vrot.lane.b32.xlu0 %v98, 28
  %v1048 = vpop.permute.xlu0 %1047
  %1049 = vrot.lane.b32.xlu0 %v99, 28
  %v1050 = vpop.permute.xlu0 %1049
  %1051 = vrot.lane.b32.xlu0 %v100, 28
  %v1052 = vpop.permute.xlu0 %1051
  %1053 = vrot.lane.b32.xlu0 %v101, 28
  %v1054 = vpop.permute.xlu0 %1053
  %1055 = vrot.lane.b32.xlu0 %v102, 28
  %v1056 = vpop.permute.xlu0 %1055
  %1057 = vrot.lane.b32.xlu0 %v103, 28
  %v1058 = vpop.permute.xlu0 %1057
  %1059 = vrot.lane.b32.xlu0 %v104, 28
  %v1060 = vpop.permute.xlu0 %1059
  %1061 = vrot.lane.b32.xlu0 %v105, 28
  %v1062 = vpop.permute.xlu0 %1061
  %1063 = vrot.lane.b32.xlu0 %v106, 28
  %v1064 = vpop.permute.xlu0 %1063
  %1065 = vrot.lane.b32.xlu0 0, 28
  %v1066 = vpop.permute.xlu0 %1065
  %1067 = vrot.lane.b32.xlu0 %v108, 28
  %v1068 = vpop.permute.xlu0 %1067
  %1069 = vrot.lane.b32.xlu0 %v109, 28
  %v1070 = vpop.permute.xlu0 %1069
  %1071 = vrot.lane.b32.xlu0 %v110, 28
  %v1072 = vpop.permute.xlu0 %1071
  %1073 = vrot.lane.b32.xlu0 %v111, 28
  %v1074 = vpop.permute.xlu0 %1073
  %1075 = vrot.lane.b32.xlu0 %v112, 28
  %v1076 = vpop.permute.xlu0 %1075
  %1077 = vrot.lane.b32.xlu0 %v113, 28
  %v1078 = vpop.permute.xlu0 %1077
  %1079 = vrot.lane.b32.xlu0 %v114, 28
  %v1080 = vpop.permute.xlu0 %1079
  %1081 = vrot.lane.b32.xlu0 %v115, 28
  %v1082 = vpop.permute.xlu0 %1081
  %1083 = vrot.lane.b32.xlu0 %v116, 28
  %v1084 = vpop.permute.xlu0 %1083
  %1085 = vrot.lane.b32.xlu0 %v117, 28
  %v1086 = vpop.permute.xlu0 %1085
  %1087 = vrot.lane.b32.xlu0 %v118, 28
  %v1088 = vpop.permute.xlu0 %1087
  %1089 = vrot.lane.b32.xlu0 %v119, 28
  %v1090 = vpop.permute.xlu0 %1089
  %1091 = vrot.lane.b32.xlu0 %v120, 28
  %v1092 = vpop.permute.xlu0 %1091
  %1093 = vrot.lane.b32.xlu0 %v121, 28
  %v1094 = vpop.permute.xlu0 %1093
  %1095 = vrot.lane.b32.xlu0 %v122, 28
  %v1096 = vpop.permute.xlu0 %1095
  %1097 = vrot.lane.b32.xlu0 %v503, 32
  %v1098 = vpop.permute.xlu0 %1097
  %1099 = vrot.lane.b32.xlu0 %v504, 32
  %v1100 = vpop.permute.xlu0 %1099
  %1101 = vrot.lane.b32.xlu0 %v505, 32
  %v1102 = vpop.permute.xlu0 %1101
  %1103 = vrot.lane.b32.xlu0 %v506, 32
  %v1104 = vpop.permute.xlu0 %1103
  %1105 = vrot.lane.b32.xlu0 %v507, 32
  %v1106 = vpop.permute.xlu0 %1105
  %1107 = vrot.lane.b32.xlu0 %v508, 32
  %v1108 = vpop.permute.xlu0 %1107
  %1109 = vrot.lane.b32.xlu0 %v509, 32
  %v1110 = vpop.permute.xlu0 %1109
  %1111 = vrot.lane.b32.xlu0 %v510, 32
  %v1112 = vpop.permute.xlu0 %1111
  %1113 = vrot.lane.b32.xlu0 %v511, 32
  %v1114 = vpop.permute.xlu0 %1113
  %1115 = vrot.lane.b32.xlu0 %v512, 32
  %v1116 = vpop.permute.xlu0 %1115
  %1117 = vrot.lane.b32.xlu0 %v513, 32
  %v1118 = vpop.permute.xlu0 %1117
  %1119 = vrot.lane.b32.xlu0 %v514, 32
  %v1120 = vpop.permute.xlu0 %1119
  %1121 = vrot.lane.b32.xlu0 %v515, 32
  %v1122 = vpop.permute.xlu0 %1121
  %1123 = vrot.lane.b32.xlu0 %v516, 32
  %v1124 = vpop.permute.xlu0 %1123
  %1125 = vrot.lane.b32.xlu0 %v556, 32
  %v1126 = vpop.permute.xlu0 %1125
  %1127 = vrot.lane.b32.xlu0 %v501, 32
  %v1128 = vpop.permute.xlu0 %1127
  %1129 = vrot.lane.b32.xlu0 %v518, 32
  %v1130 = vpop.permute.xlu0 %1129
  %1131 = vrot.lane.b32.xlu0 %v519, 32
  %v1132 = vpop.permute.xlu0 %1131
  %1133 = vrot.lane.b32.xlu0 %v520, 32
  %v1134 = vpop.permute.xlu0 %1133
  %1135 = vrot.lane.b32.xlu0 %v521, 32
  %v1136 = vpop.permute.xlu0 %1135
  %1137 = vrot.lane.b32.xlu0 %v522, 32
  %v1138 = vpop.permute.xlu0 %1137
  %1139 = vrot.lane.b32.xlu0 %v523, 32
  %v1140 = vpop.permute.xlu0 %1139
  %1141 = vrot.lane.b32.xlu0 %v524, 32
  %v1142 = vpop.permute.xlu0 %1141
  %1143 = vrot.lane.b32.xlu0 %v525, 32
  %v1144 = vpop.permute.xlu0 %1143
  %1145 = vrot.lane.b32.xlu0 %v526, 32
  %v1146 = vpop.permute.xlu0 %1145
  %1147 = vrot.lane.b32.xlu0 %v527, 32
  %v1148 = vpop.permute.xlu0 %1147
  %1149 = vrot.lane.b32.xlu0 %v528, 32
  %v1150 = vpop.permute.xlu0 %1149
  %1151 = vrot.lane.b32.xlu0 %v529, 32
  %v1152 = vpop.permute.xlu0 %1151
  %1153 = vrot.lane.b32.xlu0 %v530, 32
  %v1154 = vpop.permute.xlu0 %1153
  %1155 = vrot.lane.b32.xlu0 %v531, 32
  %v1156 = vpop.permute.xlu0 %1155
  %1157 = vrot.lane.b32.xlu0 %v557, 32
  %v1158 = vpop.permute.xlu0 %1157
  %vm1159 = vcmask 31744
  %v1162 = vsel %vm1159, %v374, %v590
  %v1165 = vsel %vm1159, %v375, %v592
  %v1168 = vsel %vm1159, %v376, %v594
  %v1171 = vsel %vm1159, %v377, %v596
  %v1174 = vsel %vm1159, %v378, %v598
  %v1177 = vsel %vm1159, %v379, %v600
  %v1180 = vsel %vm1159, %v380, %v602
  %v1183 = vsel %vm1159, %v381, %v604
  %v1186 = vsel %vm1159, %v382, %v606
  %v1189 = vsel %vm1159, %v383, %v608
  %v1192 = vsel %vm1159, %v384, %v610
  %v1195 = vsel %vm1159, %v385, %v612
  %v1198 = vsel %vm1159, %v386, %v614
  %v1201 = vsel %vm1159, %v387, %v616
  %v1204 = vsel %vm1159, %v388, %v618
  %v1207 = vsel %vm1159, %v389, %v620
  %v1210 = vsel %vm1159, %v390, %v622
  %v1213 = vsel %vm1159, %v391, %v624
  %v1216 = vsel %vm1159, %v392, %v626
  %v1219 = vsel %vm1159, %v393, %v628
  %v1222 = vsel %vm1159, %v394, %v630
  %v1225 = vsel %vm1159, %v395, %v632
  %v1228 = vsel %vm1159, %v396, %v634
  %v1231 = vsel %vm1159, %v397, %v636
  %v1234 = vsel %vm1159, %v398, %v638
  %v1237 = vsel %vm1159, %v399, %v640
  %v1240 = vsel %vm1159, %v400, %v642
  %v1243 = vsel %vm1159, %v401, %v644
  %v1246 = vsel %vm1159, %v402, %v646
  %v1249 = vsel %vm1159, %v403, %v648
  %v1252 = vsel %vm1159, %v404, %v650
  %vm1253 = vcmask 64512
  %v1255 = vsel %vm1253, %v1162, %v683
  %v1257 = vsel %vm1253, %v1165, %v685
  %v1259 = vsel %vm1253, %v1168, %v687
  %v1261 = vsel %vm1253, %v1171, %v689
  %v1263 = vsel %vm1253, %v1174, %v691
  %v1265 = vsel %vm1253, %v1177, %v693
  %v1267 = vsel %vm1253, %v1180, %v695
  %v1269 = vsel %vm1253, %v1183, %v697
  %v1271 = vsel %vm1253, %v1186, %v699
  %v1273 = vsel %vm1253, %v1189, %v701
  %v1275 = vsel %vm1253, %v1192, %v703
  %v1277 = vsel %vm1253, %v1195, %v705
  %v1279 = vsel %vm1253, %v1198, %v707
  %v1281 = vsel %vm1253, %v1201, %v709
  %v1283 = vsel %vm1253, %v1204, %v711
  %v1285 = vsel %vm1253, %v1207, %v713
  %v1287 = vsel %vm1253, %v1210, %v715
  %v1289 = vsel %vm1253, %v1213, %v717
  %v1291 = vsel %vm1253, %v1216, %v719
  %v1293 = vsel %vm1253, %v1219, %v721
  %v1295 = vsel %vm1253, %v1222, %v723
  %v1297 = vsel %vm1253, %v1225, %v725
  %v1299 = vsel %vm1253, %v1228, %v727
  %v1301 = vsel %vm1253, %v1231, %v729
  %v1303 = vsel %vm1253, %v1234, %v731
  %v1305 = vsel %vm1253, %v1237, %v733
  %v1307 = vsel %vm1253, %v1240, %v735
  %v1309 = vsel %vm1253, %v1243, %v737
  %v1311 = vsel %vm1253, %v1246, %v739
  %v1313 = vsel %vm1253, %v1249, %v741
  %v1315 = vsel %vm1253, %v1252, %v743
  %vm1316 = vcmask 97280
  %v1318 = vsel %vm1316, %v1255, %v777
  %v1320 = vsel %vm1316, %v1257, %v779
  %v1322 = vsel %vm1316, %v1259, %v781
  %v1324 = vsel %vm1316, %v1261, %v783
  %v1326 = vsel %vm1316, %v1263, %v785
  %v1328 = vsel %vm1316, %v1265, %v787
  %v1330 = vsel %vm1316, %v1267, %v789
  %v1332 = vsel %vm1316, %v1269, %v791
  %v1334 = vsel %vm1316, %v1271, %v793
  %v1336 = vsel %vm1316, %v1273, %v795
  %v1338 = vsel %vm1316, %v1275, %v797
  %v1340 = vsel %vm1316, %v1277, %v799
  %v1342 = vsel %vm1316, %v1279, %v801
  %v1344 = vsel %vm1316, %v1281, %v803
  %v1346 = vsel %vm1316, %v1283, %v805
  %v1348 = vsel %vm1316, %v1285, %v807
  %v1350 = vsel %vm1316, %v1255, %v809
  %v1352 = vsel %vm1316, %v1287, %v811
  %v1354 = vsel %vm1316, %v1289, %v813
  %v1356 = vsel %vm1316, %v1291, %v815
  %v1358 = vsel %vm1316, %v1293, %v817
  %v1360 = vsel %vm1316, %v1295, %v819
  %v1362 = vsel %vm1316, %v1297, %v821
  %v1364 = vsel %vm1316, %v1299, %v823
  %v1366 = vsel %vm1316, %v1301, %v825
  %v1368 = vsel %vm1316, %v1303, %v827
  %v1370 = vsel %vm1316, %v1305, %v829
  %v1372 = vsel %vm1316, %v1307, %v831
  %v1374 = vsel %vm1316, %v1309, %v833
  %v1376 = vsel %vm1316, %v1311, %v835
  %v1378 = vsel %vm1316, %v1313, %v837
  %v1380 = vsel %vm1316, %v1315, %v839
  %vm1381 = vcmask 130048
  %v1383 = vsel %vm1381, %v1318, %v843
  %v1385 = vsel %vm1381, %v1320, %v845
  %v1387 = vsel %vm1381, %v1322, %v847
  %v1389 = vsel %vm1381, %v1324, %v849
  %v1391 = vsel %vm1381, %v1326, %v851
  %v1393 = vsel %vm1381, %v1328, %v853
  %v1395 = vsel %vm1381, %v1330, %v855
  %v1397 = vsel %vm1381, %v1332, %v857
  %v1399 = vsel %vm1381, %v1334, %v859
  %v1401 = vsel %vm1381, %v1336, %v861
  %v1403 = vsel %vm1381, %v1338, %v863
  %v1405 = vsel %vm1381, %v1340, %v865
  %v1407 = vsel %vm1381, %v1342, %v867
  %v1409 = vsel %vm1381, %v1344, %v869
  %v1411 = vsel %vm1381, %v1346, %v871
  %v1413 = vsel %vm1381, %v1348, %v873
  %v1415 = vsel %vm1381, %v1350, %v875
  %v1417 = vsel %vm1381, %v1352, %v877
  %v1419 = vsel %vm1381, %v1354, %v879
  %v1421 = vsel %vm1381, %v1356, %v881
  %v1423 = vsel %vm1381, %v1358, %v883
  %v1425 = vsel %vm1381, %v1360, %v885
  %v1427 = vsel %vm1381, %v1362, %v887
  %v1429 = vsel %vm1381, %v1364, %v889
  %v1431 = vsel %vm1381, %v1366, %v891
  %v1433 = vsel %vm1381, %v1368, %v893
  %v1435 = vsel %vm1381, %v1370, %v895
  %v1437 = vsel %vm1381, %v1372, %v897
  %v1439 = vsel %vm1381, %v1374, %v899
  %v1441 = vsel %vm1381, %v1376, %v901
  %v1443 = vsel %vm1381, %v1378, %v903
  %v1445 = vsel %vm1381, %v1380, %v905
  %vm1446 = vcmask 162816
  %v1448 = vsel %vm1446, %v1383, %v909
  %v1450 = vsel %vm1446, %v1385, %v911
  %v1452 = vsel %vm1446, %v1387, %v913
  %v1454 = vsel %vm1446, %v1389, %v915
  %v1456 = vsel %vm1446, %v1391, %v917
  %v1458 = vsel %vm1446, %v1393, %v919
  %v1460 = vsel %vm1446, %v1395, %v921
  %v1462 = vsel %vm1446, %v1397, %v923
  %v1464 = vsel %vm1446, %v1399, %v925
  %v1466 = vsel %vm1446, %v1401, %v927
  %v1468 = vsel %vm1446, %v1403, %v929
  %v1470 = vsel %vm1446, %v1405, %v931
  %v1472 = vsel %vm1446, %v1407, %v933
  %v1474 = vsel %vm1446, %v1409, %v935
  %v1476 = vsel %vm1446, %v1411, %v937
  %v1478 = vsel %vm1446, %v1413, %v939
  %v1480 = vsel %vm1446, %v1415, %v941
  %v1482 = vsel %vm1446, %v1417, %v943
  %v1484 = vsel %vm1446, %v1419, %v945
  %v1486 = vsel %vm1446, %v1421, %v947
  %v1488 = vsel %vm1446, %v1423, %v949
  %v1490 = vsel %vm1446, %v1425, %v951
  %v1492 = vsel %vm1446, %v1427, %v953
  %v1494 = vsel %vm1446, %v1429, %v955
  %v1496 = vsel %vm1446, %v1431, %v957
  %v1498 = vsel %vm1446, %v1433, %v959
  %v1500 = vsel %vm1446, %v1435, %v961
  %v1502 = vsel %vm1446, %v1437, %v963
  %v1504 = vsel %vm1446, %v1439, %v965
  %v1506 = vsel %vm1446, %v1441, %v967
  %v1508 = vsel %vm1446, %v1443, %v969
  %v1510 = vsel %vm1446, %v1445, %v971
  %vm1511 = vcmask 195584
  %v1513 = vsel %vm1511, %v1448, %v974
  %v1515 = vsel %vm1511, %v1450, %v976
  %v1517 = vsel %vm1511, %v1452, %v978
  %v1519 = vsel %vm1511, %v1454, %v980
  %v1521 = vsel %vm1511, %v1456, %v982
  %v1523 = vsel %vm1511, %v1458, %v984
  %v1525 = vsel %vm1511, %v1460, %v986
  %v1527 = vsel %vm1511, %v1462, %v988
  %v1529 = vsel %vm1511, %v1464, %v990
  %v1531 = vsel %vm1511, %v1466, %v992
  %v1533 = vsel %vm1511, %v1468, %v994
  %v1535 = vsel %vm1511, %v1470, %v996
  %v1537 = vsel %vm1511, %v1472, %v998
  %v1539 = vsel %vm1511, %v1474, %v1000
  %v1541 = vsel %vm1511, %v1476, %v1002
  %v1543 = vsel %vm1511, %v1478, %v1004
  %v1545 = vsel %vm1511, %v1480, %v1006
  %v1547 = vsel %vm1511, %v1482, %v1008
  %v1549 = vsel %vm1511, %v1484, %v1010
  %v1551 = vsel %vm1511, %v1486, %v1012
  %v1553 = vsel %vm1511, %v1488, %v1014
  %v1555 = vsel %vm1511, %v1490, %v1016
  %v1557 = vsel %vm1511, %v1492, %v1018
  %v1559 = vsel %vm1511, %v1494, %v1020
  %v1561 = vsel %vm1511, %v1496, %v1022
  %v1563 = vsel %vm1511, %v1498, %v1024
  %v1565 = vsel %vm1511, %v1500, %v1026
  %v1567 = vsel %vm1511, %v1502, %v1028
  %v1569 = vsel %vm1511, %v1504, %v1030
  %v1571 = vsel %vm1511, %v1506, %v1032
  %v1573 = vsel %vm1511, %v1508, %v1034
  %v1574 = vsel %vm1511, %v1510, %v1004
  %vm1575 = vcmask 228352
  %v1577 = vsel %vm1575, %v1513, %v1036
  %v1579 = vsel %vm1575, %v1515, %v1038
  %v1581 = vsel %vm1575, %v1517, %v1040
  %v1583 = vsel %vm1575, %v1519, %v1042
  %v1585 = vsel %vm1575, %v1521, %v1044
  %v1587 = vsel %vm1575, %v1523, %v1046
  %v1589 = vsel %vm1575, %v1525, %v1048
  %v1591 = vsel %vm1575, %v1527, %v1050
  %v1593 = vsel %vm1575, %v1529, %v1052
  %v1595 = vsel %vm1575, %v1531, %v1054
  %v1597 = vsel %vm1575, %v1533, %v1056
  %v1599 = vsel %vm1575, %v1535, %v1058
  %v1601 = vsel %vm1575, %v1537, %v1060
  %v1603 = vsel %vm1575, %v1539, %v1062
  %v1605 = vsel %vm1575, %v1541, %v1064
  %v1607 = vsel %vm1575, %v1543, %v1066
  %v1609 = vsel %vm1575, %v1545, %v1068
  %v1611 = vsel %vm1575, %v1547, %v1070
  %v1613 = vsel %vm1575, %v1549, %v1072
  %v1615 = vsel %vm1575, %v1551, %v1074
  %v1617 = vsel %vm1575, %v1553, %v1076
  %v1619 = vsel %vm1575, %v1555, %v1078
  %v1621 = vsel %vm1575, %v1557, %v1080
  %v1623 = vsel %vm1575, %v1559, %v1082
  %v1625 = vsel %vm1575, %v1561, %v1084
  %v1627 = vsel %vm1575, %v1563, %v1086
  %v1629 = vsel %vm1575, %v1565, %v1088
  %v1631 = vsel %vm1575, %v1567, %v1090
  %v1633 = vsel %vm1575, %v1569, %v1092
  %v1635 = vsel %vm1575, %v1571, %v1094
  %v1637 = vsel %vm1575, %v1573, %v1096
  %v1638 = vsel %vm1575, %v1574, %v1066
  %vm1639 = vcmask 261120
  %v1641 = vsel %vm1639, %v1577, %v1098
  %v1643 = vsel %vm1639, %v1579, %v1100
  %v1645 = vsel %vm1639, %v1581, %v1102
  %v1647 = vsel %vm1639, %v1583, %v1104
  %v1649 = vsel %vm1639, %v1585, %v1106
  %v1651 = vsel %vm1639, %v1587, %v1108
  %v1653 = vsel %vm1639, %v1589, %v1110
  %v1655 = vsel %vm1639, %v1591, %v1112
  %v1657 = vsel %vm1639, %v1593, %v1114
  %v1659 = vsel %vm1639, %v1595, %v1116
  %v1661 = vsel %vm1639, %v1597, %v1118
  %v1663 = vsel %vm1639, %v1599, %v1120
  %v1665 = vsel %vm1639, %v1601, %v1122
  %v1667 = vsel %vm1639, %v1603, %v1124
  %v1669 = vsel %vm1639, %v1605, %v1126
  %v1671 = vsel %vm1639, %v1607, %v1128
  %v1673 = vsel %vm1639, %v1609, %v1130
  %v1675 = vsel %vm1639, %v1611, %v1132
  %v1677 = vsel %vm1639, %v1613, %v1134
  %v1679 = vsel %vm1639, %v1615, %v1136
  %v1681 = vsel %vm1639, %v1617, %v1138
  %v1683 = vsel %vm1639, %v1619, %v1140
  %v1685 = vsel %vm1639, %v1621, %v1142
  %v1687 = vsel %vm1639, %v1623, %v1144
  %v1689 = vsel %vm1639, %v1625, %v1146
  %v1691 = vsel %vm1639, %v1627, %v1148
  %v1693 = vsel %vm1639, %v1629, %v1150
  %v1695 = vsel %vm1639, %v1631, %v1152
  %v1697 = vsel %vm1639, %v1633, %v1154
  %v1699 = vsel %vm1639, %v1635, %v1156
  %v1701 = vsel %vm1639, %v1637, %v1158
  %v1702 = vsel %vm1639, %v1638, %v1128
  %v1703 = vld [vmem:[%s1] sm:$0xf]
  %v1704 = vld [vmem:[%s1 + $0x4] sm:$0xf]
  %v1705 = vld [vmem:[%s1 + $0x8] sm:$0xf]
  %v1706 = vld [vmem:[%s1 + $0xc] sm:$0xf]
  %v1707 = vld [vmem:[%s1 + $0x10] sm:$0x3]
  %v1713 = vunpack.c.l.b16 %v1703
  %v1714 = vunpack.c.l.b16 %v1704
  %v1715 = vunpack.c.l.b16 %v1705
  %v1716 = vunpack.c.l.b16 %v1706
  %v1717 = vunpack.c.l.b16 %v1707
  %v1718 = vpack.c.b16 %v1714, %v1713
  %v1719 = vpack.c.b16 %v1716, %v1715
  %v1720 = vpack.c.b16 %v1717, %v1717
  %vm1723 = vcmask 293888
  %v1724 = vsel %vm1723, %v1641, 0
  %v1726 = vsel %vm1723, %v1643, 0
  %v1728 = vsel %vm1723, %v1645, 0
  %v1730 = vsel %vm1723, %v1647, 0
  %v1732 = vsel %vm1723, %v1649, 0
  %v1734 = vsel %vm1723, %v1651, 0
  %v1736 = vsel %vm1723, %v1653, 0
  %v1738 = vsel %vm1723, %v1655, 0
  %v1740 = vsel %vm1723, %v1657, 0
  %v1742 = vsel %vm1723, %v1659, 0
  %v1744 = vsel %vm1723, %v1661, 0
  %v1746 = vsel %vm1723, %v1663, 0
  %v1748 = vsel %vm1723, %v1665, 0
  %v1750 = vsel %vm1723, %v1667, 0
  %v1752 = vsel %vm1723, %v1669, 0
  %v1754 = vsel %vm1723, %v1671, 0
  %v1756 = vsel %vm1723, %v1673, 0
  %v1758 = vsel %vm1723, %v1675, 0
  %v1760 = vsel %vm1723, %v1677, 0
  %v1762 = vsel %vm1723, %v1679, 0
  %v1764 = vsel %vm1723, %v1681, 0
  %v1766 = vsel %vm1723, %v1683, 0
  %v1768 = vsel %vm1723, %v1685, 0
  %v1770 = vsel %vm1723, %v1687, 0
  %v1772 = vsel %vm1723, %v1689, 0
  %v1774 = vsel %vm1723, %v1691, 0
  %v1776 = vsel %vm1723, %v1693, 0
  %v1778 = vsel %vm1723, %v1695, 0
  %v1780 = vsel %vm1723, %v1697, 0
  %v1782 = vsel %vm1723, %v1699, 0
  %v1784 = vsel %vm1723, %v1701, 0
  %v1786 = vsel %vm1723, %v1702, 0
  %vm1788 = vcmask 1041408
  %v1790 = vsel %vm1788, %v1720, 0
  %1792 = vmatprep.subr.bf16.mxu0 0
  %1793 = vmatpush1.bf16.msra.mxu0 %v1718
  %1794 = vmatprep.subr.bf16.mxu0 0
  %1795 = vmatpush1.bf16.msra.mxu0 %v1719
  %1796 = vmatprep.subr.bf16.mxu0 0
  %1797 = vmatpush1.bf16.msra.mxu0 %v1790
  %1798 = vmatprep.subr.bf16.mxu0 0
  %1799 = vmatpush1.bf16.msra.mxu0 0
  %1800 = vmatprep.subr.bf16.mxu0 0
  %1801 = vmatpush1.bf16.msra.mxu0 0
  %1802 = vmatprep.subr.bf16.mxu0 0
  %1803 = vmatpush1.bf16.msra.mxu0 0
  %1804 = vmatprep.subr.bf16.mxu0 0
  %1805 = vmatpush1.bf16.msra.mxu0 0
  %1806 = vmatprep.subr.bf16.mxu0 0
  %1807 = vmatpush1.bf16.msra.mxu0 0
  %1808 = vmatprep.subr.bf16.mxu0 0
  %1809 = vmatpush1.bf16.msra.mxu0 0
  %1810 = vmatprep.subr.bf16.mxu0 0
  %1811 = vmatpush1.bf16.msra.mxu0 0
  %1812 = vmatprep.subr.bf16.mxu0 0
  %1813 = vmatpush1.bf16.msra.mxu0 0
  %1814 = vmatprep.subr.bf16.mxu0 0
  %1815 = vmatpush1.bf16.msra.mxu0 0
  %1816 = vmatprep.subr.bf16.mxu0 0
  %1817 = vmatpush1.bf16.msra.mxu0 0
  %1818 = vmatprep.subr.bf16.mxu0 0
  %1819 = vmatpush1.bf16.msra.mxu0 0
  %1820 = vmatprep.subr.bf16.mxu0 0
  %1821 = vmatpush1.bf16.msra.mxu0 0
  %1822 = vmatprep.subr.bf16.mxu0 0
  %1823 = vmatpush1.bf16.msra.mxu0 0
  %1824 = vmatprep.mubr.bf16.mxu0 0
  %1825 = vmatmul.mubr.bf16.gmra.mrb[0].mxu0 %v1724
  %v1826 = vpop.f32.mrb[0].mxu0
  %v1827 = vadd.f32 0.0, %v1826
  %v1828 = vpop.f32.mrb[0].mxu0
  %v1829 = vpop.f32.mrb[0].mxu0
  %v1830 = vadd.f32 0.0, %v1829
  %v1831 = vpop.f32.mrb[0].mxu0
  %1832 = vmatprep.mubr.bf16.mxu0 0
  %1833 = vmatmul.mubr.bf16.gmra.mrb[0].mxu0 %v1726
  %v1834 = vpop.f32.mrb[0].mxu0
  %v1835 = vadd.f32 0.0, %v1834
  %v1836 = vpop.f32.mrb[0].mxu0
  %v1837 = vpop.f32.mrb[0].mxu0
  %v1838 = vadd.f32 0.0, %v1837
  %v1839 = vpop.f32.mrb[0].mxu0
  %1840 = vmatprep.mubr.bf16.mxu0 0
  %1841 = vmatmul.mubr.bf16.gmra.mrb[0].mxu0 %v1728
  %v1842 = vpop.f32.mrb[0].mxu0
  %v1843 = vadd.f32 0.0, %v1842
  %v1844 = vpop.f32.mrb[0].mxu0
  %v1845 = vpop.f32.mrb[0].mxu0
  %v1846 = vadd.f32 0.0, %v1845
  %v1847 = vpop.f32.mrb[0].mxu0
  %1848 = vmatprep.mubr.bf16.mxu0 0
  %1849 = vmatmul.mubr.bf16.gmra.mrb[0].mxu0 %v1730
  %v1850 = vpop.f32.mrb[0].mxu0
  %v1851 = vadd.f32 0.0, %v1850
  %v1852 = vpop.f32.mrb[0].mxu0
  %v1853 = vpop.f32.mrb[0].mxu0
  %v1854 = vadd.f32 0.0, %v1853
  %v1855 = vpop.f32.mrb[0].mxu0
  %1856 = vmatprep.mubr.bf16.mxu0 0
  %1857 = vmatmul.mubr.bf16.gmra.mrb[0].mxu0 %v1732
  %v1858 = vpop.f32.mrb[0].mxu0
  %v1859 = vadd.f32 0.0, %v1858
  %v1860 = vpop.f32.mrb[0].mxu0
  %v1861 = vpop.f32.mrb[0].mxu0
  %v1862 = vadd.f32 0.0, %v1861
  %v1863 = vpop.f32.mrb[0].mxu0
  %1864 = vmatprep.mubr.bf16.mxu0 0
  %1865 = vmatmul.mubr.bf16.gmra.mrb[0].mxu0 %v1734
  %v1866 = vpop.f32.mrb[0].mxu0
  %v1867 = vadd.f32 0.0, %v1866
  %v1868 = vpop.f32.mrb[0].mxu0
  %v1869 = vpop.f32.mrb[0].mxu0
  %v1870 = vadd.f32 0.0, %v1869
  %v1871 = vpop.f32.mrb[0].mxu0
  %1872 = vmatprep.mubr.bf16.mxu0 0
  %1873 = vmatmul.mubr.bf16.gmra.mrb[0].mxu0 %v1736
  %v1874 = vpop.f32.mrb[0].mxu0
  %v1875 = vadd.f32 0.0, %v1874
  %v1876 = vpop.f32.mrb[0].mxu0
  %v1877 = vpop.f32.mrb[0].mxu0
  %v1878 = vadd.f32 0.0, %v1877
  %v1879 = vpop.f32.mrb[0].mxu0
  %1880 = vmatprep.mubr.bf16.mxu0 0
  %1881 = vmatmul.mubr.bf16.gmra.mrb[0].mxu0 %v1738
  %v1882 = vpop.f32.mrb[0].mxu0
  %v1883 = vadd.f32 0.0, %v1882
  %v1884 = vpop.f32.mrb[0].mxu0
  %v1885 = vpop.f32.mrb[0].mxu0
  %v1886 = vadd.f32 0.0, %v1885
  %v1887 = vpop.f32.mrb[0].mxu0
  %1888 = vmatprep.mubr.bf16.mxu0 0
  %1889 = vmatmul.mubr.bf16.gmra.mrb[0].mxu0 %v1740
  %v1890 = vpop.f32.mrb[0].mxu0
  %v1891 = vadd.f32 0.0, %v1890
  %v1892 = vpop.f32.mrb[0].mxu0
  %v1893 = vpop.f32.mrb[0].mxu0
  %v1894 = vadd.f32 0.0, %v1893
  %v1895 = vpop.f32.mrb[0].mxu0
  %1896 = vmatprep.mubr.bf16.mxu0 0
  %1897 = vmatmul.mubr.bf16.gmra.mrb[0].mxu0 %v1742
  %v1898 = vpop.f32.mrb[0].mxu0
  %v1899 = vadd.f32 0.0, %v1898
  %v1900 = vpop.f32.mrb[0].mxu0
  %v1901 = vpop.f32.mrb[0].mxu0
  %v1902 = vadd.f32 0.0, %v1901
  %v1903 = vpop.f32.mrb[0].mxu0
  %1904 = vmatprep.mubr.bf16.mxu0 0
  %1905 = vmatmul.mubr.bf16.gmra.mrb[0].mxu0 %v1744
  %v1906 = vpop.f32.mrb[0].mxu0
  %v1907 = vadd.f32 0.0, %v1906
  %v1908 = vpop.f32.mrb[0].mxu0
  %v1909 = vpop.f32.mrb[0].mxu0
  %v1910 = vadd.f32 0.0, %v1909
  %v1911 = vpop.f32.mrb[0].mxu0
  %1912 = vmatprep.mubr.bf16.mxu0 0
  %1913 = vmatmul.mubr.bf16.gmra.mrb[0].mxu0 %v1746
  %v1914 = vpop.f32.mrb[0].mxu0
  %v1915 = vadd.f32 0.0, %v1914
  %v1916 = vpop.f32.mrb[0].mxu0
  %v1917 = vpop.f32.mrb[0].mxu0
  %v1918 = vadd.f32 0.0, %v1917
  %v1919 = vpop.f32.mrb[0].mxu0
  %1920 = vmatprep.mubr.bf16.mxu0 0
  %1921 = vmatmul.mubr.bf16.gmra.mrb[0].mxu0 %v1748
  %v1922 = vpop.f32.mrb[0].mxu0
  %v1923 = vadd.f32 0.0, %v1922
  %v1924 = vpop.f32.mrb[0].mxu0
  %v1925 = vpop.f32.mrb[0].mxu0
  %v1926 = vadd.f32 0.0, %v1925
  %v1927 = vpop.f32.mrb[0].mxu0
  %1928 = vmatprep.mubr.bf16.mxu0 0
  %1929 = vmatmul.mubr.bf16.gmra.mrb[0].mxu0 %v1750
  %v1930 = vpop.f32.mrb[0].mxu0
  %v1931 = vadd.f32 0.0, %v1930
  %v1932 = vpop.f32.mrb[0].mxu0
  %v1933 = vpop.f32.mrb[0].mxu0
  %v1934 = vadd.f32 0.0, %v1933
  %v1935 = vpop.f32.mrb[0].mxu0
  %1936 = vmatprep.mubr.bf16.mxu0 0
  %1937 = vmatmul.mubr.bf16.gmra.mrb[0].mxu0 %v1752
  %v1938 = vpop.f32.mrb[0].mxu0
  %v1939 = vadd.f32 0.0, %v1938
  %v1940 = vpop.f32.mrb[0].mxu0
  %v1941 = vpop.f32.mrb[0].mxu0
  %v1942 = vadd.f32 0.0, %v1941
  %v1943 = vpop.f32.mrb[0].mxu0
  %1944 = vmatprep.mubr.bf16.mxu0 0
  %1945 = vmatmul.mubr.bf16.gmra.mrb[0].mxu0 %v1754
  %v1946 = vpop.f32.mrb[0].mxu0
  %v1947 = vadd.f32 0.0, %v1946
  %v1948 = vpop.f32.mrb[0].mxu0
  %v1949 = vpop.f32.mrb[0].mxu0
  %v1950 = vadd.f32 0.0, %v1949
  %v1951 = vpop.f32.mrb[0].mxu0
  %1952 = vmatprep.mubr.bf16.mxu0 0
  %1953 = vmatmul.mubr.bf16.gmra.mrb[0].mxu0 %v1756
  %v1954 = vpop.f32.mrb[0].mxu0
  %v1955 = vadd.f32 0.0, %v1954
  %v1956 = vpop.f32.mrb[0].mxu0
  %v1957 = vpop.f32.mrb[0].mxu0
  %v1958 = vadd.f32 0.0, %v1957
  %v1959 = vpop.f32.mrb[0].mxu0
  %1960 = vmatprep.mubr.bf16.mxu0 0
  %1961 = vmatmul.mubr.bf16.gmra.mrb[0].mxu0 %v1758
  %v1962 = vpop.f32.mrb[0].mxu0
  %v1963 = vadd.f32 0.0, %v1962
  %v1964 = vpop.f32.mrb[0].mxu0
  %v1965 = vpop.f32.mrb[0].mxu0
  %v1966 = vadd.f32 0.0, %v1965
  %v1967 = vpop.f32.mrb[0].mxu0
  %1968 = vmatprep.mubr.bf16.mxu0 0
  %1969 = vmatmul.mubr.bf16.gmra.mrb[0].mxu0 %v1760
  %v1970 = vpop.f32.mrb[0].mxu0
  %v1971 = vadd.f32 0.0, %v1970
  %v1972 = vpop.f32.mrb[0].mxu0
  %v1973 = vpop.f32.mrb[0].mxu0
  %v1974 = vadd.f32 0.0, %v1973
  %v1975 = vpop.f32.mrb[0].mxu0
  %1976 = vmatprep.mubr.bf16.mxu0 0
  %1977 = vmatmul.mubr.bf16.gmra.mrb[0].mxu0 %v1762
  %v1978 = vpop.f32.mrb[0].mxu0
  %v1979 = vadd.f32 0.0, %v1978
  %v1980 = vpop.f32.mrb[0].mxu0
  %v1981 = vpop.f32.mrb[0].mxu0
  %v1982 = vadd.f32 0.0, %v1981
  %v1983 = vpop.f32.mrb[0].mxu0
  %1984 = vmatprep.mubr.bf16.mxu0 0
  %1985 = vmatmul.mubr.bf16.gmra.mrb[0].mxu0 %v1764
  %v1986 = vpop.f32.mrb[0].mxu0
  %v1987 = vadd.f32 0.0, %v1986
  %v1988 = vpop.f32.mrb[0].mxu0
  %v1989 = vpop.f32.mrb[0].mxu0
  %v1990 = vadd.f32 0.0, %v1989
  %v1991 = vpop.f32.mrb[0].mxu0
  %1992 = vmatprep.mubr.bf16.mxu0 0
  %1993 = vmatmul.mubr.bf16.gmra.mrb[0].mxu0 %v1766
  %v1994 = vpop.f32.mrb[0].mxu0
  %v1995 = vadd.f32 0.0, %v1994
  %v1996 = vpop.f32.mrb[0].mxu0
  %v1997 = vpop.f32.mrb[0].mxu0
  %v1998 = vadd.f32 0.0, %v1997
  %v1999 = vpop.f32.mrb[0].mxu0
  %2000 = vmatprep.mubr.bf16.mxu0 0
  %2001 = vmatmul.mubr.bf16.gmra.mrb[0].mxu0 %v1768
  %v2002 = vpop.f32.mrb[0].mxu0
  %v2003 = vadd.f32 0.0, %v2002
  %v2004 = vpop.f32.mrb[0].mxu0
  %v2005 = vpop.f32.mrb[0].mxu0
  %v2006 = vadd.f32 0.0, %v2005
  %v2007 = vpop.f32.mrb[0].mxu0
  %2008 = vmatprep.mubr.bf16.mxu0 0
  %2009 = vmatmul.mubr.bf16.gmra.mrb[0].mxu0 %v1770
  %v2010 = vpop.f32.mrb[0].mxu0
  %v2011 = vadd.f32 0.0, %v2010
  %v2012 = vpop.f32.mrb[0].mxu0
  %v2013 = vpop.f32.mrb[0].mxu0
  %v2014 = vadd.f32 0.0, %v2013
  %v2015 = vpop.f32.mrb[0].mxu0
  %2016 = vmatprep.mubr.bf16.mxu0 0
  %2017 = vmatmul.mubr.bf16.gmra.mrb[0].mxu0 %v1772
  %v2018 = vpop.f32.mrb[0].mxu0
  %v2019 = vadd.f32 0.0, %v2018
  %v2020 = vpop.f32.mrb[0].mxu0
  %v2021 = vpop.f32.mrb[0].mxu0
  %v2022 = vadd.f32 0.0, %v2021
  %v2023 = vpop.f32.mrb[0].mxu0
  %2024 = vmatprep.mubr.bf16.mxu0 0
  %2025 = vmatmul.mubr.bf16.gmra.mrb[0].mxu0 %v1774
  %v2026 = vpop.f32.mrb[0].mxu0
  %v2027 = vadd.f32 0.0, %v2026
  %v2028 = vpop.f32.mrb[0].mxu0
  %v2029 = vpop.f32.mrb[0].mxu0
  %v2030 = vadd.f32 0.0, %v2029
  %v2031 = vpop.f32.mrb[0].mxu0
  %2032 = vmatprep.mubr.bf16.mxu0 0
  %2033 = vmatmul.mubr.bf16.gmra.mrb[0].mxu0 %v1776
  %v2034 = vpop.f32.mrb[0].mxu0
  %v2035 = vadd.f32 0.0, %v2034
  %v2036 = vpop.f32.mrb[0].mxu0
  %v2037 = vpop.f32.mrb[0].mxu0
  %v2038 = vadd.f32 0.0, %v2037
  %v2039 = vpop.f32.mrb[0].mxu0
  %2040 = vmatprep.mubr.bf16.mxu0 0
  %2041 = vmatmul.mubr.bf16.gmra.mrb[0].mxu0 %v1778
  %v2042 = vpop.f32.mrb[0].mxu0
  %v2043 = vadd.f32 0.0, %v2042
  %v2044 = vpop.f32.mrb[0].mxu0
  %v2045 = vpop.f32.mrb[0].mxu0
  %v2046 = vadd.f32 0.0, %v2045
  %v2047 = vpop.f32.mrb[0].mxu0
  %2048 = vmatprep.mubr.bf16.mxu0 0
  %2049 = vmatmul.mubr.bf16.gmra.mrb[0].mxu0 %v1780
  %v2050 = vpop.f32.mrb[0].mxu0
  %v2051 = vadd.f32 0.0, %v2050
  %v2052 = vpop.f32.mrb[0].mxu0
  %v2053 = vpop.f32.mrb[0].mxu0
  %v2054 = vadd.f32 0.0, %v2053
  %v2055 = vpop.f32.mrb[0].mxu0
  %2056 = vmatprep.mubr.bf16.mxu0 0
  %2057 = vmatmul.mubr.bf16.gmra.mrb[0].mxu0 %v1782
  %v2058 = vpop.f32.mrb[0].mxu0
  %v2059 = vadd.f32 0.0, %v2058
  %v2060 = vpop.f32.mrb[0].mxu0
  %v2061 = vpop.f32.mrb[0].mxu0
  %v2062 = vadd.f32 0.0, %v2061
  %v2063 = vpop.f32.mrb[0].mxu0
  %2064 = vmatprep.mubr.bf16.mxu0 0
  %2065 = vmatmul.mubr.bf16.gmra.mrb[0].mxu0 %v1784
  %v2066 = vpop.f32.mrb[0].mxu0
  %v2067 = vadd.f32 0.0, %v2066
  %v2068 = vpop.f32.mrb[0].mxu0
  %v2069 = vpop.f32.mrb[0].mxu0
  %v2070 = vadd.f32 0.0, %v2069
  %v2071 = vpop.f32.mrb[0].mxu0
  %2072 = vmatprep.mubr.bf16.mxu0 0
  %2073 = vmatmul.mubr.bf16.gmra.mrb[0].mxu0 %v1786
  %v2074 = vpop.f32.mrb[0].mxu0
  %v2075 = vadd.f32 0.0, %v2074
  %v2076 = vpop.f32.mrb[0].mxu0
  %v2077 = vpop.f32.mrb[0].mxu0
  %v2078 = vadd.f32 0.0, %v2077
  %v2079 = vpop.f32.mrb[0].mxu0
  %2080 = vdwg.mxu0
  %v2081 = vld [vmem:[%s2] sm:$0x1]
  %v2082 = vld [vmem:[%s3] sm:$0x1]
  %v2083 = vsel %vm1159, %v1827, 0.0
  %v2084 = vsel %vm1159, %v1830, 0.0
  %v2085 = vadd.f32 %v2083, %v2084
  %v2086 = vsel %vm1159, %v1835, 0.0
  %v2087 = vadd.f32 %v2085, %v2086
  %v2088 = vsel %vm1159, %v1838, 0.0
  %v2089 = vadd.f32 %v2087, %v2088
  %v2090 = vsel %vm1159, %v1843, 0.0
  %v2091 = vadd.f32 %v2089, %v2090
  %v2092 = vsel %vm1159, %v1846, 0.0
  %v2093 = vadd.f32 %v2091, %v2092
  %v2094 = vsel %vm1159, %v1851, 0.0
  %v2095 = vadd.f32 %v2093, %v2094
  %v2096 = vsel %vm1159, %v1854, 0.0
  %v2097 = vadd.f32 %v2095, %v2096
  %v2098 = vsel %vm1159, %v1859, 0.0
  %v2099 = vadd.f32 %v2097, %v2098
  %v2100 = vsel %vm1159, %v1862, 0.0
  %v2101 = vadd.f32 %v2099, %v2100
  %v2102 = vsel %vm1159, %v1867, 0.0
  %v2103 = vadd.f32 %v2101, %v2102
  %v2104 = vsel %vm1159, %v1870, 0.0
  %v2105 = vadd.f32 %v2103, %v2104
  %v2106 = vsel %vm1159, %v1875, 0.0
  %v2107 = vadd.f32 %v2105, %v2106
  %v2108 = vsel %vm1159, %v1878, 0.0
  %v2109 = vadd.f32 %v2107, %v2108
  %v2110 = vsel %vm1159, %v1883, 0.0
  %v2111 = vadd.f32 %v2109, %v2110
  %v2112 = vsel %vm1159, %v1886, 0.0
  %v2113 = vadd.f32 %v2111, %v2112
  %v2114 = vsel %vm1159, %v1891, 0.0
  %v2115 = vadd.f32 %v2113, %v2114
  %v2116 = vsel %vm1159, %v1894, 0.0
  %v2117 = vadd.f32 %v2115, %v2116
  %v2118 = vsel %vm1159, %v1899, 0.0
  %v2119 = vadd.f32 %v2117, %v2118
  %v2120 = vsel %vm1159, %v1902, 0.0
  %v2121 = vadd.f32 %v2119, %v2120
  %v2122 = vsel %vm1159, %v1907, 0.0
  %v2123 = vadd.f32 %v2121, %v2122
  %v2124 = vsel %vm1159, %v1910, 0.0
  %v2125 = vadd.f32 %v2123, %v2124
  %v2126 = vsel %vm1159, %v1915, 0.0
  %v2127 = vadd.f32 %v2125, %v2126
  %v2128 = vsel %vm1159, %v1918, 0.0
  %v2129 = vadd.f32 %v2127, %v2128
  %v2130 = vsel %vm1159, %v1923, 0.0
  %v2131 = vadd.f32 %v2129, %v2130
  %v2132 = vsel %vm1159, %v1926, 0.0
  %v2133 = vadd.f32 %v2131, %v2132
  %v2134 = vsel %vm1159, %v1931, 0.0
  %v2135 = vadd.f32 %v2133, %v2134
  %v2136 = vsel %vm1159, %v1934, 0.0
  %v2137 = vadd.f32 %v2135, %v2136
  %v2138 = vsel %vm1159, %v1939, 0.0
  %v2139 = vadd.f32 %v2137, %v2138
  %v2140 = vsel %vm1159, %v1942, 0.0
  %v2141 = vadd.f32 %v2139, %v2140
  %v2142 = vsel %vm1159, %v1947, 0.0
  %v2143 = vadd.f32 %v2141, %v2142
  %v2144 = vsel %vm1159, %v1950, 0.0
  %v2145 = vadd.f32 %v2143, %v2144
  %v2146 = vsel %vm1159, %v1955, 0.0
  %v2147 = vadd.f32 %v2145, %v2146
  %v2148 = vsel %vm1159, %v1958, 0.0
  %v2149 = vadd.f32 %v2147, %v2148
  %v2150 = vsel %vm1159, %v1963, 0.0
  %v2151 = vadd.f32 %v2149, %v2150
  %v2152 = vsel %vm1159, %v1966, 0.0
  %v2153 = vadd.f32 %v2151, %v2152
  %v2154 = vsel %vm1159, %v1971, 0.0
  %v2155 = vadd.f32 %v2153, %v2154
  %v2156 = vsel %vm1159, %v1974, 0.0
  %v2157 = vadd.f32 %v2155, %v2156
  %v2158 = vsel %vm1159, %v1979, 0.0
  %v2159 = vadd.f32 %v2157, %v2158
  %v2160 = vsel %vm1159, %v1982, 0.0
  %v2161 = vadd.f32 %v2159, %v2160
  %v2162 = vsel %vm1159, %v1987, 0.0
  %v2163 = vadd.f32 %v2161, %v2162
  %v2164 = vsel %vm1159, %v1990, 0.0
  %v2165 = vadd.f32 %v2163, %v2164
  %v2166 = vsel %vm1159, %v1995, 0.0
  %v2167 = vadd.f32 %v2165, %v2166
  %v2168 = vsel %vm1159, %v1998, 0.0
  %v2169 = vadd.f32 %v2167, %v2168
  %v2170 = vsel %vm1159, %v2003, 0.0
  %v2171 = vadd.f32 %v2169, %v2170
  %v2172 = vsel %vm1159, %v2006, 0.0
  %v2173 = vadd.f32 %v2171, %v2172
  %v2174 = vsel %vm1159, %v2011, 0.0
  %v2175 = vadd.f32 %v2173, %v2174
  %v2176 = vsel %vm1159, %v2014, 0.0
  %v2177 = vadd.f32 %v2175, %v2176
  %v2178 = vsel %vm1159, %v2019, 0.0
  %v2179 = vadd.f32 %v2177, %v2178
  %v2180 = vsel %vm1159, %v2022, 0.0
  %v2181 = vadd.f32 %v2179, %v2180
  %v2182 = vsel %vm1159, %v2027, 0.0
  %v2183 = vadd.f32 %v2181, %v2182
  %v2184 = vsel %vm1159, %v2030, 0.0
  %v2185 = vadd.f32 %v2183, %v2184
  %v2186 = vsel %vm1159, %v2035, 0.0
  %v2187 = vadd.f32 %v2185, %v2186
  %v2188 = vsel %vm1159, %v2038, 0.0
  %v2189 = vadd.f32 %v2187, %v2188
  %v2190 = vsel %vm1159, %v2043, 0.0
  %v2191 = vadd.f32 %v2189, %v2190
  %v2192 = vsel %vm1159, %v2046, 0.0
  %v2193 = vadd.f32 %v2191, %v2192
  %v2194 = vsel %vm1159, %v2051, 0.0
  %v2195 = vadd.f32 %v2193, %v2194
  %v2196 = vsel %vm1159, %v2054, 0.0
  %v2197 = vadd.f32 %v2195, %v2196
  %v2198 = vsel %vm1159, %v2059, 0.0
  %v2199 = vadd.f32 %v2197, %v2198
  %v2200 = vsel %vm1159, %v2062, 0.0
  %v2201 = vadd.f32 %v2199, %v2200
  %v2202 = vsel %vm1159, %v2067, 0.0
  %v2203 = vadd.f32 %v2201, %v2202
  %v2204 = vsel %vm1159, %v2070, 0.0
  %v2205 = vadd.f32 %v2203, %v2204
  %v2206 = vsel %vm1159, %v2075, 0.0
  %v2207 = vadd.f32 %v2205, %v2206
  %v2208 = vsel %vm1159, %v2078, 0.0
  %v2209 = vadd.f32 %v2207, %v2208
  %v2210 = vrot.slane %v2209, 4
  %v2211 = vadd.f32 %v2209, %v2210
  %v2212 = vrot.slane %v2211, 2
  %v2213 = vadd.f32 %v2211, %v2212
  %v2214 = vrot.slane %v2213, 1
  %v2215 = vadd.f32 %v2213, %v2214
  %v2216 = vrcp.pop 512.0
  %v2217 = vmul.f32 %v2215, %v2216
  %v2218 = vsub.f32 %v1827, %v2217
  %v2219 = vsub.f32 %v1830, %v2217
  %v2220 = vsub.f32 %v1835, %v2217
  %v2221 = vsub.f32 %v1838, %v2217
  %v2222 = vsub.f32 %v1843, %v2217
  %v2223 = vsub.f32 %v1846, %v2217
  %v2224 = vsub.f32 %v1851, %v2217
  %v2225 = vsub.f32 %v1854, %v2217
  %v2226 = vsub.f32 %v1859, %v2217
  %v2227 = vsub.f32 %v1862, %v2217
  %v2228 = vsub.f32 %v1867, %v2217
  %v2229 = vsub.f32 %v1870, %v2217
  %v2230 = vsub.f32 %v1875, %v2217
  %v2231 = vsub.f32 %v1878, %v2217
  %v2232 = vsub.f32 %v1883, %v2217
  %v2233 = vsub.f32 %v1886, %v2217
  %v2234 = vsub.f32 %v1891, %v2217
  %v2235 = vsub.f32 %v1894, %v2217
  %v2236 = vsub.f32 %v1899, %v2217
  %v2237 = vsub.f32 %v1902, %v2217
  %v2238 = vsub.f32 %v1907, %v2217
  %v2239 = vsub.f32 %v1910, %v2217
  %v2240 = vsub.f32 %v1915, %v2217
  %v2241 = vsub.f32 %v1918, %v2217
  %v2242 = vsub.f32 %v1923, %v2217
  %v2243 = vsub.f32 %v1926, %v2217
  %v2244 = vsub.f32 %v1931, %v2217
  %v2245 = vsub.f32 %v1934, %v2217
  %v2246 = vsub.f32 %v1939, %v2217
  %v2247 = vsub.f32 %v1942, %v2217
  %v2248 = vsub.f32 %v1947, %v2217
  %v2249 = vsub.f32 %v1950, %v2217
  %v2250 = vsub.f32 %v1955, %v2217
  %v2251 = vsub.f32 %v1958, %v2217
  %v2252 = vsub.f32 %v1963, %v2217
  %v2253 = vsub.f32 %v1966, %v2217
  %v2254 = vsub.f32 %v1971, %v2217
  %v2255 = vsub.f32 %v1974, %v2217
  %v2256 = vsub.f32 %v1979, %v2217
  %v2257 = vsub.f32 %v1982, %v2217
  %v2258 = vsub.f32 %v1987, %v2217
  %v2259 = vsub.f32 %v1990, %v2217
  %v2260 = vsub.f32 %v1995, %v2217
  %v2261 = vsub.f32 %v1998, %v2217
  %v2262 = vsub.f32 %v2003, %v2217
  %v2263 = vsub.f32 %v2006, %v2217
  %v2264 = vsub.f32 %v2011, %v2217
  %v2265 = vsub.f32 %v2014, %v2217
  %v2266 = vsub.f32 %v2019, %v2217
  %v2267 = vsub.f32 %v2022, %v2217
  %v2268 = vsub.f32 %v2027, %v2217
  %v2269 = vsub.f32 %v2030, %v2217
  %v2270 = vsub.f32 %v2035, %v2217
  %v2271 = vsub.f32 %v2038, %v2217
  %v2272 = vsub.f32 %v2043, %v2217
  %v2273 = vsub.f32 %v2046, %v2217
  %v2274 = vsub.f32 %v2051, %v2217
  %v2275 = vsub.f32 %v2054, %v2217
  %v2276 = vsub.f32 %v2059, %v2217
  %v2277 = vsub.f32 %v2062, %v2217
  %v2278 = vsub.f32 %v2067, %v2217
  %v2279 = vsub.f32 %v2070, %v2217
  %v2280 = vsub.f32 %v2075, %v2217
  %v2281 = vsub.f32 %v2078, %v2217
  %v2282 = vmul.f32 %v2218, %v2218
  %v2283 = vmul.f32 %v2219, %v2219
  %v2284 = vmul.f32 %v2220, %v2220
  %v2285 = vmul.f32 %v2221, %v2221
  %v2286 = vmul.f32 %v2222, %v2222
  %v2287 = vmul.f32 %v2223, %v2223
  %v2288 = vmul.f32 %v2224, %v2224
  %v2289 = vmul.f32 %v2225, %v2225
  %v2290 = vmul.f32 %v2226, %v2226
  %v2291 = vmul.f32 %v2227, %v2227
  %v2292 = vmul.f32 %v2228, %v2228
  %v2293 = vmul.f32 %v2229, %v2229
  %v2294 = vmul.f32 %v2230, %v2230
  %v2295 = vmul.f32 %v2231, %v2231
  %v2296 = vmul.f32 %v2232, %v2232
  %v2297 = vmul.f32 %v2233, %v2233
  %v2298 = vmul.f32 %v2234, %v2234
  %v2299 = vmul.f32 %v2235, %v2235
  %v2300 = vmul.f32 %v2236, %v2236
  %v2301 = vmul.f32 %v2237, %v2237
  %v2302 = vmul.f32 %v2238, %v2238
  %v2303 = vmul.f32 %v2239, %v2239
  %v2304 = vmul.f32 %v2240, %v2240
  %v2305 = vmul.f32 %v2241, %v2241
  %v2306 = vmul.f32 %v2242, %v2242
  %v2307 = vmul.f32 %v2243, %v2243
  %v2308 = vmul.f32 %v2244, %v2244
  %v2309 = vmul.f32 %v2245, %v2245
  %v2310 = vmul.f32 %v2246, %v2246
  %v2311 = vmul.f32 %v2247, %v2247
  %v2312 = vmul.f32 %v2248, %v2248
  %v2313 = vmul.f32 %v2249, %v2249
  %v2314 = vmul.f32 %v2250, %v2250
  %v2315 = vmul.f32 %v2251, %v2251
  %v2316 = vmul.f32 %v2252, %v2252
  %v2317 = vmul.f32 %v2253, %v2253
  %v2318 = vmul.f32 %v2254, %v2254
  %v2319 = vmul.f32 %v2255, %v2255
  %v2320 = vmul.f32 %v2256, %v2256
  %v2321 = vmul.f32 %v2257, %v2257
  %v2322 = vmul.f32 %v2258, %v2258
  %v2323 = vmul.f32 %v2259, %v2259
  %v2324 = vmul.f32 %v2260, %v2260
  %v2325 = vmul.f32 %v2261, %v2261
  %v2326 = vmul.f32 %v2262, %v2262
  %v2327 = vmul.f32 %v2263, %v2263
  %v2328 = vmul.f32 %v2264, %v2264
  %v2329 = vmul.f32 %v2265, %v2265
  %v2330 = vmul.f32 %v2266, %v2266
  %v2331 = vmul.f32 %v2267, %v2267
  %v2332 = vmul.f32 %v2268, %v2268
  %v2333 = vmul.f32 %v2269, %v2269
  %v2334 = vmul.f32 %v2270, %v2270
  %v2335 = vmul.f32 %v2271, %v2271
  %v2336 = vmul.f32 %v2272, %v2272
  %v2337 = vmul.f32 %v2273, %v2273
  %v2338 = vmul.f32 %v2274, %v2274
  %v2339 = vmul.f32 %v2275, %v2275
  %v2340 = vmul.f32 %v2276, %v2276
  %v2341 = vmul.f32 %v2277, %v2277
  %v2342 = vmul.f32 %v2278, %v2278
  %v2343 = vmul.f32 %v2279, %v2279
  %v2344 = vmul.f32 %v2280, %v2280
  %v2345 = vmul.f32 %v2281, %v2281
  %v2346 = vsel %vm1159, %v2282, 0.0
  %v2347 = vsel %vm1159, %v2283, 0.0
  %v2348 = vadd.f32 %v2346, %v2347
  %v2349 = vsel %vm1159, %v2284, 0.0
  %v2350 = vadd.f32 %v2348, %v2349
  %v2351 = vsel %vm1159, %v2285, 0.0
  %v2352 = vadd.f32 %v2350, %v2351
  %v2353 = vsel %vm1159, %v2286, 0.0
  %v2354 = vadd.f32 %v2352, %v2353
  %v2355 = vsel %vm1159, %v2287, 0.0
  %v2356 = vadd.f32 %v2354, %v2355
  %v2357 = vsel %vm1159, %v2288, 0.0
  %v2358 = vadd.f32 %v2356, %v2357
  %v2359 = vsel %vm1159, %v2289, 0.0
  %v2360 = vadd.f32 %v2358, %v2359
  %v2361 = vsel %vm1159, %v2290, 0.0
  %v2362 = vadd.f32 %v2360, %v2361
  %v2363 = vsel %vm1159, %v2291, 0.0
  %v2364 = vadd.f32 %v2362, %v2363
  %v2365 = vsel %vm1159, %v2292, 0.0
  %v2366 = vadd.f32 %v2364, %v2365
  %v2367 = vsel %vm1159, %v2293, 0.0
  %v2368 = vadd.f32 %v2366, %v2367
  %v2369 = vsel %vm1159, %v2294, 0.0
  %v2370 = vadd.f32 %v2368, %v2369
  %v2371 = vsel %vm1159, %v2295, 0.0
  %v2372 = vadd.f32 %v2370, %v2371
  %v2373 = vsel %vm1159, %v2296, 0.0
  %v2374 = vadd.f32 %v2372, %v2373
  %v2375 = vsel %vm1159, %v2297, 0.0
  %v2376 = vadd.f32 %v2374, %v2375
  %v2377 = vsel %vm1159, %v2298, 0.0
  %v2378 = vadd.f32 %v2376, %v2377
  %v2379 = vsel %vm1159, %v2299, 0.0
  %v2380 = vadd.f32 %v2378, %v2379
  %v2381 = vsel %vm1159, %v2300, 0.0
  %v2382 = vadd.f32 %v2380, %v2381
  %v2383 = vsel %vm1159, %v2301, 0.0
  %v2384 = vadd.f32 %v2382, %v2383
  %v2385 = vsel %vm1159, %v2302, 0.0
  %v2386 = vadd.f32 %v2384, %v2385
  %v2387 = vsel %vm1159, %v2303, 0.0
  %v2388 = vadd.f32 %v2386, %v2387
  %v2389 = vsel %vm1159, %v2304, 0.0
  %v2390 = vadd.f32 %v2388, %v2389
  %v2391 = vsel %vm1159, %v2305, 0.0
  %v2392 = vadd.f32 %v2390, %v2391
  %v2393 = vsel %vm1159, %v2306, 0.0
  %v2394 = vadd.f32 %v2392, %v2393
  %v2395 = vsel %vm1159, %v2307, 0.0
  %v2396 = vadd.f32 %v2394, %v2395
  %v2397 = vsel %vm1159, %v2308, 0.0
  %v2398 = vadd.f32 %v2396, %v2397
  %v2399 = vsel %vm1159, %v2309, 0.0
  %v2400 = vadd.f32 %v2398, %v2399
  %v2401 = vsel %vm1159, %v2310, 0.0
  %v2402 = vadd.f32 %v2400, %v2401
  %v2403 = vsel %vm1159, %v2311, 0.0
  %v2404 = vadd.f32 %v2402, %v2403
  %v2405 = vsel %vm1159, %v2312, 0.0
  %v2406 = vadd.f32 %v2404, %v2405
  %v2407 = vsel %vm1159, %v2313, 0.0
  %v2408 = vadd.f32 %v2406, %v2407
  %v2409 = vsel %vm1159, %v2314, 0.0
  %v2410 = vadd.f32 %v2408, %v2409
  %v2411 = vsel %vm1159, %v2315, 0.0
  %v2412 = vadd.f32 %v2410, %v2411
  %v2413 = vsel %vm1159, %v2316, 0.0
  %v2414 = vadd.f32 %v2412, %v2413
  %v2415 = vsel %vm1159, %v2317, 0.0
  %v2416 = vadd.f32 %v2414, %v2415
  %v2417 = vsel %vm1159, %v2318, 0.0
  %v2418 = vadd.f32 %v2416, %v2417
  %v2419 = vsel %vm1159, %v2319, 0.0
  %v2420 = vadd.f32 %v2418, %v2419
  %v2421 = vsel %vm1159, %v2320, 0.0
  %v2422 = vadd.f32 %v2420, %v2421
  %v2423 = vsel %vm1159, %v2321, 0.0
  %v2424 = vadd.f32 %v2422, %v2423
  %v2425 = vsel %vm1159, %v2322, 0.0
  %v2426 = vadd.f32 %v2424, %v2425
  %v2427 = vsel %vm1159, %v2323, 0.0
  %v2428 = vadd.f32 %v2426, %v2427
  %v2429 = vsel %vm1159, %v2324, 0.0
  %v2430 = vadd.f32 %v2428, %v2429
  %v2431 = vsel %vm1159, %v2325, 0.0
  %v2432 = vadd.f32 %v2430, %v2431
  %v2433 = vsel %vm1159, %v2326, 0.0
  %v2434 = vadd.f32 %v2432, %v2433
  %v2435 = vsel %vm1159, %v2327, 0.0
  %v2436 = vadd.f32 %v2434, %v2435
  %v2437 = vsel %vm1159, %v2328, 0.0
  %v2438 = vadd.f32 %v2436, %v2437
  %v2439 = vsel %vm1159, %v2329, 0.0
  %v2440 = vadd.f32 %v2438, %v2439
  %v2441 = vsel %vm1159, %v2330, 0.0
  %v2442 = vadd.f32 %v2440, %v2441
  %v2443 = vsel %vm1159, %v2331, 0.0
  %v2444 = vadd.f32 %v2442, %v2443
  %v2445 = vsel %vm1159, %v2332, 0.0
  %v2446 = vadd.f32 %v2444, %v2445
  %v2447 = vsel %vm1159, %v2333, 0.0
  %v2448 = vadd.f32 %v2446, %v2447
  %v2449 = vsel %vm1159, %v2334, 0.0
  %v2450 = vadd.f32 %v2448, %v2449
  %v2451 = vsel %vm1159, %v2335, 0.0
  %v2452 = vadd.f32 %v2450, %v2451
  %v2453 = vsel %vm1159, %v2336, 0.0
  %v2454 = vadd.f32 %v2452, %v2453
  %v2455 = vsel %vm1159, %v2337, 0.0
  %v2456 = vadd.f32 %v2454, %v2455
  %v2457 = vsel %vm1159, %v2338, 0.0
  %v2458 = vadd.f32 %v2456, %v2457
  %v2459 = vsel %vm1159, %v2339, 0.0
  %v2460 = vadd.f32 %v2458, %v2459
  %v2461 = vsel %vm1159, %v2340, 0.0
  %v2462 = vadd.f32 %v2460, %v2461
  %v2463 = vsel %vm1159, %v2341, 0.0
  %v2464 = vadd.f32 %v2462, %v2463
  %v2465 = vsel %vm1159, %v2342, 0.0
  %v2466 = vadd.f32 %v2464, %v2465
  %v2467 = vsel %vm1159, %v2343, 0.0
  %v2468 = vadd.f32 %v2466, %v2467
  %v2469 = vsel %vm1159, %v2344, 0.0
  %v2470 = vadd.f32 %v2468, %v2469
  %v2471 = vsel %vm1159, %v2345, 0.0
  %v2472 = vadd.f32 %v2470, %v2471
  %v2473 = vrot.slane %v2472, 4
  %v2474 = vadd.f32 %v2472, %v2473
  %v2475 = vrot.slane %v2474, 2
  %v2476 = vadd.f32 %v2474, %v2475
  %v2477 = vrot.slane %v2476, 1
  %v2478 = vadd.f32 %v2476, %v2477
  %v2479 = vmul.f32 %v2478, %v2216
  %v2480 = vadd.f32 %v2479, 1e-05
  %v2481 = vrsqrt.pop %v2480
  %v2482 = vmul.f32 %v2481, %v2081
  %v2483 = vlaneseq
  %v2484 = vshrl.u32 %v2483, 7
  %v2485 = vsub.s32 0, %v2484
  %v2486 = vrot.slane %v2482, %v2485
  %v2487 = vmul.f32 %v2218, %v2486
  %v2488 = vmul.f32 %v2219, %v2486
  %v2489 = vmul.f32 %v2220, %v2486
  %v2490 = vmul.f32 %v2221, %v2486
  %v2491 = vmul.f32 %v2222, %v2486
  %v2492 = vmul.f32 %v2223, %v2486
  %v2493 = vmul.f32 %v2224, %v2486
  %v2494 = vmul.f32 %v2225, %v2486
  %v2495 = vmul.f32 %v2226, %v2486
  %v2496 = vmul.f32 %v2227, %v2486
  %v2497 = vmul.f32 %v2228, %v2486
  %v2498 = vmul.f32 %v2229, %v2486
  %v2499 = vmul.f32 %v2230, %v2486
  %v2500 = vmul.f32 %v2231, %v2486
  %v2501 = vmul.f32 %v2232, %v2486
  %v2502 = vmul.f32 %v2233, %v2486
  %v2503 = vmul.f32 %v2234, %v2486
  %v2504 = vmul.f32 %v2235, %v2486
  %v2505 = vmul.f32 %v2236, %v2486
  %v2506 = vmul.f32 %v2237, %v2486
  %v2507 = vmul.f32 %v2238, %v2486
  %v2508 = vmul.f32 %v2239, %v2486
  %v2509 = vmul.f32 %v2240, %v2486
  %v2510 = vmul.f32 %v2241, %v2486
  %v2511 = vmul.f32 %v2242, %v2486
  %v2512 = vmul.f32 %v2243, %v2486
  %v2513 = vmul.f32 %v2244, %v2486
  %v2514 = vmul.f32 %v2245, %v2486
  %v2515 = vmul.f32 %v2246, %v2486
  %v2516 = vmul.f32 %v2247, %v2486
  %v2517 = vmul.f32 %v2248, %v2486
  %v2518 = vmul.f32 %v2249, %v2486
  %v2519 = vmul.f32 %v2250, %v2486
  %v2520 = vmul.f32 %v2251, %v2486
  %v2521 = vmul.f32 %v2252, %v2486
  %v2522 = vmul.f32 %v2253, %v2486
  %v2523 = vmul.f32 %v2254, %v2486
  %v2524 = vmul.f32 %v2255, %v2486
  %v2525 = vmul.f32 %v2256, %v2486
  %v2526 = vmul.f32 %v2257, %v2486
  %v2527 = vmul.f32 %v2258, %v2486
  %v2528 = vmul.f32 %v2259, %v2486
  %v2529 = vmul.f32 %v2260, %v2486
  %v2530 = vmul.f32 %v2261, %v2486
  %v2531 = vmul.f32 %v2262, %v2486
  %v2532 = vmul.f32 %v2263, %v2486
  %v2533 = vmul.f32 %v2264, %v2486
  %v2534 = vmul.f32 %v2265, %v2486
  %v2535 = vmul.f32 %v2266, %v2486
  %v2536 = vmul.f32 %v2267, %v2486
  %v2537 = vmul.f32 %v2268, %v2486
  %v2538 = vmul.f32 %v2269, %v2486
  %v2539 = vmul.f32 %v2270, %v2486
  %v2540 = vmul.f32 %v2271, %v2486
  %v2541 = vmul.f32 %v2272, %v2486
  %v2542 = vmul.f32 %v2273, %v2486
  %v2543 = vmul.f32 %v2274, %v2486
  %v2544 = vmul.f32 %v2275, %v2486
  %v2545 = vmul.f32 %v2276, %v2486
  %v2546 = vmul.f32 %v2277, %v2486
  %v2547 = vmul.f32 %v2278, %v2486
  %v2548 = vmul.f32 %v2279, %v2486
  %v2549 = vmul.f32 %v2280, %v2486
  %v2550 = vmul.f32 %v2281, %v2486
  %v2552 = vlaneseq
  %v2553 = vshrl.u32 %v2552, 7
  %v2554 = vsub.s32 0, %v2553
  %v2555 = vrot.slane %v2082, %v2554
  %v2557 = vadd.f32 %v2487, %v2555
  %v2558 = vadd.f32 %v2488, %v2555
  %v2559 = vadd.f32 %v2489, %v2555
  %v2560 = vadd.f32 %v2490, %v2555
  %v2561 = vadd.f32 %v2491, %v2555
  %v2562 = vadd.f32 %v2492, %v2555
  %v2563 = vadd.f32 %v2493, %v2555
  %v2564 = vadd.f32 %v2494, %v2555
  %v2565 = vadd.f32 %v2495, %v2555
  %v2566 = vadd.f32 %v2496, %v2555
  %v2567 = vadd.f32 %v2497, %v2555
  %v2568 = vadd.f32 %v2498, %v2555
  %v2569 = vadd.f32 %v2499, %v2555
  %v2570 = vadd.f32 %v2500, %v2555
  %v2571 = vadd.f32 %v2501, %v2555
  %v2572 = vadd.f32 %v2502, %v2555
  %v2573 = vadd.f32 %v2503, %v2555
  %v2574 = vadd.f32 %v2504, %v2555
  %v2575 = vadd.f32 %v2505, %v2555
  %v2576 = vadd.f32 %v2506, %v2555
  %v2577 = vadd.f32 %v2507, %v2555
  %v2578 = vadd.f32 %v2508, %v2555
  %v2579 = vadd.f32 %v2509, %v2555
  %v2580 = vadd.f32 %v2510, %v2555
  %v2581 = vadd.f32 %v2511, %v2555
  %v2582 = vadd.f32 %v2512, %v2555
  %v2583 = vadd.f32 %v2513, %v2555
  %v2584 = vadd.f32 %v2514, %v2555
  %v2585 = vadd.f32 %v2515, %v2555
  %v2586 = vadd.f32 %v2516, %v2555
  %v2587 = vadd.f32 %v2517, %v2555
  %v2588 = vadd.f32 %v2518, %v2555
  %v2589 = vadd.f32 %v2519, %v2555
  %v2590 = vadd.f32 %v2520, %v2555
  %v2591 = vadd.f32 %v2521, %v2555
  %v2592 = vadd.f32 %v2522, %v2555
  %v2593 = vadd.f32 %v2523, %v2555
  %v2594 = vadd.f32 %v2524, %v2555
  %v2595 = vadd.f32 %v2525, %v2555
  %v2596 = vadd.f32 %v2526, %v2555
  %v2597 = vadd.f32 %v2527, %v2555
  %v2598 = vadd.f32 %v2528, %v2555
  %v2599 = vadd.f32 %v2529, %v2555
  %v2600 = vadd.f32 %v2530, %v2555
  %v2601 = vadd.f32 %v2531, %v2555
  %v2602 = vadd.f32 %v2532, %v2555
  %v2603 = vadd.f32 %v2533, %v2555
  %v2604 = vadd.f32 %v2534, %v2555
  %v2605 = vadd.f32 %v2535, %v2555
  %v2606 = vadd.f32 %v2536, %v2555
  %v2607 = vadd.f32 %v2537, %v2555
  %v2608 = vadd.f32 %v2538, %v2555
  %v2609 = vadd.f32 %v2539, %v2555
  %v2610 = vadd.f32 %v2540, %v2555
  %v2611 = vadd.f32 %v2541, %v2555
  %v2612 = vadd.f32 %v2542, %v2555
  %v2613 = vadd.f32 %v2543, %v2555
  %v2614 = vadd.f32 %v2544, %v2555
  %v2615 = vadd.f32 %v2545, %v2555
  %v2616 = vadd.f32 %v2546, %v2555
  %v2617 = vadd.f32 %v2547, %v2555
  %v2618 = vadd.f32 %v2548, %v2555
  %v2619 = vadd.f32 %v2549, %v2555
  %v2620 = vadd.f32 %v2550, %v2555
  %v2621 = vmax.f32 %v2557, 0.0
  %v2622 = vmax.f32 %v2558, 0.0
  %v2623 = vmax.f32 %v2559, 0.0
  %v2624 = vmax.f32 %v2560, 0.0
  %v2625 = vmax.f32 %v2561, 0.0
  %v2626 = vmax.f32 %v2562, 0.0
  %v2627 = vmax.f32 %v2563, 0.0
  %v2628 = vmax.f32 %v2564, 0.0
  %v2629 = vmax.f32 %v2565, 0.0
  %v2630 = vmax.f32 %v2566, 0.0
  %v2631 = vmax.f32 %v2567, 0.0
  %v2632 = vmax.f32 %v2568, 0.0
  %v2633 = vmax.f32 %v2569, 0.0
  %v2634 = vmax.f32 %v2570, 0.0
  %v2635 = vmax.f32 %v2571, 0.0
  %v2636 = vmax.f32 %v2572, 0.0
  %v2637 = vmax.f32 %v2573, 0.0
  %v2638 = vmax.f32 %v2574, 0.0
  %v2639 = vmax.f32 %v2575, 0.0
  %v2640 = vmax.f32 %v2576, 0.0
  %v2641 = vmax.f32 %v2577, 0.0
  %v2642 = vmax.f32 %v2578, 0.0
  %v2643 = vmax.f32 %v2579, 0.0
  %v2644 = vmax.f32 %v2580, 0.0
  %v2645 = vmax.f32 %v2581, 0.0
  %v2646 = vmax.f32 %v2582, 0.0
  %v2647 = vmax.f32 %v2583, 0.0
  %v2648 = vmax.f32 %v2584, 0.0
  %v2649 = vmax.f32 %v2585, 0.0
  %v2650 = vmax.f32 %v2586, 0.0
  %v2651 = vmax.f32 %v2587, 0.0
  %v2652 = vmax.f32 %v2588, 0.0
  %v2653 = vmax.f32 %v2589, 0.0
  %v2654 = vmax.f32 %v2590, 0.0
  %v2655 = vmax.f32 %v2591, 0.0
  %v2656 = vmax.f32 %v2592, 0.0
  %v2657 = vmax.f32 %v2593, 0.0
  %v2658 = vmax.f32 %v2594, 0.0
  %v2659 = vmax.f32 %v2595, 0.0
  %v2660 = vmax.f32 %v2596, 0.0
  %v2661 = vmax.f32 %v2597, 0.0
  %v2662 = vmax.f32 %v2598, 0.0
  %v2663 = vmax.f32 %v2599, 0.0
  %v2664 = vmax.f32 %v2600, 0.0
  %v2665 = vmax.f32 %v2601, 0.0
  %v2666 = vmax.f32 %v2602, 0.0
  %v2667 = vmax.f32 %v2603, 0.0
  %v2668 = vmax.f32 %v2604, 0.0
  %v2669 = vmax.f32 %v2605, 0.0
  %v2670 = vmax.f32 %v2606, 0.0
  %v2671 = vmax.f32 %v2607, 0.0
  %v2672 = vmax.f32 %v2608, 0.0
  %v2673 = vmax.f32 %v2609, 0.0
  %v2674 = vmax.f32 %v2610, 0.0
  %v2675 = vmax.f32 %v2611, 0.0
  %v2676 = vmax.f32 %v2612, 0.0
  %v2677 = vmax.f32 %v2613, 0.0
  %v2678 = vmax.f32 %v2614, 0.0
  %v2679 = vmax.f32 %v2615, 0.0
  %v2680 = vmax.f32 %v2616, 0.0
  %v2681 = vmax.f32 %v2617, 0.0
  %v2682 = vmax.f32 %v2618, 0.0
  %v2683 = vmax.f32 %v2619, 0.0
  %v2684 = vmax.f32 %v2620, 0.0
  %v2685 = vpack.c.bf16 %v2622, %v2621
  %v2686 = vpack.c.bf16 %v2624, %v2623
  %v2687 = vpack.c.bf16 %v2626, %v2625
  %v2688 = vpack.c.bf16 %v2628, %v2627
  %v2689 = vpack.c.bf16 %v2630, %v2629
  %v2690 = vpack.c.bf16 %v2632, %v2631
  %v2691 = vpack.c.bf16 %v2634, %v2633
  %v2692 = vpack.c.bf16 %v2636, %v2635
  %v2693 = vpack.c.bf16 %v2638, %v2637
  %v2694 = vpack.c.bf16 %v2640, %v2639
  %v2695 = vpack.c.bf16 %v2642, %v2641
  %v2696 = vpack.c.bf16 %v2644, %v2643
  %v2697 = vpack.c.bf16 %v2646, %v2645
  %v2698 = vpack.c.bf16 %v2648, %v2647
  %v2699 = vpack.c.bf16 %v2650, %v2649
  %v2700 = vpack.c.bf16 %v2652, %v2651
  %v2701 = vpack.c.bf16 %v2654, %v2653
  %v2702 = vpack.c.bf16 %v2656, %v2655
  %v2703 = vpack.c.bf16 %v2658, %v2657
  %v2704 = vpack.c.bf16 %v2660, %v2659
  %v2705 = vpack.c.bf16 %v2662, %v2661
  %v2706 = vpack.c.bf16 %v2664, %v2663
  %v2707 = vpack.c.bf16 %v2666, %v2665
  %v2708 = vpack.c.bf16 %v2668, %v2667
  %v2709 = vpack.c.bf16 %v2670, %v2669
  %v2710 = vpack.c.bf16 %v2672, %v2671
  %v2711 = vpack.c.bf16 %v2674, %v2673
  %v2712 = vpack.c.bf16 %v2676, %v2675
  %v2713 = vpack.c.bf16 %v2678, %v2677
  %v2714 = vpack.c.bf16 %v2680, %v2679
  %v2715 = vpack.c.bf16 %v2682, %v2681
  %v2716 = vpack.c.bf16 %v2684, %v2683
  %v2718 = vshrl.u32 %v2685, 16
  %v2720 = vrot.slane %v2718, 7
  %v2721 = vshll.u32 %v2685, 16
  %v2723 = vor.u32 %v2720, %v2721
  %v2725 = vshrl.u32 %v2686, 16
  %v2727 = vrot.slane %v2725, 7
  %v2728 = vshll.u32 %v2686, 16
  %v2730 = vor.u32 %v2727, %v2728
  %v2732 = vshrl.u32 %v2687, 16
  %v2734 = vrot.slane %v2732, 7
  %v2735 = vshll.u32 %v2687, 16
  %v2737 = vor.u32 %v2734, %v2735
  %v2739 = vshrl.u32 %v2688, 16
  %v2741 = vrot.slane %v2739, 7
  %v2742 = vshll.u32 %v2688, 16
  %v2744 = vor.u32 %v2741, %v2742
  %v2746 = vshrl.u32 %v2689, 16
  %v2748 = vrot.slane %v2746, 7
  %v2749 = vshll.u32 %v2689, 16
  %v2751 = vor.u32 %v2748, %v2749
  %v2753 = vshrl.u32 %v2690, 16
  %v2755 = vrot.slane %v2753, 7
  %v2756 = vshll.u32 %v2690, 16
  %v2758 = vor.u32 %v2755, %v2756
  %v2760 = vshrl.u32 %v2691, 16
  %v2762 = vrot.slane %v2760, 7
  %v2763 = vshll.u32 %v2691, 16
  %v2765 = vor.u32 %v2762, %v2763
  %v2767 = vshrl.u32 %v2692, 16
  %v2769 = vrot.slane %v2767, 7
  %v2770 = vshll.u32 %v2692, 16
  %v2772 = vor.u32 %v2769, %v2770
  %v2774 = vshrl.u32 %v2693, 16
  %v2776 = vrot.slane %v2774, 7
  %v2777 = vshll.u32 %v2693, 16
  %v2779 = vor.u32 %v2776, %v2777
  %v2781 = vshrl.u32 %v2694, 16
  %v2783 = vrot.slane %v2781, 7
  %v2784 = vshll.u32 %v2694, 16
  %v2786 = vor.u32 %v2783, %v2784
  %v2788 = vshrl.u32 %v2695, 16
  %v2790 = vrot.slane %v2788, 7
  %v2791 = vshll.u32 %v2695, 16
  %v2793 = vor.u32 %v2790, %v2791
  %v2795 = vshrl.u32 %v2696, 16
  %v2797 = vrot.slane %v2795, 7
  %v2798 = vshll.u32 %v2696, 16
  %v2800 = vor.u32 %v2797, %v2798
  %v2802 = vshrl.u32 %v2697, 16
  %v2804 = vrot.slane %v2802, 7
  %v2805 = vshll.u32 %v2697, 16
  %v2807 = vor.u32 %v2804, %v2805
  %v2809 = vshrl.u32 %v2698, 16
  %v2811 = vrot.slane %v2809, 7
  %v2812 = vshll.u32 %v2698, 16
  %v2814 = vor.u32 %v2811, %v2812
  %v2816 = vshrl.u32 %v2699, 16
  %v2818 = vrot.slane %v2816, 7
  %v2819 = vshll.u32 %v2699, 16
  %v2821 = vor.u32 %v2818, %v2819
  %v2823 = vshrl.u32 %v2701, 16
  %v2825 = vrot.slane %v2823, 7
  %v2826 = vshll.u32 %v2701, 16
  %v2828 = vor.u32 %v2825, %v2826
  %v2830 = vshrl.u32 %v2702, 16
  %v2832 = vrot.slane %v2830, 7
  %v2833 = vshll.u32 %v2702, 16
  %v2835 = vor.u32 %v2832, %v2833
  %v2837 = vshrl.u32 %v2703, 16
  %v2839 = vrot.slane %v2837, 7
  %v2840 = vshll.u32 %v2703, 16
  %v2842 = vor.u32 %v2839, %v2840
  %v2844 = vshrl.u32 %v2704, 16
  %v2846 = vrot.slane %v2844, 7
  %v2847 = vshll.u32 %v2704, 16
  %v2849 = vor.u32 %v2846, %v2847
  %v2851 = vshrl.u32 %v2705, 16
  %v2853 = vrot.slane %v2851, 7
  %v2854 = vshll.u32 %v2705, 16
  %v2856 = vor.u32 %v2853, %v2854
  %v2858 = vshrl.u32 %v2706, 16
  %v2860 = vrot.slane %v2858, 7
  %v2861 = vshll.u32 %v2706, 16
  %v2863 = vor.u32 %v2860, %v2861
  %v2865 = vshrl.u32 %v2707, 16
  %v2867 = vrot.slane %v2865, 7
  %v2868 = vshll.u32 %v2707, 16
  %v2870 = vor.u32 %v2867, %v2868
  %v2872 = vshrl.u32 %v2708, 16
  %v2874 = vrot.slane %v2872, 7
  %v2875 = vshll.u32 %v2708, 16
  %v2877 = vor.u32 %v2874, %v2875
  %v2879 = vshrl.u32 %v2709, 16
  %v2881 = vrot.slane %v2879, 7
  %v2882 = vshll.u32 %v2709, 16
  %v2884 = vor.u32 %v2881, %v2882
  %v2886 = vshrl.u32 %v2710, 16
  %v2888 = vrot.slane %v2886, 7
  %v2889 = vshll.u32 %v2710, 16
  %v2891 = vor.u32 %v2888, %v2889
  %v2893 = vshrl.u32 %v2711, 16
  %v2895 = vrot.slane %v2893, 7
  %v2896 = vshll.u32 %v2711, 16
  %v2898 = vor.u32 %v2895, %v2896
  %v2900 = vshrl.u32 %v2712, 16
  %v2902 = vrot.slane %v2900, 7
  %v2903 = vshll.u32 %v2712, 16
  %v2905 = vor.u32 %v2902, %v2903
  %v2907 = vshrl.u32 %v2713, 16
  %v2909 = vrot.slane %v2907, 7
  %v2910 = vshll.u32 %v2713, 16
  %v2912 = vor.u32 %v2909, %v2910
  %v2914 = vshrl.u32 %v2714, 16
  %v2916 = vrot.slane %v2914, 7
  %v2917 = vshll.u32 %v2714, 16
  %v2919 = vor.u32 %v2916, %v2917
  %v2921 = vshrl.u32 %v2715, 16
  %v2923 = vrot.slane %v2921, 7
  %v2924 = vshll.u32 %v2715, 16
  %v2926 = vor.u32 %v2923, %v2924
  %v2957 = vsel %vm373, 0, %v2723
  %v2958 = vsel %vm373, 0, %v2730
  %v2959 = vsel %vm373, 0, %v2737
  %v2960 = vsel %vm373, 0, %v2744
  %v2961 = vsel %vm373, 0, %v2751
  %v2962 = vsel %vm373, 0, %v2758
  %v2963 = vsel %vm373, 0, %v2765
  %v2964 = vsel %vm373, 0, %v2772
  %v2965 = vsel %vm373, 0, %v2779
  %v2966 = vsel %vm373, 0, %v2786
  %v2967 = vsel %vm373, 0, %v2793
  %v2968 = vsel %vm373, 0, %v2800
  %v2969 = vsel %vm373, 0, %v2807
  %v2970 = vsel %vm373, 0, %v2814
  %v2971 = vsel %vm373, 0, %v2821
  %v2972 = vsel %vm373, 0, %v2828
  %v2973 = vsel %vm373, 0, %v2835
  %v2974 = vsel %vm373, 0, %v2842
  %v2975 = vsel %vm373, 0, %v2849
  %v2976 = vsel %vm373, 0, %v2856
  %v2977 = vsel %vm373, 0, %v2863
  %v2978 = vsel %vm373, 0, %v2870
  %v2979 = vsel %vm373, 0, %v2877
  %v2980 = vsel %vm373, 0, %v2884
  %v2981 = vsel %vm373, 0, %v2891
  %v2982 = vsel %vm373, 0, %v2898
  %v2983 = vsel %vm373, 0, %v2905
  %v2984 = vsel %vm373, 0, %v2912
  %v2985 = vsel %vm373, 0, %v2919
  %v2986 = vsel %vm373, 0, %v2926
  %v2987 = vrot.slane %v2721, 1
  %v2988 = vor.u32 %v2718, %v2987
  %v2989 = vrot.slane %v2728, 1
  %v2990 = vor.u32 %v2725, %v2989
  %v2991 = vrot.slane %v2735, 1
  %v2992 = vor.u32 %v2732, %v2991
  %v2993 = vrot.slane %v2742, 1
  %v2994 = vor.u32 %v2739, %v2993
  %v2995 = vrot.slane %v2749, 1
  %v2996 = vor.u32 %v2746, %v2995
  %v2997 = vrot.slane %v2756, 1
  %v2998 = vor.u32 %v2753, %v2997
  %v2999 = vrot.slane %v2763, 1
  %v3000 = vor.u32 %v2760, %v2999
  %v3001 = vrot.slane %v2770, 1
  %v3002 = vor.u32 %v2767, %v3001
  %v3003 = vrot.slane %v2777, 1
  %v3004 = vor.u32 %v2774, %v3003
  %v3005 = vrot.slane %v2784, 1
  %v3006 = vor.u32 %v2781, %v3005
  %v3007 = vrot.slane %v2791, 1
  %v3008 = vor.u32 %v2788, %v3007
  %v3009 = vrot.slane %v2798, 1
  %v3010 = vor.u32 %v2795, %v3009
  %v3011 = vrot.slane %v2805, 1
  %v3012 = vor.u32 %v2802, %v3011
  %v3013 = vrot.slane %v2812, 1
  %v3014 = vor.u32 %v2809, %v3013
  %v3015 = vrot.slane %v2819, 1
  %v3016 = vor.u32 %v2816, %v3015
  %v3017 = vrot.slane %v2826, 1
  %v3018 = vor.u32 %v2823, %v3017
  %v3019 = vrot.slane %v2833, 1
  %v3020 = vor.u32 %v2830, %v3019
  %v3021 = vrot.slane %v2840, 1
  %v3022 = vor.u32 %v2837, %v3021
  %v3023 = vrot.slane %v2847, 1
  %v3024 = vor.u32 %v2844, %v3023
  %v3025 = vrot.slane %v2854, 1
  %v3026 = vor.u32 %v2851, %v3025
  %v3027 = vrot.slane %v2861, 1
  %v3028 = vor.u32 %v2858, %v3027
  %v3029 = vrot.slane %v2868, 1
  %v3030 = vor.u32 %v2865, %v3029
  %v3031 = vrot.slane %v2875, 1
  %v3032 = vor.u32 %v2872, %v3031
  %v3033 = vrot.slane %v2882, 1
  %v3034 = vor.u32 %v2879, %v3033
  %v3035 = vrot.slane %v2889, 1
  %v3036 = vor.u32 %v2886, %v3035
  %v3037 = vrot.slane %v2896, 1
  %v3038 = vor.u32 %v2893, %v3037
  %v3039 = vrot.slane %v2903, 1
  %v3040 = vor.u32 %v2900, %v3039
  %v3041 = vrot.slane %v2910, 1
  %v3042 = vor.u32 %v2907, %v3041
  %v3043 = vrot.slane %v2917, 1
  %v3044 = vor.u32 %v2914, %v3043
  %v3045 = vrot.slane %v2924, 1
  %v3046 = vor.u32 %v2921, %v3045
  %v3077 = vsel %vm500, %v2988, 0
  %v3078 = vsel %vm500, %v2990, 0
  %v3079 = vsel %vm500, %v2992, 0
  %v3080 = vsel %vm500, %v2994, 0
  %v3081 = vsel %vm500, %v2996, 0
  %v3082 = vsel %vm500, %v2998, 0
  %v3083 = vsel %vm500, %v3000, 0
  %v3084 = vsel %vm500, %v3002, 0
  %v3085 = vsel %vm500, %v3004, 0
  %v3086 = vsel %vm500, %v3006, 0
  %v3087 = vsel %vm500, %v3008, 0
  %v3088 = vsel %vm500, %v3010, 0
  %v3089 = vsel %vm500, %v3012, 0
  %v3090 = vsel %vm500, %v3014, 0
  %v3091 = vsel %vm500, %v3016, 0
  %v3092 = vsel %vm500, %v3018, 0
  %v3093 = vsel %vm500, %v3020, 0
  %v3094 = vsel %vm500, %v3022, 0
  %v3095 = vsel %vm500, %v3024, 0
  %v3096 = vsel %vm500, %v3026, 0
  %v3097 = vsel %vm500, %v3028, 0
  %v3098 = vsel %vm500, %v3030, 0
  %v3099 = vsel %vm500, %v3032, 0
  %v3100 = vsel %vm500, %v3034, 0
  %v3101 = vsel %vm500, %v3036, 0
  %v3102 = vsel %vm500, %v3038, 0
  %v3103 = vsel %vm500, %v3040, 0
  %v3104 = vsel %vm500, %v3042, 0
  %v3105 = vsel %vm500, %v3044, 0
  %v3106 = vsel %vm500, %v3046, 0
  %v3108 = vshrl.u32 %v2700, 16
  %v3110 = vrot.slane %v3108, 7
  %v3111 = vshll.u32 %v2700, 16
  %v3113 = vor.u32 %v3110, %v3111
  %v3115 = vshrl.u32 %v2716, 16
  %v3117 = vrot.slane %v3115, 7
  %v3118 = vshll.u32 %v2716, 16
  %v3120 = vor.u32 %v3117, %v3118
  %v3123 = vsel %vm373, 0, %v3113
  %v3124 = vsel %vm373, 0, %v3120
  %v3125 = vrot.slane %v3111, 1
  %v3126 = vor.u32 %v3108, %v3125
  %v3127 = vrot.slane %v3118, 1
  %v3128 = vor.u32 %v3115, %v3127
  %v3131 = vsel %vm500, %v3126, 0
  %v3132 = vsel %vm500, %v3128, 0
  %3163 = vrot.lane.b32.xlu0 %v2685, 4
  %v3164 = vpop.permute.xlu0 %3163
  %3165 = vrot.lane.b32.xlu0 %v2686, 4
  %v3166 = vpop.permute.xlu0 %3165
  %3167 = vrot.lane.b32.xlu0 %v2687, 4
  %v3168 = vpop.permute.xlu0 %3167
  %3169 = vrot.lane.b32.xlu0 %v2688, 4
  %v3170 = vpop.permute.xlu0 %3169
  %3171 = vrot.lane.b32.xlu0 %v2689, 4
  %v3172 = vpop.permute.xlu0 %3171
  %3173 = vrot.lane.b32.xlu0 %v2690, 4
  %v3174 = vpop.permute.xlu0 %3173
  %3175 = vrot.lane.b32.xlu0 %v2691, 4
  %v3176 = vpop.permute.xlu0 %3175
  %3177 = vrot.lane.b32.xlu0 %v2692, 4
  %v3178 = vpop.permute.xlu0 %3177
  %3179 = vrot.lane.b32.xlu0 %v2693, 4
  %v3180 = vpop.permute.xlu0 %3179
  %3181 = vrot.lane.b32.xlu0 %v2694, 4
  %v3182 = vpop.permute.xlu0 %3181
  %3183 = vrot.lane.b32.xlu0 %v2695, 4
  %v3184 = vpop.permute.xlu0 %3183
  %3185 = vrot.lane.b32.xlu0 %v2696, 4
  %v3186 = vpop.permute.xlu0 %3185
  %3187 = vrot.lane.b32.xlu0 %v2697, 4
  %v3188 = vpop.permute.xlu0 %3187
  %3189 = vrot.lane.b32.xlu0 %v2698, 4
  %v3190 = vpop.permute.xlu0 %3189
  %3191 = vrot.lane.b32.xlu0 %v2699, 4
  %v3192 = vpop.permute.xlu0 %3191
  %3193 = vrot.lane.b32.xlu0 %v2701, 4
  %v3194 = vpop.permute.xlu0 %3193
  %3195 = vrot.lane.b32.xlu0 %v2702, 4
  %v3196 = vpop.permute.xlu0 %3195
  %3197 = vrot.lane.b32.xlu0 %v2703, 4
  %v3198 = vpop.permute.xlu0 %3197
  %3199 = vrot.lane.b32.xlu0 %v2704, 4
  %v3200 = vpop.permute.xlu0 %3199
  %3201 = vrot.lane.b32.xlu0 %v2705, 4
  %v3202 = vpop.permute.xlu0 %3201
  %3203 = vrot.lane.b32.xlu0 %v2706, 4
  %v3204 = vpop.permute.xlu0 %3203
  %3205 = vrot.lane.b32.xlu0 %v2707, 4
  %v3206 = vpop.permute.xlu0 %3205
  %3207 = vrot.lane.b32.xlu0 %v2708, 4
  %v3208 = vpop.permute.xlu0 %3207
  %3209 = vrot.lane.b32.xlu0 %v2709, 4
  %v3210 = vpop.permute.xlu0 %3209
  %3211 = vrot.lane.b32.xlu0 %v2710, 4
  %v3212 = vpop.permute.xlu0 %3211
  %3213 = vrot.lane.b32.xlu0 %v2711, 4
  %v3214 = vpop.permute.xlu0 %3213
  %3215 = vrot.lane.b32.xlu0 %v2712, 4
  %v3216 = vpop.permute.xlu0 %3215
  %3217 = vrot.lane.b32.xlu0 %v2713, 4
  %v3218 = vpop.permute.xlu0 %3217
  %3219 = vrot.lane.b32.xlu0 %v2714, 4
  %v3220 = vpop.permute.xlu0 %3219
  %3221 = vrot.lane.b32.xlu0 %v2715, 4
  %v3222 = vpop.permute.xlu0 %3221
  %3253 = vrot.lane.b32.xlu0 %v3077, 8
  %v3254 = vpop.permute.xlu0 %3253
  %3255 = vrot.lane.b32.xlu0 %v3078, 8
  %v3256 = vpop.permute.xlu0 %3255
  %3257 = vrot.lane.b32.xlu0 %v3079, 8
  %v3258 = vpop.permute.xlu0 %3257
  %3259 = vrot.lane.b32.xlu0 %v3080, 8
  %v3260 = vpop.permute.xlu0 %3259
  %3261 = vrot.lane.b32.xlu0 %v3081, 8
  %v3262 = vpop.permute.xlu0 %3261
  %3263 = vrot.lane.b32.xlu0 %v3082, 8
  %v3264 = vpop.permute.xlu0 %3263
  %3265 = vrot.lane.b32.xlu0 %v3083, 8
  %v3266 = vpop.permute.xlu0 %3265
  %3267 = vrot.lane.b32.xlu0 %v3084, 8
  %v3268 = vpop.permute.xlu0 %3267
  %3269 = vrot.lane.b32.xlu0 %v3085, 8
  %v3270 = vpop.permute.xlu0 %3269
  %3271 = vrot.lane.b32.xlu0 %v3086, 8
  %v3272 = vpop.permute.xlu0 %3271
  %3273 = vrot.lane.b32.xlu0 %v3087, 8
  %v3274 = vpop.permute.xlu0 %3273
  %3275 = vrot.lane.b32.xlu0 %v3088, 8
  %v3276 = vpop.permute.xlu0 %3275
  %3277 = vrot.lane.b32.xlu0 %v3089, 8
  %v3278 = vpop.permute.xlu0 %3277
  %3279 = vrot.lane.b32.xlu0 %v3090, 8
  %v3280 = vpop.permute.xlu0 %3279
  %3281 = vrot.lane.b32.xlu0 %v3091, 8
  %v3282 = vpop.permute.xlu0 %3281
  %3283 = vrot.lane.b32.xlu0 %v3092, 8
  %v3284 = vpop.permute.xlu0 %3283
  %3285 = vrot.lane.b32.xlu0 %v3093, 8
  %v3286 = vpop.permute.xlu0 %3285
  %3287 = vrot.lane.b32.xlu0 %v3094, 8
  %v3288 = vpop.permute.xlu0 %3287
  %3289 = vrot.lane.b32.xlu0 %v3095, 8
  %v3290 = vpop.permute.xlu0 %3289
  %3291 = vrot.lane.b32.xlu0 %v3096, 8
  %v3292 = vpop.permute.xlu0 %3291
  %3293 = vrot.lane.b32.xlu0 %v3097, 8
  %v3294 = vpop.permute.xlu0 %3293
  %3295 = vrot.lane.b32.xlu0 %v3098, 8
  %v3296 = vpop.permute.xlu0 %3295
  %3297 = vrot.lane.b32.xlu0 %v3099, 8
  %v3298 = vpop.permute.xlu0 %3297
  %3299 = vrot.lane.b32.xlu0 %v3100, 8
  %v3300 = vpop.permute.xlu0 %3299
  %3301 = vrot.lane.b32.xlu0 %v3101, 8
  %v3302 = vpop.permute.xlu0 %3301
  %3303 = vrot.lane.b32.xlu0 %v3102, 8
  %v3304 = vpop.permute.xlu0 %3303
  %3305 = vrot.lane.b32.xlu0 %v3103, 8
  %v3306 = vpop.permute.xlu0 %3305
  %3307 = vrot.lane.b32.xlu0 %v3104, 8
  %v3308 = vpop.permute.xlu0 %3307
  %3309 = vrot.lane.b32.xlu0 %v3105, 8
  %v3310 = vpop.permute.xlu0 %3309
  %3311 = vrot.lane.b32.xlu0 %v3106, 8
  %v3312 = vpop.permute.xlu0 %3311
  %3345 = vrot.lane.b32.xlu0 %v2957, 12
  %v3346 = vpop.permute.xlu0 %3345
  %3347 = vrot.lane.b32.xlu0 %v2958, 12
  %v3348 = vpop.permute.xlu0 %3347
  %3349 = vrot.lane.b32.xlu0 %v2959, 12
  %v3350 = vpop.permute.xlu0 %3349
  %3351 = vrot.lane.b32.xlu0 %v2960, 12
  %v3352 = vpop.permute.xlu0 %3351
  %3353 = vrot.lane.b32.xlu0 %v2961, 12
  %v3354 = vpop.permute.xlu0 %3353
  %3355 = vrot.lane.b32.xlu0 %v2962, 12
  %v3356 = vpop.permute.xlu0 %3355
  %3357 = vrot.lane.b32.xlu0 %v2963, 12
  %v3358 = vpop.permute.xlu0 %3357
  %3359 = vrot.lane.b32.xlu0 %v2964, 12
  %v3360 = vpop.permute.xlu0 %3359
  %3361 = vrot.lane.b32.xlu0 %v2965, 12
  %v3362 = vpop.permute.xlu0 %3361
  %3363 = vrot.lane.b32.xlu0 %v2966, 12
  %v3364 = vpop.permute.xlu0 %3363
  %3365 = vrot.lane.b32.xlu0 %v2967, 12
  %v3366 = vpop.permute.xlu0 %3365
  %3367 = vrot.lane.b32.xlu0 %v2968, 12
  %v3368 = vpop.permute.xlu0 %3367
  %3369 = vrot.lane.b32.xlu0 %v2969, 12
  %v3370 = vpop.permute.xlu0 %3369
  %3371 = vrot.lane.b32.xlu0 %v2970, 12
  %v3372 = vpop.permute.xlu0 %3371
  %3373 = vrot.lane.b32.xlu0 %v2971, 12
  %v3374 = vpop.permute.xlu0 %3373
  %3375 = vrot.lane.b32.xlu0 %v3123, 12
  %v3376 = vpop.permute.xlu0 %3375
  %3377 = vrot.lane.b32.xlu0 %v2972, 12
  %v3378 = vpop.permute.xlu0 %3377
  %3379 = vrot.lane.b32.xlu0 %v2973, 12
  %v3380 = vpop.permute.xlu0 %3379
  %3381 = vrot.lane.b32.xlu0 %v2974, 12
  %v3382 = vpop.permute.xlu0 %3381
  %3383 = vrot.lane.b32.xlu0 %v2975, 12
  %v3384 = vpop.permute.xlu0 %3383
  %3385 = vrot.lane.b32.xlu0 %v2976, 12
  %v3386 = vpop.permute.xlu0 %3385
  %3387 = vrot.lane.b32.xlu0 %v2977, 12
  %v3388 = vpop.permute.xlu0 %3387
  %3389 = vrot.lane.b32.xlu0 %v2978, 12
  %v3390 = vpop.permute.xlu0 %3389
  %3391 = vrot.lane.b32.xlu0 %v2979, 12
  %v3392 = vpop.permute.xlu0 %3391
  %3393 = vrot.lane.b32.xlu0 %v2980, 12
  %v3394 = vpop.permute.xlu0 %3393
  %3395 = vrot.lane.b32.xlu0 %v2981, 12
  %v3396 = vpop.permute.xlu0 %3395
  %3397 = vrot.lane.b32.xlu0 %v2982, 12
  %v3398 = vpop.permute.xlu0 %3397
  %3399 = vrot.lane.b32.xlu0 %v2983, 12
  %v3400 = vpop.permute.xlu0 %3399
  %3401 = vrot.lane.b32.xlu0 %v2984, 12
  %v3402 = vpop.permute.xlu0 %3401
  %3403 = vrot.lane.b32.xlu0 %v2985, 12
  %v3404 = vpop.permute.xlu0 %3403
  %3405 = vrot.lane.b32.xlu0 %v2986, 12
  %v3406 = vpop.permute.xlu0 %3405
  %3407 = vrot.lane.b32.xlu0 %v3124, 12
  %v3408 = vpop.permute.xlu0 %3407
  %3411 = vrot.lane.b32.xlu0 %v2685, 16
  %v3412 = vpop.permute.xlu0 %3411
  %3413 = vrot.lane.b32.xlu0 %v2686, 16
  %v3414 = vpop.permute.xlu0 %3413
  %3415 = vrot.lane.b32.xlu0 %v2687, 16
  %v3416 = vpop.permute.xlu0 %3415
  %3417 = vrot.lane.b32.xlu0 %v2688, 16
  %v3418 = vpop.permute.xlu0 %3417
  %3419 = vrot.lane.b32.xlu0 %v2689, 16
  %v3420 = vpop.permute.xlu0 %3419
  %3421 = vrot.lane.b32.xlu0 %v2690, 16
  %v3422 = vpop.permute.xlu0 %3421
  %3423 = vrot.lane.b32.xlu0 %v2691, 16
  %v3424 = vpop.permute.xlu0 %3423
  %3425 = vrot.lane.b32.xlu0 %v2692, 16
  %v3426 = vpop.permute.xlu0 %3425
  %3427 = vrot.lane.b32.xlu0 %v2693, 16
  %v3428 = vpop.permute.xlu0 %3427
  %3429 = vrot.lane.b32.xlu0 %v2694, 16
  %v3430 = vpop.permute.xlu0 %3429
  %3431 = vrot.lane.b32.xlu0 %v2695, 16
  %v3432 = vpop.permute.xlu0 %3431
  %3433 = vrot.lane.b32.xlu0 %v2696, 16
  %v3434 = vpop.permute.xlu0 %3433
  %3435 = vrot.lane.b32.xlu0 %v2697, 16
  %v3436 = vpop.permute.xlu0 %3435
  %3437 = vrot.lane.b32.xlu0 %v2698, 16
  %v3438 = vpop.permute.xlu0 %3437
  %3439 = vrot.lane.b32.xlu0 %v2699, 16
  %v3440 = vpop.permute.xlu0 %3439
  %3441 = vrot.lane.b32.xlu0 %v2700, 16
  %v3442 = vpop.permute.xlu0 %3441
  %3443 = vrot.lane.b32.xlu0 %v2701, 16
  %v3444 = vpop.permute.xlu0 %3443
  %3445 = vrot.lane.b32.xlu0 %v2702, 16
  %v3446 = vpop.permute.xlu0 %3445
  %3447 = vrot.lane.b32.xlu0 %v2703, 16
  %v3448 = vpop.permute.xlu0 %3447
  %3449 = vrot.lane.b32.xlu0 %v2704, 16
  %v3450 = vpop.permute.xlu0 %3449
  %3451 = vrot.lane.b32.xlu0 %v2705, 16
  %v3452 = vpop.permute.xlu0 %3451
  %3453 = vrot.lane.b32.xlu0 %v2706, 16
  %v3454 = vpop.permute.xlu0 %3453
  %3455 = vrot.lane.b32.xlu0 %v2707, 16
  %v3456 = vpop.permute.xlu0 %3455
  %3457 = vrot.lane.b32.xlu0 %v2708, 16
  %v3458 = vpop.permute.xlu0 %3457
  %3459 = vrot.lane.b32.xlu0 %v2709, 16
  %v3460 = vpop.permute.xlu0 %3459
  %3461 = vrot.lane.b32.xlu0 %v2710, 16
  %v3462 = vpop.permute.xlu0 %3461
  %3463 = vrot.lane.b32.xlu0 %v2711, 16
  %v3464 = vpop.permute.xlu0 %3463
  %3465 = vrot.lane.b32.xlu0 %v2712, 16
  %v3466 = vpop.permute.xlu0 %3465
  %3467 = vrot.lane.b32.xlu0 %v2713, 16
  %v3468 = vpop.permute.xlu0 %3467
  %3469 = vrot.lane.b32.xlu0 %v2714, 16
  %v3470 = vpop.permute.xlu0 %3469
  %3471 = vrot.lane.b32.xlu0 %v2715, 16
  %v3472 = vpop.permute.xlu0 %3471
  %3473 = vrot.lane.b32.xlu0 %v2716, 16
  %v3474 = vpop.permute.xlu0 %3473
  %3477 = vrot.lane.b32.xlu0 %v3077, 20
  %v3478 = vpop.permute.xlu0 %3477
  %3479 = vrot.lane.b32.xlu0 %v3078, 20
  %v3480 = vpop.permute.xlu0 %3479
  %3481 = vrot.lane.b32.xlu0 %v3079, 20
  %v3482 = vpop.permute.xlu0 %3481
  %3483 = vrot.lane.b32.xlu0 %v3080, 20
  %v3484 = vpop.permute.xlu0 %3483
  %3485 = vrot.lane.b32.xlu0 %v3081, 20
  %v3486 = vpop.permute.xlu0 %3485
  %3487 = vrot.lane.b32.xlu0 %v3082, 20
  %v3488 = vpop.permute.xlu0 %3487
  %3489 = vrot.lane.b32.xlu0 %v3083, 20
  %v3490 = vpop.permute.xlu0 %3489
  %3491 = vrot.lane.b32.xlu0 %v3084, 20
  %v3492 = vpop.permute.xlu0 %3491
  %3493 = vrot.lane.b32.xlu0 %v3085, 20
  %v3494 = vpop.permute.xlu0 %3493
  %3495 = vrot.lane.b32.xlu0 %v3086, 20
  %v3496 = vpop.permute.xlu0 %3495
  %3497 = vrot.lane.b32.xlu0 %v3087, 20
  %v3498 = vpop.permute.xlu0 %3497
  %3499 = vrot.lane.b32.xlu0 %v3088, 20
  %v3500 = vpop.permute.xlu0 %3499
  %3501 = vrot.lane.b32.xlu0 %v3089, 20
  %v3502 = vpop.permute.xlu0 %3501
  %3503 = vrot.lane.b32.xlu0 %v3090, 20
  %v3504 = vpop.permute.xlu0 %3503
  %3505 = vrot.lane.b32.xlu0 %v3091, 20
  %v3506 = vpop.permute.xlu0 %3505
  %3507 = vrot.lane.b32.xlu0 %v3131, 20
  %v3508 = vpop.permute.xlu0 %3507
  %3509 = vrot.lane.b32.xlu0 %v3092, 20
  %v3510 = vpop.permute.xlu0 %3509
  %3511 = vrot.lane.b32.xlu0 %v3093, 20
  %v3512 = vpop.permute.xlu0 %3511
  %3513 = vrot.lane.b32.xlu0 %v3094, 20
  %v3514 = vpop.permute.xlu0 %3513
  %3515 = vrot.lane.b32.xlu0 %v3095, 20
  %v3516 = vpop.permute.xlu0 %3515
  %3517 = vrot.lane.b32.xlu0 %v3096, 20
  %v3518 = vpop.permute.xlu0 %3517
  %3519 = vrot.lane.b32.xlu0 %v3097, 20
  %v3520 = vpop.permute.xlu0 %3519
  %3521 = vrot.lane.b32.xlu0 %v3098, 20
  %v3522 = vpop.permute.xlu0 %3521
  %3523 = vrot.lane.b32.xlu0 %v3099, 20
  %v3524 = vpop.permute.xlu0 %3523
  %3525 = vrot.lane.b32.xlu0 %v3100, 20
  %v3526 = vpop.permute.xlu0 %3525
  %3527 = vrot.lane.b32.xlu0 %v3101, 20
  %v3528 = vpop.permute.xlu0 %3527
  %3529 = vrot.lane.b32.xlu0 %v3102, 20
  %v3530 = vpop.permute.xlu0 %3529
  %3531 = vrot.lane.b32.xlu0 %v3103, 20
  %v3532 = vpop.permute.xlu0 %3531
  %3533 = vrot.lane.b32.xlu0 %v3104, 20
  %v3534 = vpop.permute.xlu0 %3533
  %3535 = vrot.lane.b32.xlu0 %v3105, 20
  %v3536 = vpop.permute.xlu0 %3535
  %3537 = vrot.lane.b32.xlu0 %v3106, 20
  %v3538 = vpop.permute.xlu0 %3537
  %3539 = vrot.lane.b32.xlu0 %v3132, 20
  %v3540 = vpop.permute.xlu0 %3539
  %3541 = vrot.lane.b32.xlu0 %v2958, 24
  %v3542 = vpop.permute.xlu0 %3541
  %3543 = vrot.lane.b32.xlu0 %v2959, 24
  %v3544 = vpop.permute.xlu0 %3543
  %3545 = vrot.lane.b32.xlu0 %v2960, 24
  %v3546 = vpop.permute.xlu0 %3545
  %3547 = vrot.lane.b32.xlu0 %v2961, 24
  %v3548 = vpop.permute.xlu0 %3547
  %3549 = vrot.lane.b32.xlu0 %v2962, 24
  %v3550 = vpop.permute.xlu0 %3549
  %3551 = vrot.lane.b32.xlu0 %v2963, 24
  %v3552 = vpop.permute.xlu0 %3551
  %3553 = vrot.lane.b32.xlu0 %v2964, 24
  %v3554 = vpop.permute.xlu0 %3553
  %3555 = vrot.lane.b32.xlu0 %v2965, 24
  %v3556 = vpop.permute.xlu0 %3555
  %3557 = vrot.lane.b32.xlu0 %v2966, 24
  %v3558 = vpop.permute.xlu0 %3557
  %3559 = vrot.lane.b32.xlu0 %v2967, 24
  %v3560 = vpop.permute.xlu0 %3559
  %3561 = vrot.lane.b32.xlu0 %v2968, 24
  %v3562 = vpop.permute.xlu0 %3561
  %3563 = vrot.lane.b32.xlu0 %v2969, 24
  %v3564 = vpop.permute.xlu0 %3563
  %3565 = vrot.lane.b32.xlu0 %v2970, 24
  %v3566 = vpop.permute.xlu0 %3565
  %3567 = vrot.lane.b32.xlu0 %v2971, 24
  %v3568 = vpop.permute.xlu0 %3567
  %3569 = vrot.lane.b32.xlu0 %v3123, 24
  %v3570 = vpop.permute.xlu0 %3569
  %3571 = vrot.lane.b32.xlu0 %v2973, 24
  %v3572 = vpop.permute.xlu0 %3571
  %3573 = vrot.lane.b32.xlu0 %v2974, 24
  %v3574 = vpop.permute.xlu0 %3573
  %3575 = vrot.lane.b32.xlu0 %v2975, 24
  %v3576 = vpop.permute.xlu0 %3575
  %3577 = vrot.lane.b32.xlu0 %v2976, 24
  %v3578 = vpop.permute.xlu0 %3577
  %3579 = vrot.lane.b32.xlu0 %v2977, 24
  %v3580 = vpop.permute.xlu0 %3579
  %3581 = vrot.lane.b32.xlu0 %v2978, 24
  %v3582 = vpop.permute.xlu0 %3581
  %3583 = vrot.lane.b32.xlu0 %v2979, 24
  %v3584 = vpop.permute.xlu0 %3583
  %3585 = vrot.lane.b32.xlu0 %v2980, 24
  %v3586 = vpop.permute.xlu0 %3585
  %3587 = vrot.lane.b32.xlu0 %v2981, 24
  %v3588 = vpop.permute.xlu0 %3587
  %3589 = vrot.lane.b32.xlu0 %v2982, 24
  %v3590 = vpop.permute.xlu0 %3589
  %3591 = vrot.lane.b32.xlu0 %v2983, 24
  %v3592 = vpop.permute.xlu0 %3591
  %3593 = vrot.lane.b32.xlu0 %v2984, 24
  %v3594 = vpop.permute.xlu0 %3593
  %3595 = vrot.lane.b32.xlu0 %v2985, 24
  %v3596 = vpop.permute.xlu0 %3595
  %3597 = vrot.lane.b32.xlu0 %v2986, 24
  %v3598 = vpop.permute.xlu0 %3597
  %3599 = vrot.lane.b32.xlu0 %v3124, 24
  %v3600 = vpop.permute.xlu0 %3599
  %3601 = vrot.lane.b32.xlu0 %v2686, 28
  %v3602 = vpop.permute.xlu0 %3601
  %3603 = vrot.lane.b32.xlu0 %v2687, 28
  %v3604 = vpop.permute.xlu0 %3603
  %3605 = vrot.lane.b32.xlu0 %v2688, 28
  %v3606 = vpop.permute.xlu0 %3605
  %3607 = vrot.lane.b32.xlu0 %v2689, 28
  %v3608 = vpop.permute.xlu0 %3607
  %3609 = vrot.lane.b32.xlu0 %v2690, 28
  %v3610 = vpop.permute.xlu0 %3609
  %3611 = vrot.lane.b32.xlu0 %v2691, 28
  %v3612 = vpop.permute.xlu0 %3611
  %3613 = vrot.lane.b32.xlu0 %v2692, 28
  %v3614 = vpop.permute.xlu0 %3613
  %3615 = vrot.lane.b32.xlu0 %v2693, 28
  %v3616 = vpop.permute.xlu0 %3615
  %3617 = vrot.lane.b32.xlu0 %v2694, 28
  %v3618 = vpop.permute.xlu0 %3617
  %3619 = vrot.lane.b32.xlu0 %v2695, 28
  %v3620 = vpop.permute.xlu0 %3619
  %3621 = vrot.lane.b32.xlu0 %v2696, 28
  %v3622 = vpop.permute.xlu0 %3621
  %3623 = vrot.lane.b32.xlu0 %v2697, 28
  %v3624 = vpop.permute.xlu0 %3623
  %3625 = vrot.lane.b32.xlu0 %v2698, 28
  %v3626 = vpop.permute.xlu0 %3625
  %3627 = vrot.lane.b32.xlu0 %v2699, 28
  %v3628 = vpop.permute.xlu0 %3627
  %3629 = vrot.lane.b32.xlu0 %v2700, 28
  %v3630 = vpop.permute.xlu0 %3629
  %3631 = vrot.lane.b32.xlu0 %v2702, 28
  %v3632 = vpop.permute.xlu0 %3631
  %3633 = vrot.lane.b32.xlu0 %v2703, 28
  %v3634 = vpop.permute.xlu0 %3633
  %3635 = vrot.lane.b32.xlu0 %v2704, 28
  %v3636 = vpop.permute.xlu0 %3635
  %3637 = vrot.lane.b32.xlu0 %v2705, 28
  %v3638 = vpop.permute.xlu0 %3637
  %3639 = vrot.lane.b32.xlu0 %v2706, 28
  %v3640 = vpop.permute.xlu0 %3639
  %3641 = vrot.lane.b32.xlu0 %v2707, 28
  %v3642 = vpop.permute.xlu0 %3641
  %3643 = vrot.lane.b32.xlu0 %v2708, 28
  %v3644 = vpop.permute.xlu0 %3643
  %3645 = vrot.lane.b32.xlu0 %v2709, 28
  %v3646 = vpop.permute.xlu0 %3645
  %3647 = vrot.lane.b32.xlu0 %v2710, 28
  %v3648 = vpop.permute.xlu0 %3647
  %3649 = vrot.lane.b32.xlu0 %v2711, 28
  %v3650 = vpop.permute.xlu0 %3649
  %3651 = vrot.lane.b32.xlu0 %v2712, 28
  %v3652 = vpop.permute.xlu0 %3651
  %3653 = vrot.lane.b32.xlu0 %v2713, 28
  %v3654 = vpop.permute.xlu0 %3653
  %3655 = vrot.lane.b32.xlu0 %v2714, 28
  %v3656 = vpop.permute.xlu0 %3655
  %3657 = vrot.lane.b32.xlu0 %v2715, 28
  %v3658 = vpop.permute.xlu0 %3657
  %3659 = vrot.lane.b32.xlu0 %v2716, 28
  %v3660 = vpop.permute.xlu0 %3659
  %3661 = vrot.lane.b32.xlu0 %v3078, 32
  %v3662 = vpop.permute.xlu0 %3661
  %3663 = vrot.lane.b32.xlu0 %v3079, 32
  %v3664 = vpop.permute.xlu0 %3663
  %3665 = vrot.lane.b32.xlu0 %v3080, 32
  %v3666 = vpop.permute.xlu0 %3665
  %3667 = vrot.lane.b32.xlu0 %v3081, 32
  %v3668 = vpop.permute.xlu0 %3667
  %3669 = vrot.lane.b32.xlu0 %v3082, 32
  %v3670 = vpop.permute.xlu0 %3669
  %3671 = vrot.lane.b32.xlu0 %v3083, 32
  %v3672 = vpop.permute.xlu0 %3671
  %3673 = vrot.lane.b32.xlu0 %v3084, 32
  %v3674 = vpop.permute.xlu0 %3673
  %3675 = vrot.lane.b32.xlu0 %v3085, 32
  %v3676 = vpop.permute.xlu0 %3675
  %3677 = vrot.lane.b32.xlu0 %v3086, 32
  %v3678 = vpop.permute.xlu0 %3677
  %3679 = vrot.lane.b32.xlu0 %v3087, 32
  %v3680 = vpop.permute.xlu0 %3679
  %3681 = vrot.lane.b32.xlu0 %v3088, 32
  %v3682 = vpop.permute.xlu0 %3681
  %3683 = vrot.lane.b32.xlu0 %v3089, 32
  %v3684 = vpop.permute.xlu0 %3683
  %3685 = vrot.lane.b32.xlu0 %v3090, 32
  %v3686 = vpop.permute.xlu0 %3685
  %3687 = vrot.lane.b32.xlu0 %v3091, 32
  %v3688 = vpop.permute.xlu0 %3687
  %3689 = vrot.lane.b32.xlu0 %v3131, 32
  %v3690 = vpop.permute.xlu0 %3689
  %3691 = vrot.lane.b32.xlu0 %v3093, 32
  %v3692 = vpop.permute.xlu0 %3691
  %3693 = vrot.lane.b32.xlu0 %v3094, 32
  %v3694 = vpop.permute.xlu0 %3693
  %3695 = vrot.lane.b32.xlu0 %v3095, 32
  %v3696 = vpop.permute.xlu0 %3695
  %3697 = vrot.lane.b32.xlu0 %v3096, 32
  %v3698 = vpop.permute.xlu0 %3697
  %3699 = vrot.lane.b32.xlu0 %v3097, 32
  %v3700 = vpop.permute.xlu0 %3699
  %3701 = vrot.lane.b32.xlu0 %v3098, 32
  %v3702 = vpop.permute.xlu0 %3701
  %3703 = vrot.lane.b32.xlu0 %v3099, 32
  %v3704 = vpop.permute.xlu0 %3703
  %3705 = vrot.lane.b32.xlu0 %v3100, 32
  %v3706 = vpop.permute.xlu0 %3705
  %3707 = vrot.lane.b32.xlu0 %v3101, 32
  %v3708 = vpop.permute.xlu0 %3707
  %3709 = vrot.lane.b32.xlu0 %v3102, 32
  %v3710 = vpop.permute.xlu0 %3709
  %3711 = vrot.lane.b32.xlu0 %v3103, 32
  %v3712 = vpop.permute.xlu0 %3711
  %3713 = vrot.lane.b32.xlu0 %v3104, 32
  %v3714 = vpop.permute.xlu0 %3713
  %3715 = vrot.lane.b32.xlu0 %v3105, 32
  %v3716 = vpop.permute.xlu0 %3715
  %3717 = vrot.lane.b32.xlu0 %v3106, 32
  %v3718 = vpop.permute.xlu0 %3717
  %3719 = vrot.lane.b32.xlu0 %v3132, 32
  %v3720 = vpop.permute.xlu0 %3719
  %v3723 = vsel %vm1159, %v2957, %v3164
  %v3726 = vsel %vm1159, %v2958, %v3166
  %v3729 = vsel %vm1159, %v2959, %v3168
  %v3732 = vsel %vm1159, %v2960, %v3170
  %v3735 = vsel %vm1159, %v2961, %v3172
  %v3738 = vsel %vm1159, %v2962, %v3174
  %v3741 = vsel %vm1159, %v2963, %v3176
  %v3744 = vsel %vm1159, %v2964, %v3178
  %v3747 = vsel %vm1159, %v2965, %v3180
  %v3750 = vsel %vm1159, %v2966, %v3182
  %v3753 = vsel %vm1159, %v2967, %v3184
  %v3756 = vsel %vm1159, %v2968, %v3186
  %v3759 = vsel %vm1159, %v2969, %v3188
  %v3762 = vsel %vm1159, %v2970, %v3190
  %v3765 = vsel %vm1159, %v2971, %v3192
  %v3768 = vsel %vm1159, %v2972, %v3194
  %v3771 = vsel %vm1159, %v2973, %v3196
  %v3774 = vsel %vm1159, %v2974, %v3198
  %v3777 = vsel %vm1159, %v2975, %v3200
  %v3780 = vsel %vm1159, %v2976, %v3202
  %v3783 = vsel %vm1159, %v2977, %v3204
  %v3786 = vsel %vm1159, %v2978, %v3206
  %v3789 = vsel %vm1159, %v2979, %v3208
  %v3792 = vsel %vm1159, %v2980, %v3210
  %v3795 = vsel %vm1159, %v2981, %v3212
  %v3798 = vsel %vm1159, %v2982, %v3214
  %v3801 = vsel %vm1159, %v2983, %v3216
  %v3804 = vsel %vm1159, %v2984, %v3218
  %v3807 = vsel %vm1159, %v2985, %v3220
  %v3810 = vsel %vm1159, %v2986, %v3222
  %v3812 = vsel %vm1253, %v3723, %v3254
  %v3814 = vsel %vm1253, %v3726, %v3256
  %v3816 = vsel %vm1253, %v3729, %v3258
  %v3818 = vsel %vm1253, %v3732, %v3260
  %v3820 = vsel %vm1253, %v3735, %v3262
  %v3822 = vsel %vm1253, %v3738, %v3264
  %v3824 = vsel %vm1253, %v3741, %v3266
  %v3826 = vsel %vm1253, %v3744, %v3268
  %v3828 = vsel %vm1253, %v3747, %v3270
  %v3830 = vsel %vm1253, %v3750, %v3272
  %v3832 = vsel %vm1253, %v3753, %v3274
  %v3834 = vsel %vm1253, %v3756, %v3276
  %v3836 = vsel %vm1253, %v3759, %v3278
  %v3838 = vsel %vm1253, %v3762, %v3280
  %v3840 = vsel %vm1253, %v3765, %v3282
  %v3842 = vsel %vm1253, %v3768, %v3284
  %v3844 = vsel %vm1253, %v3771, %v3286
  %v3846 = vsel %vm1253, %v3774, %v3288
  %v3848 = vsel %vm1253, %v3777, %v3290
  %v3850 = vsel %vm1253, %v3780, %v3292
  %v3852 = vsel %vm1253, %v3783, %v3294
  %v3854 = vsel %vm1253, %v3786, %v3296
  %v3856 = vsel %vm1253, %v3789, %v3298
  %v3858 = vsel %vm1253, %v3792, %v3300
  %v3860 = vsel %vm1253, %v3795, %v3302
  %v3862 = vsel %vm1253, %v3798, %v3304
  %v3864 = vsel %vm1253, %v3801, %v3306
  %v3866 = vsel %vm1253, %v3804, %v3308
  %v3868 = vsel %vm1253, %v3807, %v3310
  %v3870 = vsel %vm1253, %v3810, %v3312
  %v3872 = vsel %vm1316, %v1255, %v3346
  %v3874 = vsel %vm1316, %v3812, %v3348
  %v3876 = vsel %vm1316, %v3814, %v3350
  %v3878 = vsel %vm1316, %v3816, %v3352
  %v3880 = vsel %vm1316, %v3818, %v3354
  %v3882 = vsel %vm1316, %v3820, %v3356
  %v3884 = vsel %vm1316, %v3822, %v3358
  %v3886 = vsel %vm1316, %v3824, %v3360
  %v3888 = vsel %vm1316, %v3826, %v3362
  %v3890 = vsel %vm1316, %v3828, %v3364
  %v3892 = vsel %vm1316, %v3830, %v3366
  %v3894 = vsel %vm1316, %v3832, %v3368
  %v3896 = vsel %vm1316, %v3834, %v3370
  %v3898 = vsel %vm1316, %v3836, %v3372
  %v3900 = vsel %vm1316, %v3838, %v3374
  %v3902 = vsel %vm1316, %v3840, %v3376
  %v3904 = vsel %vm1316, %v1255, %v3378
  %v3906 = vsel %vm1316, %v3842, %v3380
  %v3908 = vsel %vm1316, %v3844, %v3382
  %v3910 = vsel %vm1316, %v3846, %v3384
  %v3912 = vsel %vm1316, %v3848, %v3386
  %v3914 = vsel %vm1316, %v3850, %v3388
  %v3916 = vsel %vm1316, %v3852, %v3390
  %v3918 = vsel %vm1316, %v3854, %v3392
  %v3920 = vsel %vm1316, %v3856, %v3394
  %v3922 = vsel %vm1316, %v3858, %v3396
  %v3924 = vsel %vm1316, %v3860, %v3398
  %v3926 = vsel %vm1316, %v3862, %v3400
  %v3928 = vsel %vm1316, %v3864, %v3402
  %v3930 = vsel %vm1316, %v3866, %v3404
  %v3932 = vsel %vm1316, %v3868, %v3406
  %v3934 = vsel %vm1316, %v3870, %v3408
  %v3936 = vsel %vm1381, %v3872, %v3412
  %v3938 = vsel %vm1381, %v3874, %v3414
  %v3940 = vsel %vm1381, %v3876, %v3416
  %v3942 = vsel %vm1381, %v3878, %v3418
  %v3944 = vsel %vm1381, %v3880, %v3420
  %v3946 = vsel %vm1381, %v3882, %v3422
  %v3948 = vsel %vm1381, %v3884, %v3424
  %v3950 = vsel %vm1381, %v3886, %v3426
  %v3952 = vsel %vm1381, %v3888, %v3428
  %v3954 = vsel %vm1381, %v3890, %v3430
  %v3956 = vsel %vm1381, %v3892, %v3432
  %v3958 = vsel %vm1381, %v3894, %v3434
  %v3960 = vsel %vm1381, %v3896, %v3436
  %v3962 = vsel %vm1381, %v3898, %v3438
  %v3964 = vsel %vm1381, %v3900, %v3440
  %v3966 = vsel %vm1381, %v3902, %v3442
  %v3968 = vsel %vm1381, %v3904, %v3444
  %v3970 = vsel %vm1381, %v3906, %v3446
  %v3972 = vsel %vm1381, %v3908, %v3448
  %v3974 = vsel %vm1381, %v3910, %v3450
  %v3976 = vsel %vm1381, %v3912, %v3452
  %v3978 = vsel %vm1381, %v3914, %v3454
  %v3980 = vsel %vm1381, %v3916, %v3456
  %v3982 = vsel %vm1381, %v3918, %v3458
  %v3984 = vsel %vm1381, %v3920, %v3460
  %v3986 = vsel %vm1381, %v3922, %v3462
  %v3988 = vsel %vm1381, %v3924, %v3464
  %v3990 = vsel %vm1381, %v3926, %v3466
  %v3992 = vsel %vm1381, %v3928, %v3468
  %v3994 = vsel %vm1381, %v3930, %v3470
  %v3996 = vsel %vm1381, %v3932, %v3472
  %v3998 = vsel %vm1381, %v3934, %v3474
  %v4000 = vsel %vm1446, %v3936, %v3478
  %v4002 = vsel %vm1446, %v3938, %v3480
  %v4004 = vsel %vm1446, %v3940, %v3482
  %v4006 = vsel %vm1446, %v3942, %v3484
  %v4008 = vsel %vm1446, %v3944, %v3486
  %v4010 = vsel %vm1446, %v3946, %v3488
  %v4012 = vsel %vm1446, %v3948, %v3490
  %v4014 = vsel %vm1446, %v3950, %v3492
  %v4016 = vsel %vm1446, %v3952, %v3494
  %v4018 = vsel %vm1446, %v3954, %v3496
  %v4020 = vsel %vm1446, %v3956, %v3498
  %v4022 = vsel %vm1446, %v3958, %v3500
  %v4024 = vsel %vm1446, %v3960, %v3502
  %v4026 = vsel %vm1446, %v3962, %v3504
  %v4028 = vsel %vm1446, %v3964, %v3506
  %v4030 = vsel %vm1446, %v3966, %v3508
  %v4032 = vsel %vm1446, %v3968, %v3510
  %v4034 = vsel %vm1446, %v3970, %v3512
  %v4036 = vsel %vm1446, %v3972, %v3514
  %v4038 = vsel %vm1446, %v3974, %v3516
  %v4040 = vsel %vm1446, %v3976, %v3518
  %v4042 = vsel %vm1446, %v3978, %v3520
  %v4044 = vsel %vm1446, %v3980, %v3522
  %v4046 = vsel %vm1446, %v3982, %v3524
  %v4048 = vsel %vm1446, %v3984, %v3526
  %v4050 = vsel %vm1446, %v3986, %v3528
  %v4052 = vsel %vm1446, %v3988, %v3530
  %v4054 = vsel %vm1446, %v3990, %v3532
  %v4056 = vsel %vm1446, %v3992, %v3534
  %v4058 = vsel %vm1446, %v3994, %v3536
  %v4060 = vsel %vm1446, %v3996, %v3538
  %v4062 = vsel %vm1446, %v3998, %v3540
  %v4064 = vsel %vm1511, %v4000, %v3542
  %v4066 = vsel %vm1511, %v4002, %v3544
  %v4068 = vsel %vm1511, %v4004, %v3546
  %v4070 = vsel %vm1511, %v4006, %v3548
  %v4072 = vsel %vm1511, %v4008, %v3550
  %v4074 = vsel %vm1511, %v4010, %v3552
  %v4076 = vsel %vm1511, %v4012, %v3554
  %v4078 = vsel %vm1511, %v4014, %v3556
  %v4080 = vsel %vm1511, %v4016, %v3558
  %v4082 = vsel %vm1511, %v4018, %v3560
  %v4084 = vsel %vm1511, %v4020, %v3562
  %v4086 = vsel %vm1511, %v4022, %v3564
  %v4088 = vsel %vm1511, %v4024, %v3566
  %v4090 = vsel %vm1511, %v4026, %v3568
  %v4092 = vsel %vm1511, %v4028, %v3570
  %v4093 = vsel %vm1511, %v4030, %v1004
  %v4095 = vsel %vm1511, %v4032, %v3572
  %v4097 = vsel %vm1511, %v4034, %v3574
  %v4099 = vsel %vm1511, %v4036, %v3576
  %v4101 = vsel %vm1511, %v4038, %v3578
  %v4103 = vsel %vm1511, %v4040, %v3580
  %v4105 = vsel %vm1511, %v4042, %v3582
  %v4107 = vsel %vm1511, %v4044, %v3584
  %v4109 = vsel %vm1511, %v4046, %v3586
  %v4111 = vsel %vm1511, %v4048, %v3588
  %v4113 = vsel %vm1511, %v4050, %v3590
  %v4115 = vsel %vm1511, %v4052, %v3592
  %v4117 = vsel %vm1511, %v4054, %v3594
  %v4119 = vsel %vm1511, %v4056, %v3596
  %v4121 = vsel %vm1511, %v4058, %v3598
  %v4123 = vsel %vm1511, %v4060, %v3600
  %v4124 = vsel %vm1511, %v4062, %v1004
  %v4126 = vsel %vm1575, %v4064, %v3602
  %v4128 = vsel %vm1575, %v4066, %v3604
  %v4130 = vsel %vm1575, %v4068, %v3606
  %v4132 = vsel %vm1575, %v4070, %v3608
  %v4134 = vsel %vm1575, %v4072, %v3610
  %v4136 = vsel %vm1575, %v4074, %v3612
  %v4138 = vsel %vm1575, %v4076, %v3614
  %v4140 = vsel %vm1575, %v4078, %v3616
  %v4142 = vsel %vm1575, %v4080, %v3618
  %v4144 = vsel %vm1575, %v4082, %v3620
  %v4146 = vsel %vm1575, %v4084, %v3622
  %v4148 = vsel %vm1575, %v4086, %v3624
  %v4150 = vsel %vm1575, %v4088, %v3626
  %v4152 = vsel %vm1575, %v4090, %v3628
  %v4154 = vsel %vm1575, %v4092, %v3630
  %v4155 = vsel %vm1575, %v4093, %v1066
  %v4157 = vsel %vm1575, %v4095, %v3632
  %v4159 = vsel %vm1575, %v4097, %v3634
  %v4161 = vsel %vm1575, %v4099, %v3636
  %v4163 = vsel %vm1575, %v4101, %v3638
  %v4165 = vsel %vm1575, %v4103, %v3640
  %v4167 = vsel %vm1575, %v4105, %v3642
  %v4169 = vsel %vm1575, %v4107, %v3644
  %v4171 = vsel %vm1575, %v4109, %v3646
  %v4173 = vsel %vm1575, %v4111, %v3648
  %v4175 = vsel %vm1575, %v4113, %v3650
  %v4177 = vsel %vm1575, %v4115, %v3652
  %v4179 = vsel %vm1575, %v4117, %v3654
  %v4181 = vsel %vm1575, %v4119, %v3656
  %v4183 = vsel %vm1575, %v4121, %v3658
  %v4185 = vsel %vm1575, %v4123, %v3660
  %v4186 = vsel %vm1575, %v4124, %v1066
  %v4188 = vsel %vm1639, %v4126, %v3662
  %v4190 = vsel %vm1639, %v4128, %v3664
  %v4192 = vsel %vm1639, %v4130, %v3666
  %v4194 = vsel %vm1639, %v4132, %v3668
  %v4196 = vsel %vm1639, %v4134, %v3670
  %v4198 = vsel %vm1639, %v4136, %v3672
  %v4200 = vsel %vm1639, %v4138, %v3674
  %v4202 = vsel %vm1639, %v4140, %v3676
  %v4204 = vsel %vm1639, %v4142, %v3678
  %v4206 = vsel %vm1639, %v4144, %v3680
  %v4208 = vsel %vm1639, %v4146, %v3682
  %v4210 = vsel %vm1639, %v4148, %v3684
  %v4212 = vsel %vm1639, %v4150, %v3686
  %v4214 = vsel %vm1639, %v4152, %v3688
  %v4216 = vsel %vm1639, %v4154, %v3690
  %v4217 = vsel %vm1639, %v4155, %v1128
  %v4219 = vsel %vm1639, %v4157, %v3692
  %v4221 = vsel %vm1639, %v4159, %v3694
  %v4223 = vsel %vm1639, %v4161, %v3696
  %v4225 = vsel %vm1639, %v4163, %v3698
  %v4227 = vsel %vm1639, %v4165, %v3700
  %v4229 = vsel %vm1639, %v4167, %v3702
  %v4231 = vsel %vm1639, %v4169, %v3704
  %v4233 = vsel %vm1639, %v4171, %v3706
  %v4235 = vsel %vm1639, %v4173, %v3708
  %v4237 = vsel %vm1639, %v4175, %v3710
  %v4239 = vsel %vm1639, %v4177, %v3712
  %v4241 = vsel %vm1639, %v4179, %v3714
  %v4243 = vsel %vm1639, %v4181, %v3716
  %v4245 = vsel %vm1639, %v4183, %v3718
  %v4247 = vsel %vm1639, %v4185, %v3720
  %v4248 = vsel %vm1639, %v4186, %v1128
  %v4249 = vld [vmem:[%s4] sm:$0xf]
  %v4250 = vld [vmem:[%s4 + $0x4] sm:$0xf]
  %v4251 = vld [vmem:[%s4 + $0x8] sm:$0xf]
  %v4252 = vld [vmem:[%s4 + $0xc] sm:$0xf]
  %v4253 = vld [vmem:[%s4 + $0x10] sm:$0x3]
  %v4259 = vunpack.c.l.b16 %v4249
  %v4260 = vunpack.c.l.b16 %v4250
  %v4261 = vunpack.c.l.b16 %v4251
  %v4262 = vunpack.c.l.b16 %v4252
  %v4263 = vunpack.c.l.b16 %v4253
  %v4264 = vpack.c.b16 %v4260, %v4259
  %v4265 = vpack.c.b16 %v4262, %v4261
  %v4266 = vpack.c.b16 %v4263, %v4263
  %v4269 = vsel %vm1723, %v4188, 0
  %v4271 = vsel %vm1723, %v4190, 0
  %v4273 = vsel %vm1723, %v4192, 0
  %v4275 = vsel %vm1723, %v4194, 0
  %v4277 = vsel %vm1723, %v4196, 0
  %v4279 = vsel %vm1723, %v4198, 0
  %v4281 = vsel %vm1723, %v4200, 0
  %v4283 = vsel %vm1723, %v4202, 0
  %v4285 = vsel %vm1723, %v4204, 0
  %v4287 = vsel %vm1723, %v4206, 0
  %v4289 = vsel %vm1723, %v4208, 0
  %v4291 = vsel %vm1723, %v4210, 0
  %v4293 = vsel %vm1723, %v4212, 0
  %v4295 = vsel %vm1723, %v4214, 0
  %v4297 = vsel %vm1723, %v4216, 0
  %v4299 = vsel %vm1723, %v4217, 0
  %v4301 = vsel %vm1723, %v4219, 0
  %v4303 = vsel %vm1723, %v4221, 0
  %v4305 = vsel %vm1723, %v4223, 0
  %v4307 = vsel %vm1723, %v4225, 0
  %v4309 = vsel %vm1723, %v4227, 0
  %v4311 = vsel %vm1723, %v4229, 0
  %v4313 = vsel %vm1723, %v4231, 0
  %v4315 = vsel %vm1723, %v4233, 0
  %v4317 = vsel %vm1723, %v4235, 0
  %v4319 = vsel %vm1723, %v4237, 0
  %v4321 = vsel %vm1723, %v4239, 0
  %v4323 = vsel %vm1723, %v4241, 0
  %v4325 = vsel %vm1723, %v4243, 0
  %v4327 = vsel %vm1723, %v4245, 0
  %v4329 = vsel %vm1723, %v4247, 0
  %v4331 = vsel %vm1723, %v4248, 0
  %v4334 = vsel %vm1788, %v4266, 0
  %4336 = vmatprep.subr.bf16.mxu0 0
  %4337 = vmatpush1.bf16.msra.mxu0 %v4264
  %4338 = vmatprep.subr.bf16.mxu0 0
  %4339 = vmatpush1.bf16.msra.mxu0 %v4265
  %4340 = vmatprep.subr.bf16.mxu0 0
  %4341 = vmatpush1.bf16.msra.mxu0 %v4334
  %4342 = vmatprep.subr.bf16.mxu0 0
  %4343 = vmatpush1.bf16.msra.mxu0 0
  %4344 = vmatprep.subr.bf16.mxu0 0
  %4345 = vmatpush1.bf16.msra.mxu0 0
  %4346 = vmatprep.subr.bf16.mxu0 0
  %4347 = vmatpush1.bf16.msra.mxu0 0
  %4348 = vmatprep.subr.bf16.mxu0 0
  %4349 = vmatpush1.bf16.msra.mxu0 0
  %4350 = vmatprep.subr.bf16.mxu0 0
  %4351 = vmatpush1.bf16.msra.mxu0 0
  %4352 = vmatprep.subr.bf16.mxu0 0
  %4353 = vmatpush1.bf16.msra.mxu0 0
  %4354 = vmatprep.subr.bf16.mxu0 0
  %4355 = vmatpush1.bf16.msra.mxu0 0
  %4356 = vmatprep.subr.bf16.mxu0 0
  %4357 = vmatpush1.bf16.msra.mxu0 0
  %4358 = vmatprep.subr.bf16.mxu0 0
  %4359 = vmatpush1.bf16.msra.mxu0 0
  %4360 = vmatprep.subr.bf16.mxu0 0
  %4361 = vmatpush1.bf16.msra.mxu0 0
  %4362 = vmatprep.subr.bf16.mxu0 0
  %4363 = vmatpush1.bf16.msra.mxu0 0
  %4364 = vmatprep.subr.bf16.mxu0 0
  %4365 = vmatpush1.bf16.msra.mxu0 0
  %4366 = vmatprep.subr.bf16.mxu0 0
  %4367 = vmatpush1.bf16.msra.mxu0 0
  %4368 = vmatprep.mubr.bf16.mxu0 0
  %4369 = vmatmul.mubr.bf16.gmra.mrb[0].mxu0 %v4269
  %v4370 = vpop.f32.mrb[0].mxu0
  %v4371 = vadd.f32 0.0, %v4370
  %v4372 = vpop.f32.mrb[0].mxu0
  %v4373 = vpop.f32.mrb[0].mxu0
  %v4374 = vadd.f32 0.0, %v4373
  %v4375 = vpop.f32.mrb[0].mxu0
  %4376 = vmatprep.mubr.bf16.mxu0 0
  %4377 = vmatmul.mubr.bf16.gmra.mrb[0].mxu0 %v4271
  %v4378 = vpop.f32.mrb[0].mxu0
  %v4379 = vadd.f32 0.0, %v4378
  %v4380 = vpop.f32.mrb[0].mxu0
  %v4381 = vpop.f32.mrb[0].mxu0
  %v4382 = vadd.f32 0.0, %v4381
  %v4383 = vpop.f32.mrb[0].mxu0
  %4384 = vmatprep.mubr.bf16.mxu0 0
  %4385 = vmatmul.mubr.bf16.gmra.mrb[0].mxu0 %v4273
  %v4386 = vpop.f32.mrb[0].mxu0
  %v4387 = vadd.f32 0.0, %v4386
  %v4388 = vpop.f32.mrb[0].mxu0
  %v4389 = vpop.f32.mrb[0].mxu0
  %v4390 = vadd.f32 0.0, %v4389
  %v4391 = vpop.f32.mrb[0].mxu0
  %4392 = vmatprep.mubr.bf16.mxu0 0
  %4393 = vmatmul.mubr.bf16.gmra.mrb[0].mxu0 %v4275
  %v4394 = vpop.f32.mrb[0].mxu0
  %v4395 = vadd.f32 0.0, %v4394
  %v4396 = vpop.f32.mrb[0].mxu0
  %v4397 = vpop.f32.mrb[0].mxu0
  %v4398 = vadd.f32 0.0, %v4397
  %v4399 = vpop.f32.mrb[0].mxu0
  %4400 = vmatprep.mubr.bf16.mxu0 0
  %4401 = vmatmul.mubr.bf16.gmra.mrb[0].mxu0 %v4277
  %v4402 = vpop.f32.mrb[0].mxu0
  %v4403 = vadd.f32 0.0, %v4402
  %v4404 = vpop.f32.mrb[0].mxu0
  %v4405 = vpop.f32.mrb[0].mxu0
  %v4406 = vadd.f32 0.0, %v4405
  %v4407 = vpop.f32.mrb[0].mxu0
  %4408 = vmatprep.mubr.bf16.mxu0 0
  %4409 = vmatmul.mubr.bf16.gmra.mrb[0].mxu0 %v4279
  %v4410 = vpop.f32.mrb[0].mxu0
  %v4411 = vadd.f32 0.0, %v4410
  %v4412 = vpop.f32.mrb[0].mxu0
  %v4413 = vpop.f32.mrb[0].mxu0
  %v4414 = vadd.f32 0.0, %v4413
  %v4415 = vpop.f32.mrb[0].mxu0
  %4416 = vmatprep.mubr.bf16.mxu0 0
  %4417 = vmatmul.mubr.bf16.gmra.mrb[0].mxu0 %v4281
  %v4418 = vpop.f32.mrb[0].mxu0
  %v4419 = vadd.f32 0.0, %v4418
  %v4420 = vpop.f32.mrb[0].mxu0
  %v4421 = vpop.f32.mrb[0].mxu0
  %v4422 = vadd.f32 0.0, %v4421
  %v4423 = vpop.f32.mrb[0].mxu0
  %4424 = vmatprep.mubr.bf16.mxu0 0
  %4425 = vmatmul.mubr.bf16.gmra.mrb[0].mxu0 %v4283
  %v4426 = vpop.f32.mrb[0].mxu0
  %v4427 = vadd.f32 0.0, %v4426
  %v4428 = vpop.f32.mrb[0].mxu0
  %v4429 = vpop.f32.mrb[0].mxu0
  %v4430 = vadd.f32 0.0, %v4429
  %v4431 = vpop.f32.mrb[0].mxu0
  %4432 = vmatprep.mubr.bf16.mxu0 0
  %4433 = vmatmul.mubr.bf16.gmra.mrb[0].mxu0 %v4285
  %v4434 = vpop.f32.mrb[0].mxu0
  %v4435 = vadd.f32 0.0, %v4434
  %v4436 = vpop.f32.mrb[0].mxu0
  %v4437 = vpop.f32.mrb[0].mxu0
  %v4438 = vadd.f32 0.0, %v4437
  %v4439 = vpop.f32.mrb[0].mxu0
  %4440 = vmatprep.mubr.bf16.mxu0 0
  %4441 = vmatmul.mubr.bf16.gmra.mrb[0].mxu0 %v4287
  %v4442 = vpop.f32.mrb[0].mxu0
  %v4443 = vadd.f32 0.0, %v4442
  %v4444 = vpop.f32.mrb[0].mxu0
  %v4445 = vpop.f32.mrb[0].mxu0
  %v4446 = vadd.f32 0.0, %v4445
  %v4447 = vpop.f32.mrb[0].mxu0
  %4448 = vmatprep.mubr.bf16.mxu0 0
  %4449 = vmatmul.mubr.bf16.gmra.mrb[0].mxu0 %v4289
  %v4450 = vpop.f32.mrb[0].mxu0
  %v4451 = vadd.f32 0.0, %v4450
  %v4452 = vpop.f32.mrb[0].mxu0
  %v4453 = vpop.f32.mrb[0].mxu0
  %v4454 = vadd.f32 0.0, %v4453
  %v4455 = vpop.f32.mrb[0].mxu0
  %4456 = vmatprep.mubr.bf16.mxu0 0
  %4457 = vmatmul.mubr.bf16.gmra.mrb[0].mxu0 %v4291
  %v4458 = vpop.f32.mrb[0].mxu0
  %v4459 = vadd.f32 0.0, %v4458
  %v4460 = vpop.f32.mrb[0].mxu0
  %v4461 = vpop.f32.mrb[0].mxu0
  %v4462 = vadd.f32 0.0, %v4461
  %v4463 = vpop.f32.mrb[0].mxu0
  %4464 = vmatprep.mubr.bf16.mxu0 0
  %4465 = vmatmul.mubr.bf16.gmra.mrb[0].mxu0 %v4293
  %v4466 = vpop.f32.mrb[0].mxu0
  %v4467 = vadd.f32 0.0, %v4466
  %v4468 = vpop.f32.mrb[0].mxu0
  %v4469 = vpop.f32.mrb[0].mxu0
  %v4470 = vadd.f32 0.0, %v4469
  %v4471 = vpop.f32.mrb[0].mxu0
  %4472 = vmatprep.mubr.bf16.mxu0 0
  %4473 = vmatmul.mubr.bf16.gmra.mrb[0].mxu0 %v4295
  %v4474 = vpop.f32.mrb[0].mxu0
  %v4475 = vadd.f32 0.0, %v4474
  %v4476 = vpop.f32.mrb[0].mxu0
  %v4477 = vpop.f32.mrb[0].mxu0
  %v4478 = vadd.f32 0.0, %v4477
  %v4479 = vpop.f32.mrb[0].mxu0
  %4480 = vmatprep.mubr.bf16.mxu0 0
  %4481 = vmatmul.mubr.bf16.gmra.mrb[0].mxu0 %v4297
  %v4482 = vpop.f32.mrb[0].mxu0
  %v4483 = vadd.f32 0.0, %v4482
  %v4484 = vpop.f32.mrb[0].mxu0
  %v4485 = vpop.f32.mrb[0].mxu0
  %v4486 = vadd.f32 0.0, %v4485
  %v4487 = vpop.f32.mrb[0].mxu0
  %4488 = vmatprep.mubr.bf16.mxu0 0
  %4489 = vmatmul.mubr.bf16.gmra.mrb[0].mxu0 %v4299
  %v4490 = vpop.f32.mrb[0].mxu0
  %v4491 = vadd.f32 0.0, %v4490
  %v4492 = vpop.f32.mrb[0].mxu0
  %v4493 = vpop.f32.mrb[0].mxu0
  %v4494 = vadd.f32 0.0, %v4493
  %v4495 = vpop.f32.mrb[0].mxu0
  %4496 = vmatprep.mubr.bf16.mxu0 0
  %4497 = vmatmul.mubr.bf16.gmra.mrb[0].mxu0 %v4301
  %v4498 = vpop.f32.mrb[0].mxu0
  %v4499 = vadd.f32 0.0, %v4498
  %v4500 = vpop.f32.mrb[0].mxu0
  %v4501 = vpop.f32.mrb[0].mxu0
  %v4502 = vadd.f32 0.0, %v4501
  %v4503 = vpop.f32.mrb[0].mxu0
  %4504 = vmatprep.mubr.bf16.mxu0 0
  %4505 = vmatmul.mubr.bf16.gmra.mrb[0].mxu0 %v4303
  %v4506 = vpop.f32.mrb[0].mxu0
  %v4507 = vadd.f32 0.0, %v4506
  %v4508 = vpop.f32.mrb[0].mxu0
  %v4509 = vpop.f32.mrb[0].mxu0
  %v4510 = vadd.f32 0.0, %v4509
  %v4511 = vpop.f32.mrb[0].mxu0
  %4512 = vmatprep.mubr.bf16.mxu0 0
  %4513 = vmatmul.mubr.bf16.gmra.mrb[0].mxu0 %v4305
  %v4514 = vpop.f32.mrb[0].mxu0
  %v4515 = vadd.f32 0.0, %v4514
  %v4516 = vpop.f32.mrb[0].mxu0
  %v4517 = vpop.f32.mrb[0].mxu0
  %v4518 = vadd.f32 0.0, %v4517
  %v4519 = vpop.f32.mrb[0].mxu0
  %4520 = vmatprep.mubr.bf16.mxu0 0
  %4521 = vmatmul.mubr.bf16.gmra.mrb[0].mxu0 %v4307
  %v4522 = vpop.f32.mrb[0].mxu0
  %v4523 = vadd.f32 0.0, %v4522
  %v4524 = vpop.f32.mrb[0].mxu0
  %v4525 = vpop.f32.mrb[0].mxu0
  %v4526 = vadd.f32 0.0, %v4525
  %v4527 = vpop.f32.mrb[0].mxu0
  %4528 = vmatprep.mubr.bf16.mxu0 0
  %4529 = vmatmul.mubr.bf16.gmra.mrb[0].mxu0 %v4309
  %v4530 = vpop.f32.mrb[0].mxu0
  %v4531 = vadd.f32 0.0, %v4530
  %v4532 = vpop.f32.mrb[0].mxu0
  %v4533 = vpop.f32.mrb[0].mxu0
  %v4534 = vadd.f32 0.0, %v4533
  %v4535 = vpop.f32.mrb[0].mxu0
  %4536 = vmatprep.mubr.bf16.mxu0 0
  %4537 = vmatmul.mubr.bf16.gmra.mrb[0].mxu0 %v4311
  %v4538 = vpop.f32.mrb[0].mxu0
  %v4539 = vadd.f32 0.0, %v4538
  %v4540 = vpop.f32.mrb[0].mxu0
  %v4541 = vpop.f32.mrb[0].mxu0
  %v4542 = vadd.f32 0.0, %v4541
  %v4543 = vpop.f32.mrb[0].mxu0
  %4544 = vmatprep.mubr.bf16.mxu0 0
  %4545 = vmatmul.mubr.bf16.gmra.mrb[0].mxu0 %v4313
  %v4546 = vpop.f32.mrb[0].mxu0
  %v4547 = vadd.f32 0.0, %v4546
  %v4548 = vpop.f32.mrb[0].mxu0
  %v4549 = vpop.f32.mrb[0].mxu0
  %v4550 = vadd.f32 0.0, %v4549
  %v4551 = vpop.f32.mrb[0].mxu0
  %4552 = vmatprep.mubr.bf16.mxu0 0
  %4553 = vmatmul.mubr.bf16.gmra.mrb[0].mxu0 %v4315
  %v4554 = vpop.f32.mrb[0].mxu0
  %v4555 = vadd.f32 0.0, %v4554
  %v4556 = vpop.f32.mrb[0].mxu0
  %v4557 = vpop.f32.mrb[0].mxu0
  %v4558 = vadd.f32 0.0, %v4557
  %v4559 = vpop.f32.mrb[0].mxu0
  %4560 = vmatprep.mubr.bf16.mxu0 0
  %4561 = vmatmul.mubr.bf16.gmra.mrb[0].mxu0 %v4317
  %v4562 = vpop.f32.mrb[0].mxu0
  %v4563 = vadd.f32 0.0, %v4562
  %v4564 = vpop.f32.mrb[0].mxu0
  %v4565 = vpop.f32.mrb[0].mxu0
  %v4566 = vadd.f32 0.0, %v4565
  %v4567 = vpop.f32.mrb[0].mxu0
  %4568 = vmatprep.mubr.bf16.mxu0 0
  %4569 = vmatmul.mubr.bf16.gmra.mrb[0].mxu0 %v4319
  %v4570 = vpop.f32.mrb[0].mxu0
  %v4571 = vadd.f32 0.0, %v4570
  %v4572 = vpop.f32.mrb[0].mxu0
  %v4573 = vpop.f32.mrb[0].mxu0
  %v4574 = vadd.f32 0.0, %v4573
  %v4575 = vpop.f32.mrb[0].mxu0
  %4576 = vmatprep.mubr.bf16.mxu0 0
  %4577 = vmatmul.mubr.bf16.gmra.mrb[0].mxu0 %v4321
  %v4578 = vpop.f32.mrb[0].mxu0
  %v4579 = vadd.f32 0.0, %v4578
  %v4580 = vpop.f32.mrb[0].mxu0
  %v4581 = vpop.f32.mrb[0].mxu0
  %v4582 = vadd.f32 0.0, %v4581
  %v4583 = vpop.f32.mrb[0].mxu0
  %4584 = vmatprep.mubr.bf16.mxu0 0
  %4585 = vmatmul.mubr.bf16.gmra.mrb[0].mxu0 %v4323
  %v4586 = vpop.f32.mrb[0].mxu0
  %v4587 = vadd.f32 0.0, %v4586
  %v4588 = vpop.f32.mrb[0].mxu0
  %v4589 = vpop.f32.mrb[0].mxu0
  %v4590 = vadd.f32 0.0, %v4589
  %v4591 = vpop.f32.mrb[0].mxu0
  %4592 = vmatprep.mubr.bf16.mxu0 0
  %4593 = vmatmul.mubr.bf16.gmra.mrb[0].mxu0 %v4325
  %v4594 = vpop.f32.mrb[0].mxu0
  %v4595 = vadd.f32 0.0, %v4594
  %v4596 = vpop.f32.mrb[0].mxu0
  %v4597 = vpop.f32.mrb[0].mxu0
  %v4598 = vadd.f32 0.0, %v4597
  %v4599 = vpop.f32.mrb[0].mxu0
  %4600 = vmatprep.mubr.bf16.mxu0 0
  %4601 = vmatmul.mubr.bf16.gmra.mrb[0].mxu0 %v4327
  %v4602 = vpop.f32.mrb[0].mxu0
  %v4603 = vadd.f32 0.0, %v4602
  %v4604 = vpop.f32.mrb[0].mxu0
  %v4605 = vpop.f32.mrb[0].mxu0
  %v4606 = vadd.f32 0.0, %v4605
  %v4607 = vpop.f32.mrb[0].mxu0
  %4608 = vmatprep.mubr.bf16.mxu0 0
  %4609 = vmatmul.mubr.bf16.gmra.mrb[0].mxu0 %v4329
  %v4610 = vpop.f32.mrb[0].mxu0
  %v4611 = vadd.f32 0.0, %v4610
  %v4612 = vpop.f32.mrb[0].mxu0
  %v4613 = vpop.f32.mrb[0].mxu0
  %v4614 = vadd.f32 0.0, %v4613
  %v4615 = vpop.f32.mrb[0].mxu0
  %4616 = vmatprep.mubr.bf16.mxu0 0
  %4617 = vmatmul.mubr.bf16.gmra.mrb[0].mxu0 %v4331
  %v4618 = vpop.f32.mrb[0].mxu0
  %v4619 = vadd.f32 0.0, %v4618
  %v4620 = vpop.f32.mrb[0].mxu0
  %v4621 = vpop.f32.mrb[0].mxu0
  %v4622 = vadd.f32 0.0, %v4621
  %v4623 = vpop.f32.mrb[0].mxu0
  %4624 = vdwg.mxu0
  %v4625 = vld [vmem:[%s5] sm:$0x1]
  %v4626 = vld [vmem:[%s6] sm:$0x1]
  %v4627 = vsel %vm1159, %v4371, 0.0
  %v4628 = vsel %vm1159, %v4374, 0.0
  %v4629 = vadd.f32 %v4627, %v4628
  %v4630 = vsel %vm1159, %v4379, 0.0
  %v4631 = vadd.f32 %v4629, %v4630
  %v4632 = vsel %vm1159, %v4382, 0.0
  %v4633 = vadd.f32 %v4631, %v4632
  %v4634 = vsel %vm1159, %v4387, 0.0
  %v4635 = vadd.f32 %v4633, %v4634
  %v4636 = vsel %vm1159, %v4390, 0.0
  %v4637 = vadd.f32 %v4635, %v4636
  %v4638 = vsel %vm1159, %v4395, 0.0
  %v4639 = vadd.f32 %v4637, %v4638
  %v4640 = vsel %vm1159, %v4398, 0.0
  %v4641 = vadd.f32 %v4639, %v4640
  %v4642 = vsel %vm1159, %v4403, 0.0
  %v4643 = vadd.f32 %v4641, %v4642
  %v4644 = vsel %vm1159, %v4406, 0.0
  %v4645 = vadd.f32 %v4643, %v4644
  %v4646 = vsel %vm1159, %v4411, 0.0
  %v4647 = vadd.f32 %v4645, %v4646
  %v4648 = vsel %vm1159, %v4414, 0.0
  %v4649 = vadd.f32 %v4647, %v4648
  %v4650 = vsel %vm1159, %v4419, 0.0
  %v4651 = vadd.f32 %v4649, %v4650
  %v4652 = vsel %vm1159, %v4422, 0.0
  %v4653 = vadd.f32 %v4651, %v4652
  %v4654 = vsel %vm1159, %v4427, 0.0
  %v4655 = vadd.f32 %v4653, %v4654
  %v4656 = vsel %vm1159, %v4430, 0.0
  %v4657 = vadd.f32 %v4655, %v4656
  %v4658 = vsel %vm1159, %v4435, 0.0
  %v4659 = vadd.f32 %v4657, %v4658
  %v4660 = vsel %vm1159, %v4438, 0.0
  %v4661 = vadd.f32 %v4659, %v4660
  %v4662 = vsel %vm1159, %v4443, 0.0
  %v4663 = vadd.f32 %v4661, %v4662
  %v4664 = vsel %vm1159, %v4446, 0.0
  %v4665 = vadd.f32 %v4663, %v4664
  %v4666 = vsel %vm1159, %v4451, 0.0
  %v4667 = vadd.f32 %v4665, %v4666
  %v4668 = vsel %vm1159, %v4454, 0.0
  %v4669 = vadd.f32 %v4667, %v4668
  %v4670 = vsel %vm1159, %v4459, 0.0
  %v4671 = vadd.f32 %v4669, %v4670
  %v4672 = vsel %vm1159, %v4462, 0.0
  %v4673 = vadd.f32 %v4671, %v4672
  %v4674 = vsel %vm1159, %v4467, 0.0
  %v4675 = vadd.f32 %v4673, %v4674
  %v4676 = vsel %vm1159, %v4470, 0.0
  %v4677 = vadd.f32 %v4675, %v4676
  %v4678 = vsel %vm1159, %v4475, 0.0
  %v4679 = vadd.f32 %v4677, %v4678
  %v4680 = vsel %vm1159, %v4478, 0.0
  %v4681 = vadd.f32 %v4679, %v4680
  %v4682 = vsel %vm1159, %v4483, 0.0
  %v4683 = vadd.f32 %v4681, %v4682
  %v4684 = vsel %vm1159, %v4486, 0.0
  %v4685 = vadd.f32 %v4683, %v4684
  %v4686 = vsel %vm1159, %v4491, 0.0
  %v4687 = vadd.f32 %v4685, %v4686
  %v4688 = vsel %vm1159, %v4494, 0.0
  %v4689 = vadd.f32 %v4687, %v4688
  %v4690 = vsel %vm1159, %v4499, 0.0
  %v4691 = vadd.f32 %v4689, %v4690
  %v4692 = vsel %vm1159, %v4502, 0.0
  %v4693 = vadd.f32 %v4691, %v4692
  %v4694 = vsel %vm1159, %v4507, 0.0
  %v4695 = vadd.f32 %v4693, %v4694
  %v4696 = vsel %vm1159, %v4510, 0.0
  %v4697 = vadd.f32 %v4695, %v4696
  %v4698 = vsel %vm1159, %v4515, 0.0
  %v4699 = vadd.f32 %v4697, %v4698
  %v4700 = vsel %vm1159, %v4518, 0.0
  %v4701 = vadd.f32 %v4699, %v4700
  %v4702 = vsel %vm1159, %v4523, 0.0
  %v4703 = vadd.f32 %v4701, %v4702
  %v4704 = vsel %vm1159, %v4526, 0.0
  %v4705 = vadd.f32 %v4703, %v4704
  %v4706 = vsel %vm1159, %v4531, 0.0
  %v4707 = vadd.f32 %v4705, %v4706
  %v4708 = vsel %vm1159, %v4534, 0.0
  %v4709 = vadd.f32 %v4707, %v4708
  %v4710 = vsel %vm1159, %v4539, 0.0
  %v4711 = vadd.f32 %v4709, %v4710
  %v4712 = vsel %vm1159, %v4542, 0.0
  %v4713 = vadd.f32 %v4711, %v4712
  %v4714 = vsel %vm1159, %v4547, 0.0
  %v4715 = vadd.f32 %v4713, %v4714
  %v4716 = vsel %vm1159, %v4550, 0.0
  %v4717 = vadd.f32 %v4715, %v4716
  %v4718 = vsel %vm1159, %v4555, 0.0
  %v4719 = vadd.f32 %v4717, %v4718
  %v4720 = vsel %vm1159, %v4558, 0.0
  %v4721 = vadd.f32 %v4719, %v4720
  %v4722 = vsel %vm1159, %v4563, 0.0
  %v4723 = vadd.f32 %v4721, %v4722
  %v4724 = vsel %vm1159, %v4566, 0.0
  %v4725 = vadd.f32 %v4723, %v4724
  %v4726 = vsel %vm1159, %v4571, 0.0
  %v4727 = vadd.f32 %v4725, %v4726
  %v4728 = vsel %vm1159, %v4574, 0.0
  %v4729 = vadd.f32 %v4727, %v4728
  %v4730 = vsel %vm1159, %v4579, 0.0
  %v4731 = vadd.f32 %v4729, %v4730
  %v4732 = vsel %vm1159, %v4582, 0.0
  %v4733 = vadd.f32 %v4731, %v4732
  %v4734 = vsel %vm1159, %v4587, 0.0
  %v4735 = vadd.f32 %v4733, %v4734
  %v4736 = vsel %vm1159, %v4590, 0.0
  %v4737 = vadd.f32 %v4735, %v4736
  %v4738 = vsel %vm1159, %v4595, 0.0
  %v4739 = vadd.f32 %v4737, %v4738
  %v4740 = vsel %vm1159, %v4598, 0.0
  %v4741 = vadd.f32 %v4739, %v4740
  %v4742 = vsel %vm1159, %v4603, 0.0
  %v4743 = vadd.f32 %v4741, %v4742
  %v4744 = vsel %vm1159, %v4606, 0.0
  %v4745 = vadd.f32 %v4743, %v4744
  %v4746 = vsel %vm1159, %v4611, 0.0
  %v4747 = vadd.f32 %v4745, %v4746
  %v4748 = vsel %vm1159, %v4614, 0.0
  %v4749 = vadd.f32 %v4747, %v4748
  %v4750 = vsel %vm1159, %v4619, 0.0
  %v4751 = vadd.f32 %v4749, %v4750
  %v4752 = vsel %vm1159, %v4622, 0.0
  %v4753 = vadd.f32 %v4751, %v4752
  %v4754 = vrot.slane %v4753, 4
  %v4755 = vadd.f32 %v4753, %v4754
  %v4756 = vrot.slane %v4755, 2
  %v4757 = vadd.f32 %v4755, %v4756
  %v4758 = vrot.slane %v4757, 1
  %v4759 = vadd.f32 %v4757, %v4758
  %v4760 = vmul.f32 %v4759, %v2216
  %v4761 = vsub.f32 %v4371, %v4760
  %v4762 = vsub.f32 %v4374, %v4760
  %v4763 = vsub.f32 %v4379, %v4760
  %v4764 = vsub.f32 %v4382, %v4760
  %v4765 = vsub.f32 %v4387, %v4760
  %v4766 = vsub.f32 %v4390, %v4760
  %v4767 = vsub.f32 %v4395, %v4760
  %v4768 = vsub.f32 %v4398, %v4760
  %v4769 = vsub.f32 %v4403, %v4760
  %v4770 = vsub.f32 %v4406, %v4760
  %v4771 = vsub.f32 %v4411, %v4760
  %v4772 = vsub.f32 %v4414, %v4760
  %v4773 = vsub.f32 %v4419, %v4760
  %v4774 = vsub.f32 %v4422, %v4760
  %v4775 = vsub.f32 %v4427, %v4760
  %v4776 = vsub.f32 %v4430, %v4760
  %v4777 = vsub.f32 %v4435, %v4760
  %v4778 = vsub.f32 %v4438, %v4760
  %v4779 = vsub.f32 %v4443, %v4760
  %v4780 = vsub.f32 %v4446, %v4760
  %v4781 = vsub.f32 %v4451, %v4760
  %v4782 = vsub.f32 %v4454, %v4760
  %v4783 = vsub.f32 %v4459, %v4760
  %v4784 = vsub.f32 %v4462, %v4760
  %v4785 = vsub.f32 %v4467, %v4760
  %v4786 = vsub.f32 %v4470, %v4760
  %v4787 = vsub.f32 %v4475, %v4760
  %v4788 = vsub.f32 %v4478, %v4760
  %v4789 = vsub.f32 %v4483, %v4760
  %v4790 = vsub.f32 %v4486, %v4760
  %v4791 = vsub.f32 %v4491, %v4760
  %v4792 = vsub.f32 %v4494, %v4760
  %v4793 = vsub.f32 %v4499, %v4760
  %v4794 = vsub.f32 %v4502, %v4760
  %v4795 = vsub.f32 %v4507, %v4760
  %v4796 = vsub.f32 %v4510, %v4760
  %v4797 = vsub.f32 %v4515, %v4760
  %v4798 = vsub.f32 %v4518, %v4760
  %v4799 = vsub.f32 %v4523, %v4760
  %v4800 = vsub.f32 %v4526, %v4760
  %v4801 = vsub.f32 %v4531, %v4760
  %v4802 = vsub.f32 %v4534, %v4760
  %v4803 = vsub.f32 %v4539, %v4760
  %v4804 = vsub.f32 %v4542, %v4760
  %v4805 = vsub.f32 %v4547, %v4760
  %v4806 = vsub.f32 %v4550, %v4760
  %v4807 = vsub.f32 %v4555, %v4760
  %v4808 = vsub.f32 %v4558, %v4760
  %v4809 = vsub.f32 %v4563, %v4760
  %v4810 = vsub.f32 %v4566, %v4760
  %v4811 = vsub.f32 %v4571, %v4760
  %v4812 = vsub.f32 %v4574, %v4760
  %v4813 = vsub.f32 %v4579, %v4760
  %v4814 = vsub.f32 %v4582, %v4760
  %v4815 = vsub.f32 %v4587, %v4760
  %v4816 = vsub.f32 %v4590, %v4760
  %v4817 = vsub.f32 %v4595, %v4760
  %v4818 = vsub.f32 %v4598, %v4760
  %v4819 = vsub.f32 %v4603, %v4760
  %v4820 = vsub.f32 %v4606, %v4760
  %v4821 = vsub.f32 %v4611, %v4760
  %v4822 = vsub.f32 %v4614, %v4760
  %v4823 = vsub.f32 %v4619, %v4760
  %v4824 = vsub.f32 %v4622, %v4760
  %v4825 = vmul.f32 %v4761, %v4761
  %v4826 = vmul.f32 %v4762, %v4762
  %v4827 = vmul.f32 %v4763, %v4763
  %v4828 = vmul.f32 %v4764, %v4764
  %v4829 = vmul.f32 %v4765, %v4765
  %v4830 = vmul.f32 %v4766, %v4766
  %v4831 = vmul.f32 %v4767, %v4767
  %v4832 = vmul.f32 %v4768, %v4768
  %v4833 = vmul.f32 %v4769, %v4769
  %v4834 = vmul.f32 %v4770, %v4770
  %v4835 = vmul.f32 %v4771, %v4771
  %v4836 = vmul.f32 %v4772, %v4772
  %v4837 = vmul.f32 %v4773, %v4773
  %v4838 = vmul.f32 %v4774, %v4774
  %v4839 = vmul.f32 %v4775, %v4775
  %v4840 = vmul.f32 %v4776, %v4776
  %v4841 = vmul.f32 %v4777, %v4777
  %v4842 = vmul.f32 %v4778, %v4778
  %v4843 = vmul.f32 %v4779, %v4779
  %v4844 = vmul.f32 %v4780, %v4780
  %v4845 = vmul.f32 %v4781, %v4781
  %v4846 = vmul.f32 %v4782, %v4782
  %v4847 = vmul.f32 %v4783, %v4783
  %v4848 = vmul.f32 %v4784, %v4784
  %v4849 = vmul.f32 %v4785, %v4785
  %v4850 = vmul.f32 %v4786, %v4786
  %v4851 = vmul.f32 %v4787, %v4787
  %v4852 = vmul.f32 %v4788, %v4788
  %v4853 = vmul.f32 %v4789, %v4789
  %v4854 = vmul.f32 %v4790, %v4790
  %v4855 = vmul.f32 %v4791, %v4791
  %v4856 = vmul.f32 %v4792, %v4792
  %v4857 = vmul.f32 %v4793, %v4793
  %v4858 = vmul.f32 %v4794, %v4794
  %v4859 = vmul.f32 %v4795, %v4795
  %v4860 = vmul.f32 %v4796, %v4796
  %v4861 = vmul.f32 %v4797, %v4797
  %v4862 = vmul.f32 %v4798, %v4798
  %v4863 = vmul.f32 %v4799, %v4799
  %v4864 = vmul.f32 %v4800, %v4800
  %v4865 = vmul.f32 %v4801, %v4801
  %v4866 = vmul.f32 %v4802, %v4802
  %v4867 = vmul.f32 %v4803, %v4803
  %v4868 = vmul.f32 %v4804, %v4804
  %v4869 = vmul.f32 %v4805, %v4805
  %v4870 = vmul.f32 %v4806, %v4806
  %v4871 = vmul.f32 %v4807, %v4807
  %v4872 = vmul.f32 %v4808, %v4808
  %v4873 = vmul.f32 %v4809, %v4809
  %v4874 = vmul.f32 %v4810, %v4810
  %v4875 = vmul.f32 %v4811, %v4811
  %v4876 = vmul.f32 %v4812, %v4812
  %v4877 = vmul.f32 %v4813, %v4813
  %v4878 = vmul.f32 %v4814, %v4814
  %v4879 = vmul.f32 %v4815, %v4815
  %v4880 = vmul.f32 %v4816, %v4816
  %v4881 = vmul.f32 %v4817, %v4817
  %v4882 = vmul.f32 %v4818, %v4818
  %v4883 = vmul.f32 %v4819, %v4819
  %v4884 = vmul.f32 %v4820, %v4820
  %v4885 = vmul.f32 %v4821, %v4821
  %v4886 = vmul.f32 %v4822, %v4822
  %v4887 = vmul.f32 %v4823, %v4823
  %v4888 = vmul.f32 %v4824, %v4824
  %v4889 = vsel %vm1159, %v4825, 0.0
  %v4890 = vsel %vm1159, %v4826, 0.0
  %v4891 = vadd.f32 %v4889, %v4890
  %v4892 = vsel %vm1159, %v4827, 0.0
  %v4893 = vadd.f32 %v4891, %v4892
  %v4894 = vsel %vm1159, %v4828, 0.0
  %v4895 = vadd.f32 %v4893, %v4894
  %v4896 = vsel %vm1159, %v4829, 0.0
  %v4897 = vadd.f32 %v4895, %v4896
  %v4898 = vsel %vm1159, %v4830, 0.0
  %v4899 = vadd.f32 %v4897, %v4898
  %v4900 = vsel %vm1159, %v4831, 0.0
  %v4901 = vadd.f32 %v4899, %v4900
  %v4902 = vsel %vm1159, %v4832, 0.0
  %v4903 = vadd.f32 %v4901, %v4902
  %v4904 = vsel %vm1159, %v4833, 0.0
  %v4905 = vadd.f32 %v4903, %v4904
  %v4906 = vsel %vm1159, %v4834, 0.0
  %v4907 = vadd.f32 %v4905, %v4906
  %v4908 = vsel %vm1159, %v4835, 0.0
  %v4909 = vadd.f32 %v4907, %v4908
  %v4910 = vsel %vm1159, %v4836, 0.0
  %v4911 = vadd.f32 %v4909, %v4910
  %v4912 = vsel %vm1159, %v4837, 0.0
  %v4913 = vadd.f32 %v4911, %v4912
  %v4914 = vsel %vm1159, %v4838, 0.0
  %v4915 = vadd.f32 %v4913, %v4914
  %v4916 = vsel %vm1159, %v4839, 0.0
  %v4917 = vadd.f32 %v4915, %v4916
  %v4918 = vsel %vm1159, %v4840, 0.0
  %v4919 = vadd.f32 %v4917, %v4918
  %v4920 = vsel %vm1159, %v4841, 0.0
  %v4921 = vadd.f32 %v4919, %v4920
  %v4922 = vsel %vm1159, %v4842, 0.0
  %v4923 = vadd.f32 %v4921, %v4922
  %v4924 = vsel %vm1159, %v4843, 0.0
  %v4925 = vadd.f32 %v4923, %v4924
  %v4926 = vsel %vm1159, %v4844, 0.0
  %v4927 = vadd.f32 %v4925, %v4926
  %v4928 = vsel %vm1159, %v4845, 0.0
  %v4929 = vadd.f32 %v4927, %v4928
  %v4930 = vsel %vm1159, %v4846, 0.0
  %v4931 = vadd.f32 %v4929, %v4930
  %v4932 = vsel %vm1159, %v4847, 0.0
  %v4933 = vadd.f32 %v4931, %v4932
  %v4934 = vsel %vm1159, %v4848, 0.0
  %v4935 = vadd.f32 %v4933, %v4934
  %v4936 = vsel %vm1159, %v4849, 0.0
  %v4937 = vadd.f32 %v4935, %v4936
  %v4938 = vsel %vm1159, %v4850, 0.0
  %v4939 = vadd.f32 %v4937, %v4938
  %v4940 = vsel %vm1159, %v4851, 0.0
  %v4941 = vadd.f32 %v4939, %v4940
  %v4942 = vsel %vm1159, %v4852, 0.0
  %v4943 = vadd.f32 %v4941, %v4942
  %v4944 = vsel %vm1159, %v4853, 0.0
  %v4945 = vadd.f32 %v4943, %v4944
  %v4946 = vsel %vm1159, %v4854, 0.0
  %v4947 = vadd.f32 %v4945, %v4946
  %v4948 = vsel %vm1159, %v4855, 0.0
  %v4949 = vadd.f32 %v4947, %v4948
  %v4950 = vsel %vm1159, %v4856, 0.0
  %v4951 = vadd.f32 %v4949, %v4950
  %v4952 = vsel %vm1159, %v4857, 0.0
  %v4953 = vadd.f32 %v4951, %v4952
  %v4954 = vsel %vm1159, %v4858, 0.0
  %v4955 = vadd.f32 %v4953, %v4954
  %v4956 = vsel %vm1159, %v4859, 0.0
  %v4957 = vadd.f32 %v4955, %v4956
  %v4958 = vsel %vm1159, %v4860, 0.0
  %v4959 = vadd.f32 %v4957, %v4958
  %v4960 = vsel %vm1159, %v4861, 0.0
  %v4961 = vadd.f32 %v4959, %v4960
  %v4962 = vsel %vm1159, %v4862, 0.0
  %v4963 = vadd.f32 %v4961, %v4962
  %v4964 = vsel %vm1159, %v4863, 0.0
  %v4965 = vadd.f32 %v4963, %v4964
  %v4966 = vsel %vm1159, %v4864, 0.0
  %v4967 = vadd.f32 %v4965, %v4966
  %v4968 = vsel %vm1159, %v4865, 0.0
  %v4969 = vadd.f32 %v4967, %v4968
  %v4970 = vsel %vm1159, %v4866, 0.0
  %v4971 = vadd.f32 %v4969, %v4970
  %v4972 = vsel %vm1159, %v4867, 0.0
  %v4973 = vadd.f32 %v4971, %v4972
  %v4974 = vsel %vm1159, %v4868, 0.0
  %v4975 = vadd.f32 %v4973, %v4974
  %v4976 = vsel %vm1159, %v4869, 0.0
  %v4977 = vadd.f32 %v4975, %v4976
  %v4978 = vsel %vm1159, %v4870, 0.0
  %v4979 = vadd.f32 %v4977, %v4978
  %v4980 = vsel %vm1159, %v4871, 0.0
  %v4981 = vadd.f32 %v4979, %v4980
  %v4982 = vsel %vm1159, %v4872, 0.0
  %v4983 = vadd.f32 %v4981, %v4982
  %v4984 = vsel %vm1159, %v4873, 0.0
  %v4985 = vadd.f32 %v4983, %v4984
  %v4986 = vsel %vm1159, %v4874, 0.0
  %v4987 = vadd.f32 %v4985, %v4986
  %v4988 = vsel %vm1159, %v4875, 0.0
  %v4989 = vadd.f32 %v4987, %v4988
  %v4990 = vsel %vm1159, %v4876, 0.0
  %v4991 = vadd.f32 %v4989, %v4990
  %v4992 = vsel %vm1159, %v4877, 0.0
  %v4993 = vadd.f32 %v4991, %v4992
  %v4994 = vsel %vm1159, %v4878, 0.0
  %v4995 = vadd.f32 %v4993, %v4994
  %v4996 = vsel %vm1159, %v4879, 0.0
  %v4997 = vadd.f32 %v4995, %v4996
  %v4998 = vsel %vm1159, %v4880, 0.0
  %v4999 = vadd.f32 %v4997, %v4998
  %v5000 = vsel %vm1159, %v4881, 0.0
  %v5001 = vadd.f32 %v4999, %v5000
  %v5002 = vsel %vm1159, %v4882, 0.0
  %v5003 = vadd.f32 %v5001, %v5002
  %v5004 = vsel %vm1159, %v4883, 0.0
  %v5005 = vadd.f32 %v5003, %v5004
  %v5006 = vsel %vm1159, %v4884, 0.0
  %v5007 = vadd.f32 %v5005, %v5006
  %v5008 = vsel %vm1159, %v4885, 0.0
  %v5009 = vadd.f32 %v5007, %v5008
  %v5010 = vsel %vm1159, %v4886, 0.0
  %v5011 = vadd.f32 %v5009, %v5010
  %v5012 = vsel %vm1159, %v4887, 0.0
  %v5013 = vadd.f32 %v5011, %v5012
  %v5014 = vsel %vm1159, %v4888, 0.0
  %v5015 = vadd.f32 %v5013, %v5014
  %v5016 = vrot.slane %v5015, 4
  %v5017 = vadd.f32 %v5015, %v5016
  %v5018 = vrot.slane %v5017, 2
  %v5019 = vadd.f32 %v5017, %v5018
  %v5020 = vrot.slane %v5019, 1
  %v5021 = vadd.f32 %v5019, %v5020
  %v5022 = vmul.f32 %v5021, %v2216
  %v5023 = vadd.f32 %v5022, 1e-05
  %v5024 = vrsqrt.pop %v5023
  %v5025 = vmul.f32 %v5024, %v4625
  %v5026 = vlaneseq
  %v5027 = vshrl.u32 %v5026, 7
  %v5028 = vsub.s32 0, %v5027
  %v5029 = vrot.slane %v5025, %v5028
  %v5030 = vmul.f32 %v4761, %v5029
  %v5031 = vmul.f32 %v4762, %v5029
  %v5032 = vmul.f32 %v4763, %v5029
  %v5033 = vmul.f32 %v4764, %v5029
  %v5034 = vmul.f32 %v4765, %v5029
  %v5035 = vmul.f32 %v4766, %v5029
  %v5036 = vmul.f32 %v4767, %v5029
  %v5037 = vmul.f32 %v4768, %v5029
  %v5038 = vmul.f32 %v4769, %v5029
  %v5039 = vmul.f32 %v4770, %v5029
  %v5040 = vmul.f32 %v4771, %v5029
  %v5041 = vmul.f32 %v4772, %v5029
  %v5042 = vmul.f32 %v4773, %v5029
  %v5043 = vmul.f32 %v4774, %v5029
  %v5044 = vmul.f32 %v4775, %v5029
  %v5045 = vmul.f32 %v4776, %v5029
  %v5046 = vmul.f32 %v4777, %v5029
  %v5047 = vmul.f32 %v4778, %v5029
  %v5048 = vmul.f32 %v4779, %v5029
  %v5049 = vmul.f32 %v4780, %v5029
  %v5050 = vmul.f32 %v4781, %v5029
  %v5051 = vmul.f32 %v4782, %v5029
  %v5052 = vmul.f32 %v4783, %v5029
  %v5053 = vmul.f32 %v4784, %v5029
  %v5054 = vmul.f32 %v4785, %v5029
  %v5055 = vmul.f32 %v4786, %v5029
  %v5056 = vmul.f32 %v4787, %v5029
  %v5057 = vmul.f32 %v4788, %v5029
  %v5058 = vmul.f32 %v4789, %v5029
  %v5059 = vmul.f32 %v4790, %v5029
  %v5060 = vmul.f32 %v4791, %v5029
  %v5061 = vmul.f32 %v4792, %v5029
  %v5062 = vmul.f32 %v4793, %v5029
  %v5063 = vmul.f32 %v4794, %v5029
  %v5064 = vmul.f32 %v4795, %v5029
  %v5065 = vmul.f32 %v4796, %v5029
  %v5066 = vmul.f32 %v4797, %v5029
  %v5067 = vmul.f32 %v4798, %v5029
  %v5068 = vmul.f32 %v4799, %v5029
  %v5069 = vmul.f32 %v4800, %v5029
  %v5070 = vmul.f32 %v4801, %v5029
  %v5071 = vmul.f32 %v4802, %v5029
  %v5072 = vmul.f32 %v4803, %v5029
  %v5073 = vmul.f32 %v4804, %v5029
  %v5074 = vmul.f32 %v4805, %v5029
  %v5075 = vmul.f32 %v4806, %v5029
  %v5076 = vmul.f32 %v4807, %v5029
  %v5077 = vmul.f32 %v4808, %v5029
  %v5078 = vmul.f32 %v4809, %v5029
  %v5079 = vmul.f32 %v4810, %v5029
  %v5080 = vmul.f32 %v4811, %v5029
  %v5081 = vmul.f32 %v4812, %v5029
  %v5082 = vmul.f32 %v4813, %v5029
  %v5083 = vmul.f32 %v4814, %v5029
  %v5084 = vmul.f32 %v4815, %v5029
  %v5085 = vmul.f32 %v4816, %v5029
  %v5086 = vmul.f32 %v4817, %v5029
  %v5087 = vmul.f32 %v4818, %v5029
  %v5088 = vmul.f32 %v4819, %v5029
  %v5089 = vmul.f32 %v4820, %v5029
  %v5090 = vmul.f32 %v4821, %v5029
  %v5091 = vmul.f32 %v4822, %v5029
  %v5092 = vmul.f32 %v4823, %v5029
  %v5093 = vmul.f32 %v4824, %v5029
  %v5095 = vlaneseq
  %v5096 = vshrl.u32 %v5095, 7
  %v5097 = vsub.s32 0, %v5096
  %v5098 = vrot.slane %v4626, %v5097
  %v5100 = vadd.f32 %v5030, %v5098
  %v5101 = vadd.f32 %v5031, %v5098
  %v5102 = vadd.f32 %v5032, %v5098
  %v5103 = vadd.f32 %v5033, %v5098
  %v5104 = vadd.f32 %v5034, %v5098
  %v5105 = vadd.f32 %v5035, %v5098
  %v5106 = vadd.f32 %v5036, %v5098
  %v5107 = vadd.f32 %v5037, %v5098
  %v5108 = vadd.f32 %v5038, %v5098
  %v5109 = vadd.f32 %v5039, %v5098
  %v5110 = vadd.f32 %v5040, %v5098
  %v5111 = vadd.f32 %v5041, %v5098
  %v5112 = vadd.f32 %v5042, %v5098
  %v5113 = vadd.f32 %v5043, %v5098
  %v5114 = vadd.f32 %v5044, %v5098
  %v5115 = vadd.f32 %v5045, %v5098
  %v5116 = vadd.f32 %v5046, %v5098
  %v5117 = vadd.f32 %v5047, %v5098
  %v5118 = vadd.f32 %v5048, %v5098
  %v5119 = vadd.f32 %v5049, %v5098
  %v5120 = vadd.f32 %v5050, %v5098
  %v5121 = vadd.f32 %v5051, %v5098
  %v5122 = vadd.f32 %v5052, %v5098
  %v5123 = vadd.f32 %v5053, %v5098
  %v5124 = vadd.f32 %v5054, %v5098
  %v5125 = vadd.f32 %v5055, %v5098
  %v5126 = vadd.f32 %v5056, %v5098
  %v5127 = vadd.f32 %v5057, %v5098
  %v5128 = vadd.f32 %v5058, %v5098
  %v5129 = vadd.f32 %v5059, %v5098
  %v5130 = vadd.f32 %v5060, %v5098
  %v5131 = vadd.f32 %v5061, %v5098
  %v5132 = vadd.f32 %v5062, %v5098
  %v5133 = vadd.f32 %v5063, %v5098
  %v5134 = vadd.f32 %v5064, %v5098
  %v5135 = vadd.f32 %v5065, %v5098
  %v5136 = vadd.f32 %v5066, %v5098
  %v5137 = vadd.f32 %v5067, %v5098
  %v5138 = vadd.f32 %v5068, %v5098
  %v5139 = vadd.f32 %v5069, %v5098
  %v5140 = vadd.f32 %v5070, %v5098
  %v5141 = vadd.f32 %v5071, %v5098
  %v5142 = vadd.f32 %v5072, %v5098
  %v5143 = vadd.f32 %v5073, %v5098
  %v5144 = vadd.f32 %v5074, %v5098
  %v5145 = vadd.f32 %v5075, %v5098
  %v5146 = vadd.f32 %v5076, %v5098
  %v5147 = vadd.f32 %v5077, %v5098
  %v5148 = vadd.f32 %v5078, %v5098
  %v5149 = vadd.f32 %v5079, %v5098
  %v5150 = vadd.f32 %v5080, %v5098
  %v5151 = vadd.f32 %v5081, %v5098
  %v5152 = vadd.f32 %v5082, %v5098
  %v5153 = vadd.f32 %v5083, %v5098
  %v5154 = vadd.f32 %v5084, %v5098
  %v5155 = vadd.f32 %v5085, %v5098
  %v5156 = vadd.f32 %v5086, %v5098
  %v5157 = vadd.f32 %v5087, %v5098
  %v5158 = vadd.f32 %v5088, %v5098
  %v5159 = vadd.f32 %v5089, %v5098
  %v5160 = vadd.f32 %v5090, %v5098
  %v5161 = vadd.f32 %v5091, %v5098
  %v5162 = vadd.f32 %v5092, %v5098
  %v5163 = vadd.f32 %v5093, %v5098
  %v5164 = vadd.f32 %v5100, %v27
  %v5165 = vadd.f32 %v5101, %v28
  %v5166 = vadd.f32 %v5102, %v29
  %v5167 = vadd.f32 %v5103, %v30
  %v5168 = vadd.f32 %v5104, %v31
  %v5169 = vadd.f32 %v5105, %v32
  %v5170 = vadd.f32 %v5106, %v33
  %v5171 = vadd.f32 %v5107, %v34
  %v5172 = vadd.f32 %v5108, %v35
  %v5173 = vadd.f32 %v5109, %v36
  %v5174 = vadd.f32 %v5110, %v37
  %v5175 = vadd.f32 %v5111, %v38
  %v5176 = vadd.f32 %v5112, %v39
  %v5177 = vadd.f32 %v5113, %v40
  %v5178 = vadd.f32 %v5114, %v41
  %v5179 = vadd.f32 %v5115, %v42
  %v5180 = vadd.f32 %v5116, %v43
  %v5181 = vadd.f32 %v5117, %v44
  %v5182 = vadd.f32 %v5118, %v45
  %v5183 = vadd.f32 %v5119, %v46
  %v5184 = vadd.f32 %v5120, %v47
  %v5185 = vadd.f32 %v5121, %v48
  %v5186 = vadd.f32 %v5122, %v49
  %v5187 = vadd.f32 %v5123, %v50
  %v5188 = vadd.f32 %v5124, %v51
  %v5189 = vadd.f32 %v5125, %v52
  %v5190 = vadd.f32 %v5126, %v53
  %v5191 = vadd.f32 %v5127, %v54
  %v5192 = vadd.f32 %v5128, %v55
  %v5193 = vadd.f32 %v5129, %v56
  %v5194 = vadd.f32 %v5130, %v57
  %v5195 = vadd.f32 %v5131, %v58
  %v5196 = vadd.f32 %v5132, %v59
  %v5197 = vadd.f32 %v5133, %v60
  %v5198 = vadd.f32 %v5134, %v61
  %v5199 = vadd.f32 %v5135, %v62
  %v5200 = vadd.f32 %v5136, %v63
  %v5201 = vadd.f32 %v5137, %v64
  %v5202 = vadd.f32 %v5138, %v65
  %v5203 = vadd.f32 %v5139, %v66
  %v5204 = vadd.f32 %v5140, %v67
  %v5205 = vadd.f32 %v5141, %v68
  %v5206 = vadd.f32 %v5142, %v69
  %v5207 = vadd.f32 %v5143, %v70
  %v5208 = vadd.f32 %v5144, %v71
  %v5209 = vadd.f32 %v5145, %v72
  %v5210 = vadd.f32 %v5146, %v73
  %v5211 = vadd.f32 %v5147, %v74
  %v5212 = vadd.f32 %v5148, %v75
  %v5213 = vadd.f32 %v5149, %v76
  %v5214 = vadd.f32 %v5150, %v77
  %v5215 = vadd.f32 %v5151, %v78
  %v5216 = vadd.f32 %v5152, %v79
  %v5217 = vadd.f32 %v5153, %v80
  %v5218 = vadd.f32 %v5154, %v81
  %v5219 = vadd.f32 %v5155, %v82
  %v5220 = vadd.f32 %v5156, %v83
  %v5221 = vadd.f32 %v5157, %v84
  %v5222 = vadd.f32 %v5158, %v85
  %v5223 = vadd.f32 %v5159, %v86
  %v5224 = vadd.f32 %v5160, %v87
  %v5225 = vadd.f32 %v5161, %v88
  %v5226 = vadd.f32 %v5162, %v89
  %v5227 = vadd.f32 %v5163, %v90
  %v5228 = vmax.f32 %v5164, 0.0
  %v5229 = vmax.f32 %v5165, 0.0
  %v5230 = vmax.f32 %v5166, 0.0
  %v5231 = vmax.f32 %v5167, 0.0
  %v5232 = vmax.f32 %v5168, 0.0
  %v5233 = vmax.f32 %v5169, 0.0
  %v5234 = vmax.f32 %v5170, 0.0
  %v5235 = vmax.f32 %v5171, 0.0
  %v5236 = vmax.f32 %v5172, 0.0
  %v5237 = vmax.f32 %v5173, 0.0
  %v5238 = vmax.f32 %v5174, 0.0
  %v5239 = vmax.f32 %v5175, 0.0
  %v5240 = vmax.f32 %v5176, 0.0
  %v5241 = vmax.f32 %v5177, 0.0
  %v5242 = vmax.f32 %v5178, 0.0
  %v5243 = vmax.f32 %v5179, 0.0
  %v5244 = vmax.f32 %v5180, 0.0
  %v5245 = vmax.f32 %v5181, 0.0
  %v5246 = vmax.f32 %v5182, 0.0
  %v5247 = vmax.f32 %v5183, 0.0
  %v5248 = vmax.f32 %v5184, 0.0
  %v5249 = vmax.f32 %v5185, 0.0
  %v5250 = vmax.f32 %v5186, 0.0
  %v5251 = vmax.f32 %v5187, 0.0
  %v5252 = vmax.f32 %v5188, 0.0
  %v5253 = vmax.f32 %v5189, 0.0
  %v5254 = vmax.f32 %v5190, 0.0
  %v5255 = vmax.f32 %v5191, 0.0
  %v5256 = vmax.f32 %v5192, 0.0
  %v5257 = vmax.f32 %v5193, 0.0
  %v5258 = vmax.f32 %v5194, 0.0
  %v5259 = vmax.f32 %v5195, 0.0
  %v5260 = vmax.f32 %v5196, 0.0
  %v5261 = vmax.f32 %v5197, 0.0
  %v5262 = vmax.f32 %v5198, 0.0
  %v5263 = vmax.f32 %v5199, 0.0
  %v5264 = vmax.f32 %v5200, 0.0
  %v5265 = vmax.f32 %v5201, 0.0
  %v5266 = vmax.f32 %v5202, 0.0
  %v5267 = vmax.f32 %v5203, 0.0
  %v5268 = vmax.f32 %v5204, 0.0
  %v5269 = vmax.f32 %v5205, 0.0
  %v5270 = vmax.f32 %v5206, 0.0
  %v5271 = vmax.f32 %v5207, 0.0
  %v5272 = vmax.f32 %v5208, 0.0
  %v5273 = vmax.f32 %v5209, 0.0
  %v5274 = vmax.f32 %v5210, 0.0
  %v5275 = vmax.f32 %v5211, 0.0
  %v5276 = vmax.f32 %v5212, 0.0
  %v5277 = vmax.f32 %v5213, 0.0
  %v5278 = vmax.f32 %v5214, 0.0
  %v5279 = vmax.f32 %v5215, 0.0
  %v5280 = vmax.f32 %v5216, 0.0
  %v5281 = vmax.f32 %v5217, 0.0
  %v5282 = vmax.f32 %v5218, 0.0
  %v5283 = vmax.f32 %v5219, 0.0
  %v5284 = vmax.f32 %v5220, 0.0
  %v5285 = vmax.f32 %v5221, 0.0
  %v5286 = vmax.f32 %v5222, 0.0
  %v5287 = vmax.f32 %v5223, 0.0
  %v5288 = vmax.f32 %v5224, 0.0
  %v5289 = vmax.f32 %v5225, 0.0
  %v5290 = vmax.f32 %v5226, 0.0
  %v5291 = vmax.f32 %v5227, 0.0
  %5292 = vst.msk [vmem:[%s7] sm:$0xff] %vm1159, %v5228
  %5293 = vst.msk [vmem:[%s7 + $0x8] sm:$0xff] %vm1159, %v5229
  %5294 = vst.msk [vmem:[%s7 + $0x10] sm:$0xff] %vm1159, %v5230
  %5295 = vst.msk [vmem:[%s7 + $0x18] sm:$0xff] %vm1159, %v5231
  %5296 = vst.msk [vmem:[%s7 + $0x20] sm:$0xff] %vm1159, %v5232
  %5297 = vst.msk [vmem:[%s7 + $0x28] sm:$0xff] %vm1159, %v5233
  %5298 = vst.msk [vmem:[%s7 + $0x30] sm:$0xff] %vm1159, %v5234
  %5299 = vst.msk [vmem:[%s7 + $0x38] sm:$0xff] %vm1159, %v5235
  %5300 = vst.msk [vmem:[%s7 + $0x40] sm:$0xff] %vm1159, %v5236
  %5301 = vst.msk [vmem:[%s7 + $0x48] sm:$0xff] %vm1159, %v5237
  %5302 = vst.msk [vmem:[%s7 + $0x50] sm:$0xff] %vm1159, %v5238
  %5303 = vst.msk [vmem:[%s7 + $0x58] sm:$0xff] %vm1159, %v5239
  %5304 = vst.msk [vmem:[%s7 + $0x60] sm:$0xff] %vm1159, %v5240
  %5305 = vst.msk [vmem:[%s7 + $0x68] sm:$0xff] %vm1159, %v5241
  %5306 = vst.msk [vmem:[%s7 + $0x70] sm:$0xff] %vm1159, %v5242
  %5307 = vst.msk [vmem:[%s7 + $0x78] sm:$0xff] %vm1159, %v5243
  %5308 = vst.msk [vmem:[%s7 + $0x80] sm:$0xff] %vm1159, %v5244
  %5309 = vst.msk [vmem:[%s7 + $0x88] sm:$0xff] %vm1159, %v5245
  %5310 = vst.msk [vmem:[%s7 + $0x90] sm:$0xff] %vm1159, %v5246
  %5311 = vst.msk [vmem:[%s7 + $0x98] sm:$0xff] %vm1159, %v5247
  %5312 = vst.msk [vmem:[%s7 + $0xa0] sm:$0xff] %vm1159, %v5248
  %5313 = vst.msk [vmem:[%s7 + $0xa8] sm:$0xff] %vm1159, %v5249
  %5314 = vst.msk [vmem:[%s7 + $0xb0] sm:$0xff] %vm1159, %v5250
  %5315 = vst.msk [vmem:[%s7 + $0xb8] sm:$0xff] %vm1159, %v5251
  %5316 = vst.msk [vmem:[%s7 + $0xc0] sm:$0xff] %vm1159, %v5252
  %5317 = vst.msk [vmem:[%s7 + $0xc8] sm:$0xff] %vm1159, %v5253
  %5318 = vst.msk [vmem:[%s7 + $0xd0] sm:$0xff] %vm1159, %v5254
  %5319 = vst.msk [vmem:[%s7 + $0xd8] sm:$0xff] %vm1159, %v5255
  %5320 = vst.msk [vmem:[%s7 + $0xe0] sm:$0xff] %vm1159, %v5256
  %5321 = vst.msk [vmem:[%s7 + $0xe8] sm:$0xff] %vm1159, %v5257
  %5322 = vst.msk [vmem:[%s7 + $0xf0] sm:$0xff] %vm1159, %v5258
  %5323 = vst.msk [vmem:[%s7 + $0xf8] sm:$0xff] %vm1159, %v5259
  %5324 = vst.msk [vmem:[%s7 + $0x100] sm:$0xff] %vm1159, %v5260
  %5325 = vst.msk [vmem:[%s7 + $0x108] sm:$0xff] %vm1159, %v5261
  %5326 = vst.msk [vmem:[%s7 + $0x110] sm:$0xff] %vm1159, %v5262
  %5327 = vst.msk [vmem:[%s7 + $0x118] sm:$0xff] %vm1159, %v5263
  %5328 = vst.msk [vmem:[%s7 + $0x120] sm:$0xff] %vm1159, %v5264
  %5329 = vst.msk [vmem:[%s7 + $0x128] sm:$0xff] %vm1159, %v5265
  %5330 = vst.msk [vmem:[%s7 + $0x130] sm:$0xff] %vm1159, %v5266
  %5331 = vst.msk [vmem:[%s7 + $0x138] sm:$0xff] %vm1159, %v5267
  %5332 = vst.msk [vmem:[%s7 + $0x140] sm:$0xff] %vm1159, %v5268
  %5333 = vst.msk [vmem:[%s7 + $0x148] sm:$0xff] %vm1159, %v5269
  %5334 = vst.msk [vmem:[%s7 + $0x150] sm:$0xff] %vm1159, %v5270
  %5335 = vst.msk [vmem:[%s7 + $0x158] sm:$0xff] %vm1159, %v5271
  %5336 = vst.msk [vmem:[%s7 + $0x160] sm:$0xff] %vm1159, %v5272
  %5337 = vst.msk [vmem:[%s7 + $0x168] sm:$0xff] %vm1159, %v5273
  %5338 = vst.msk [vmem:[%s7 + $0x170] sm:$0xff] %vm1159, %v5274
  %5339 = vst.msk [vmem:[%s7 + $0x178] sm:$0xff] %vm1159, %v5275
  %5340 = vst.msk [vmem:[%s7 + $0x180] sm:$0xff] %vm1159, %v5276
  %5341 = vst.msk [vmem:[%s7 + $0x188] sm:$0xff] %vm1159, %v5277
  %5342 = vst.msk [vmem:[%s7 + $0x190] sm:$0xff] %vm1159, %v5278
  %5343 = vst.msk [vmem:[%s7 + $0x198] sm:$0xff] %vm1159, %v5279
  %5344 = vst.msk [vmem:[%s7 + $0x1a0] sm:$0xff] %vm1159, %v5280
  %5345 = vst.msk [vmem:[%s7 + $0x1a8] sm:$0xff] %vm1159, %v5281
  %5346 = vst.msk [vmem:[%s7 + $0x1b0] sm:$0xff] %vm1159, %v5282
  %5347 = vst.msk [vmem:[%s7 + $0x1b8] sm:$0xff] %vm1159, %v5283
  %5348 = vst.msk [vmem:[%s7 + $0x1c0] sm:$0xff] %vm1159, %v5284
  %5349 = vst.msk [vmem:[%s7 + $0x1c8] sm:$0xff] %vm1159, %v5285
  %5350 = vst.msk [vmem:[%s7 + $0x1d0] sm:$0xff] %vm1159, %v5286
  %5351 = vst.msk [vmem:[%s7 + $0x1d8] sm:$0xff] %vm1159, %v5287
  %5352 = vst.msk [vmem:[%s7 + $0x1e0] sm:$0xff] %vm1159, %v5288
  %5353 = vst.msk [vmem:[%s7 + $0x1e8] sm:$0xff] %vm1159, %v5289
  %5354 = vst.msk [vmem:[%s7 + $0x1f0] sm:$0xff] %vm1159, %v5290
  %5355 = vst.msk [vmem:[%s7 + $0x1f8] sm:$0xff] %vm1159, %v5291
  // Predicated region
  $region30: #{tpu_custom_call.1} parent=0 // pred_check
    _
  $region31: #{tpu_custom_call.1} parent=0 // pred_check_branch
    %5357 = sbr.rel (0) target = $region33
  $region32: #{tpu_custom_call.1} parent=0 // pred_region
    _
  $region33: #{tpu_custom_call.1} parent=0 // pred_fallthru
    _
  // Predicated region
  $region34: #{tpu_custom_call.1} parent=0 // pred_check
    _
  $region35: #{tpu_custom_call.1} parent=0 // pred_check_branch
    %5359 = sbr.rel (0) target = $region37
  $region36: #{tpu_custom_call.1} parent=0 // pred_region
    _
  $region37: #{tpu_custom_call.1} parent=0 // pred_fallthru
    _

</llo_original>
